<compile_context>
chip_gen: v7x
topology: tpu7x:2x2x1
jax: 0.10.0
libtpu: 0.0.40
codegen_flags: <defaults>
</compile_context>

<pallas_src>
import functools
import math

import jax
import jax.numpy as jnp
from jax import lax
from jax.experimental import pallas as pl
from jax.experimental.pallas import tpu as pltpu


# ---------------------------------------------------------------------------
# Fused per-batch kernel: (merged) conv/linear prologue + block-diagonal
# multi-head cross-attention + residual/LayerNorm + up_v + pooling + MoE gate.
# All tensors inside are channel-major (C, HW) / (C, Nl): HW is lane-dense.
# ---------------------------------------------------------------------------
def _fused_adapter_kernel(v_ref, l_ref, valid_ref,
                          cx_w, cx_b, c2w, c2b,
                          kvl_w, kv_b, q_pos, expand, bd_mask,
                          wo, bo, lng, lnb, upw, upb,
                          w1r, w1v, w1p, b1, w2, b2,
                          o_ref, *, nhead, hid, mxu_bf16):
    f32 = jnp.float32
    mxu = jnp.bfloat16 if mxu_bf16 else f32

    def dot(a, b):  # MXU matmul, f32 accumulation (bf16 operands optional)
        return jnp.dot(a.astype(mxu), b.astype(mxu), preferred_element_type=f32)

    x = v_ref[0]                                   # (Cv, HW)   raw visual (v_res)
    lt = l_ref[0]                                  # (Cl, Nl)   language tokens (ch-major)
    maskcol = (valid_ref[0] - 1.0) * 1e30          # (Nl, 1)    additive key-padding mask
    Nl = maskcol.shape[0]

    # ---- merged visual prologue: [conv1 ; linear_v ; wq@linear_v] @ x (one matmul)
    cx = dot(cx_w[...], x) + cx_b[...]             # (3*hid, HW)
    t = jnp.maximum(cx[:hid, :], 0.0)              # relu(conv1(x))
    tgt = cx[hid:2 * hid, :]                       # linear_v(x)
    q = cx[2 * hid:, :] + q_pos[...]               # wq(tgt + v_pos) + bq (pos precomputed)
    v_path = jnp.maximum(dot(c2w[...], t) + c2b[...], 0.0)        # (Cv, HW)

    # ---- merged language prologue: [wk@linear_l (scaled) ; wv@linear_l] @ lt
    #      (linear_l bias, k bias, l_pos and 1/sqrt(hd) folded into kv_b / kvl_w)
    kv = dot(kvl_w[...], lt) + kv_b[...]           # (2*hid, Nl): [k*scale ; v]

    # ---- block-diagonal multi-head attention: no per-head loop
    kvblk = dot(kv, expand[...]) * bd_mask[...]    # (2*hid, nhead*Nl) block-diag K/V
    s = lax.dot_general(kvblk[:hid, :].astype(mxu), q.astype(mxu),
                        (((0,), (0,)), ((), ())),
                        preferred_element_type=f32)               # (nhead*Nl, HW)
    HW = s.shape[1]
    # per-head softmax over keys: group Nl sublanes per head (tile-aligned reshape)
    s3 = s.reshape(nhead, Nl, HW) + maskcol[None]                 # key-padding mask
    s3 = s3 - jnp.max(s3, axis=1, keepdims=True)
    p3 = jnp.exp(s3)
    denom = jnp.sum(p3, axis=1, keepdims=True)
    p = (p3 * pl.reciprocal(denom, approx=True)).reshape(nhead * Nl, HW)
    head_out = dot(kvblk[hid:, :], p)                             # (hid, HW)
    attn = dot(wo[...], head_out) + bo[...]                       # out-projection

    # ---- residual + LayerNorm (eps=1e-5); dropout is identity at inference
    xres = tgt + attn
    mu = jnp.mean(xres, axis=0, keepdims=True)
    var = jnp.mean((xres - mu) ** 2, axis=0, keepdims=True)
    xn = (xres - mu) * lax.rsqrt(var + 1e-5) * lng[...] + lnb[...]

    # ---- up_v back to visual_dim
    vl = dot(upw[...], xn) + upb[...]                             # (Cv, HW)

    # ---- AdaptiveAvgPool2d(1) + MoE MLP + softmax gate (kept in f32, exact)
    m_res = jnp.mean(x, axis=1, keepdims=True)                    # (Cv, 1)
    m_vl = jnp.mean(vl, axis=1, keepdims=True)
    m_path = jnp.mean(v_path, axis=1, keepdims=True)
    hg = (jnp.dot(w1r[...], m_res, preferred_element_type=f32)
          + jnp.dot(w1v[...], m_vl, preferred_element_type=f32)
          + jnp.dot(w1p[...], m_path, preferred_element_type=f32) + b1[...])
    hg = jnp.maximum(hg, 0.0)
    g = jnp.dot(w2[...], hg, preferred_element_type=f32) + b2[...]   # (3, 1)
    g = g - jnp.max(g, axis=0, keepdims=True)
    e = jnp.exp(g)
    gate = e / jnp.sum(e, axis=0, keepdims=True)                     # (3, 1)

    out = gate[0:1, :] * x + gate[1:2, :] * vl + gate[2:3, :] * v_path
    o_ref[0] = out.astype(o_ref.dtype)


# ---------------------------------------------------------------------------
# Parameter-free positional encodings (plain JAX glue, channel-major output)
# ---------------------------------------------------------------------------
def position_embedding_sine_2d_cm(H, W, num_pos_feats, temperature=10000.0):
    # Standard DETR PositionEmbeddingSine (normalize=False), output (2*npf, H*W).
    y_embed = jnp.broadcast_to(jnp.arange(1, H + 1, dtype=jnp.float32)[:, None], (H, W))
    x_embed = jnp.broadcast_to(jnp.arange(1, W + 1, dtype=jnp.float32)[None, :], (H, W))
    dim_t = jnp.arange(num_pos_feats, dtype=jnp.float32)
    dim_t = temperature ** (2.0 * jnp.floor(dim_t / 2.0) / num_pos_feats)
    pos_x = x_embed[..., None] / dim_t
    pos_y = y_embed[..., None] / dim_t
    pos_x = jnp.stack([jnp.sin(pos_x[..., 0::2]), jnp.cos(pos_x[..., 1::2])],
                      axis=3).reshape(H, W, num_pos_feats)
    pos_y = jnp.stack([jnp.sin(pos_y[..., 0::2]), jnp.cos(pos_y[..., 1::2])],
                      axis=3).reshape(H, W, num_pos_feats)
    pos = jnp.concatenate([pos_y, pos_x], axis=2)                 # (H, W, 2*npf)
    return jnp.transpose(pos, (2, 0, 1)).reshape(2 * num_pos_feats, H * W)


def position_embedding_sine_text_cm(N, num_pos_feats, temperature=10000.0):
    # TODO(synk): PositionEmbeddingSineText source not provided; standard 1D sine PE.
    x_embed = jnp.arange(1, N + 1, dtype=jnp.float32)
    dim_t = jnp.arange(num_pos_feats, dtype=jnp.float32)
    dim_t = temperature ** (2.0 * jnp.floor(dim_t / 2.0) / num_pos_feats)
    pos = x_embed[:, None] / dim_t
    pos = jnp.stack([jnp.sin(pos[:, 0::2]), jnp.cos(pos[:, 1::2])],
                    axis=2).reshape(N, num_pos_feats)
    return jnp.transpose(pos)                                     # (npf, N)


# ---------------------------------------------------------------------------
# Parameters (deterministic synthetic init), PyTorch (out, in) orientation.
# 1x1 conv weights are squeezed; biases are (out, 1) columns so they broadcast
# along the lane (HW) axis inside the kernel.
# ---------------------------------------------------------------------------
def init_params(Cv, Cl, hid, key):
    ks = jax.random.split(key, 11)

    def xavier(k, shape):
        bound = math.sqrt(6.0 / (shape[0] + shape[1]))
        return jax.random.uniform(k, shape, jnp.float32, -bound, bound)

    zc = lambda n: jnp.zeros((n, 1), jnp.float32)
    return {
        "conv1_w": xavier(ks[0], (hid, Cv)), "conv1_b": zc(hid),
        "conv2_w": xavier(ks[1], (Cv, hid)), "conv2_b": zc(Cv),
        "linear_v_w": xavier(ks[2], (hid, Cv)), "linear_v_b": zc(hid),
        "linear_l_w": xavier(ks[3], (hid, Cl)), "linear_l_b": zc(hid),
        "wq": xavier(ks[4], (hid, hid)), "bq": zc(hid),
        "wk": xavier(ks[5], (hid, hid)), "bk": zc(hid),
        "wv": xavier(ks[6], (hid, hid)), "bv": zc(hid),
        "wo": xavier(ks[7], (hid, hid)), "bo": zc(hid),
        "ln_g": jnp.ones((hid, 1), jnp.float32), "ln_b": zc(hid),
        "up_v_w": xavier(ks[8], (Cv, hid)), "up_v_b": zc(Cv),
        "moe_w1": xavier(ks[9], (hid, 3 * Cv)), "moe_b1": zc(hid),
        "moe_w2": xavier(ks[10], (3, hid)), "moe_b2": zc(3),
    }


# ---------------------------------------------------------------------------
# Forward pass (matches ClipStageAdapterV1.forward, eval mode)
# ---------------------------------------------------------------------------
def clip_stage_adapter_forward(params, v, s, l, l_mask, *, nhead=8, mxu_bf16=False):
    del s  # unused by the reference forward (kept for signature parity)
    B, Cv, H, W = v.shape
    HW = H * W
    hid = params["wq"].shape[0]
    Nl, Cl = l.shape[1], l.shape[2]
    hd = hid // nhead
    scale = 1.0 / math.sqrt(hd)

    # Channel-major, lane-dense data layouts (no transpose of the big tensor).
    v_flat = v.reshape(B, Cv, HW)                            # (B, Cv, HW)
    l_t = jnp.transpose(l, (0, 2, 1))                        # (B, Cl, Nl)
    valid = l_mask.astype(jnp.float32)[:, :, None]           # (B, Nl, 1)  1 = real token

    # Batch-invariant sine PEs, folded into precomputed biases below.
    v_pos = position_embedding_sine_2d_cm(H, W, hid // 2)    # (hid, HW)
    l_pos = position_embedding_sine_text_cm(Nl, hid)         # (hid, Nl)

    wq, bq = params["wq"], params["bq"]
    wk, bk = params["wk"], params["bk"]
    wv, bv = params["wv"], params["bv"]
    lvw, lvb = params["linear_v_w"], params["linear_v_b"]
    llw, llb = params["linear_l_w"], params["linear_l_b"]

    # --- merged visual prologue: [conv1 ; linear_v ; wq@linear_v] applied to x once
    cx_w = jnp.concatenate([params["conv1_w"], lvw, wq @ lvw], axis=0)        # (3h, Cv)
    cx_b = jnp.concatenate([params["conv1_b"], lvb, wq @ lvb + bq], axis=0)   # (3h, 1)
    q_pos = wq @ v_pos                                                        # (h, HW)

    # --- merged language prologue: [wk@linear_l (pre-scaled) ; wv@linear_l]
    kvl_w = jnp.concatenate([scale * (wk @ llw), wv @ llw], axis=0)           # (2h, Cl)
    k_bias = scale * (wk @ llb + bk + wk @ l_pos)                             # (h, Nl)
    v_bias = jnp.broadcast_to(wv @ llb + bv, (hid, Nl))                       # (h, Nl)
    kv_b = jnp.concatenate([k_bias, v_bias], axis=0)                          # (2h, Nl)

    # --- batch-invariant block-diagonal head-expansion constants
    row_head = (jnp.arange(2 * hid) % hid) // hd
    col_head = jnp.arange(nhead * Nl) // Nl
    bd_mask = (row_head[:, None] == col_head[None, :]).astype(jnp.float32)    # (2h, nhead*Nl)
    expand = (jnp.arange(Nl)[:, None]
              == (jnp.arange(nhead * Nl) % Nl)[None, :]).astype(jnp.float32)  # (Nl, nhead*Nl)

    w1 = params["moe_w1"]
    weights = [
        cx_w, cx_b, params["conv2_w"], params["conv2_b"],
        kvl_w, kv_b, q_pos, expand, bd_mask,
        params["wo"], params["bo"], params["ln_g"], params["ln_b"],
        params["up_v_w"], params["up_v_b"],
        w1[:, :Cv], w1[:, Cv:2 * Cv], w1[:, 2 * Cv:], params["moe_b1"],
        params["moe_w2"], params["moe_b2"],
    ]

    data_specs = [
        pl.BlockSpec((1, Cv, HW), lambda b: (b, 0, 0)),      # v (per batch)
        pl.BlockSpec((1, Cl, Nl), lambda b: (b, 0, 0)),      # l (per batch)
        pl.BlockSpec((1, Nl, 1), lambda b: (b, 0, 0)),       # valid mask (per batch)
    ]
    # TODO(synk): at production `hid`, pass pipeline_mode=pl.Buffered(1) on these
    #             constant-index weight specs to drop the unused second DMA buffer.
    weight_specs = [pl.BlockSpec(w.shape, lambda b: (0, 0)) for w in weights]

    out_flat = pl.pallas_call(
        functools.partial(_fused_adapter_kernel, nhead=nhead, hid=hid,
                          mxu_bf16=mxu_bf16),
        out_shape=jax.ShapeDtypeStruct((B, Cv, HW), v.dtype),
        grid=(B,),
        in_specs=data_specs + weight_specs,
        out_specs=pl.BlockSpec((1, Cv, HW), lambda b: (b, 0, 0)),
        compiler_params=pltpu.CompilerParams(
            dimension_semantics=("parallel",)),   # >=2 steps -> both v7x TCs busy
    )(v_flat, l_t, valid, *weights)

    return out_flat.reshape(B, Cv, H, W)


# ---------------------------------------------------------------------------
if __name__ == "__main__":
    B, Cv, H, W = 2, 8, 16, 16          # visual_dim = 8
    Cl, Nl, hid = 16, 8, 32             # language_dim = 16, hidden_dim = 32 (nhead=8)

    key = jax.random.PRNGKey(0)
    k_v, k_s, k_l, k_p = jax.random.split(key, 4)
    v = jax.random.normal(k_v, (B, Cv, H, W), jnp.float32)
    s = jax.random.normal(k_s, (B, 1, Cl), jnp.float32)     # unused by forward
    l = jax.random.normal(k_l, (B, Nl, Cl), jnp.float32)
    l_mask = jnp.array([[1, 1, 1, 1, 1, 0, 0, 0],
                        [1, 1, 1, 1, 1, 1, 1, 0]], dtype=jnp.bool_)

    params = init_params(Cv, Cl, hid, k_p)

    # mxu_bf16=True is the production setting for v6e/v7x; f32 keeps the toy
    # config numerically closest to the PyTorch reference.
    fwd = jax.jit(clip_stage_adapter_forward)
    out = jax.block_until_ready(fwd(params, v, s, l, l_mask))

    assert out.shape == (B, Cv, H, W), out.shape
    assert bool(jnp.all(jnp.isfinite(out)))
    print("KERNEL_OK")
</pallas_src>

<mosaic_0001>
module attributes {stable_mosaic.version = 11 : i64} {
  func.func @_fused_adapter_kernel(%arg0: i32, %arg1: memref<1x8x256xf32, #tpu.memory_space<vmem>>, %arg2: memref<1x16x8xf32, #tpu.memory_space<vmem>>, %arg3: memref<1x8x1xf32, #tpu.memory_space<vmem>>, %arg4: memref<96x8xf32, #tpu.memory_space<vmem>>, %arg5: memref<96x1xf32, #tpu.memory_space<vmem>>, %arg6: memref<8x32xf32, #tpu.memory_space<vmem>>, %arg7: memref<8x1xf32, #tpu.memory_space<vmem>>, %arg8: memref<64x16xf32, #tpu.memory_space<vmem>>, %arg9: memref<64x8xf32, #tpu.memory_space<vmem>>, %arg10: memref<32x256xf32, #tpu.memory_space<vmem>>, %arg11: memref<8x64xf32, #tpu.memory_space<vmem>>, %arg12: memref<64x64xf32, #tpu.memory_space<vmem>>, %arg13: memref<32x32xf32, #tpu.memory_space<vmem>>, %arg14: memref<32x1xf32, #tpu.memory_space<vmem>>, %arg15: memref<32x1xf32, #tpu.memory_space<vmem>>, %arg16: memref<32x1xf32, #tpu.memory_space<vmem>>, %arg17: memref<8x32xf32, #tpu.memory_space<vmem>>, %arg18: memref<8x1xf32, #tpu.memory_space<vmem>>, %arg19: memref<32x8xf32, #tpu.memory_space<vmem>>, %arg20: memref<32x8xf32, #tpu.memory_space<vmem>>, %arg21: memref<32x8xf32, #tpu.memory_space<vmem>>, %arg22: memref<32x1xf32, #tpu.memory_space<vmem>>, %arg23: memref<3x32xf32, #tpu.memory_space<vmem>>, %arg24: memref<3x1xf32, #tpu.memory_space<vmem>>, %arg25: memref<1x8x256xf32, #tpu.memory_space<vmem>>) attributes {dimension_semantics = [#tpu.dimension_semantics<parallel>], iteration_bounds = array<i64: 2>, scalar_prefetch = 0 : i64, scratch_operands = 0 : i64, tpu.core_type = #tpu.core_type<tc>, window_params = [{transform_indices = @transform_0, window_bounds = array<i64: 1, 8, 256>}, {transform_indices = @transform_1, window_bounds = array<i64: 1, 16, 8>}, {transform_indices = @transform_2, window_bounds = array<i64: 1, 8, 1>}, {pipeline_mode = #tpu.pipeline_mode<synchronous>, transform_indices = @transform_3, window_bounds = array<i64: 96, 8>}, {pipeline_mode = #tpu.pipeline_mode<synchronous>, transform_indices = @transform_4, window_bounds = array<i64: 96, 1>}, {pipeline_mode = #tpu.pipeline_mode<synchronous>, transform_indices = @transform_5, window_bounds = array<i64: 8, 32>}, {pipeline_mode = #tpu.pipeline_mode<synchronous>, transform_indices = @transform_6, window_bounds = array<i64: 8, 1>}, {pipeline_mode = #tpu.pipeline_mode<synchronous>, transform_indices = @transform_7, window_bounds = array<i64: 64, 16>}, {pipeline_mode = #tpu.pipeline_mode<synchronous>, transform_indices = @transform_8, window_bounds = array<i64: 64, 8>}, {pipeline_mode = #tpu.pipeline_mode<synchronous>, transform_indices = @transform_9, window_bounds = array<i64: 32, 256>}, {pipeline_mode = #tpu.pipeline_mode<synchronous>, transform_indices = @transform_10, window_bounds = array<i64: 8, 64>}, {pipeline_mode = #tpu.pipeline_mode<synchronous>, transform_indices = @transform_11, window_bounds = array<i64: 64, 64>}, {pipeline_mode = #tpu.pipeline_mode<synchronous>, transform_indices = @transform_12, window_bounds = array<i64: 32, 32>}, {pipeline_mode = #tpu.pipeline_mode<synchronous>, transform_indices = @transform_13, window_bounds = array<i64: 32, 1>}, {pipeline_mode = #tpu.pipeline_mode<synchronous>, transform_indices = @transform_14, window_bounds = array<i64: 32, 1>}, {pipeline_mode = #tpu.pipeline_mode<synchronous>, transform_indices = @transform_15, window_bounds = array<i64: 32, 1>}, {pipeline_mode = #tpu.pipeline_mode<synchronous>, transform_indices = @transform_16, window_bounds = array<i64: 8, 32>}, {pipeline_mode = #tpu.pipeline_mode<synchronous>, transform_indices = @transform_17, window_bounds = array<i64: 8, 1>}, {pipeline_mode = #tpu.pipeline_mode<synchronous>, transform_indices = @transform_18, window_bounds = array<i64: 32, 8>}, {pipeline_mode = #tpu.pipeline_mode<synchronous>, transform_indices = @transform_19, window_bounds = array<i64: 32, 8>}, {pipeline_mode = #tpu.pipeline_mode<synchronous>, transform_indices = @transform_20, window_bounds = array<i64: 32, 8>}, {pipeline_mode = #tpu.pipeline_mode<synchronous>, transform_indices = @transform_21, window_bounds = array<i64: 32, 1>}, {pipeline_mode = #tpu.pipeline_mode<synchronous>, transform_indices = @transform_22, window_bounds = array<i64: 3, 32>}, {pipeline_mode = #tpu.pipeline_mode<synchronous>, transform_indices = @transform_23, window_bounds = array<i64: 3, 1>}, {transform_indices = @transform_24, window_bounds = array<i64: 1, 8, 256>}]} {
    %c0 = arith.constant 0 : index
    %c0_0 = arith.constant 0 : index
    %c0_1 = arith.constant 0 : index
    %0 = vector.load %arg1[%c0, %c0_0, %c0_1] : memref<1x8x256xf32, #tpu.memory_space<vmem>>, vector<1x8x256xf32>
    %1 = vector.shape_cast %0 : vector<1x8x256xf32> to vector<8x256xf32>
    %c0_2 = arith.constant 0 : index
    %c0_3 = arith.constant 0 : index
    %c0_4 = arith.constant 0 : index
    %2 = vector.load %arg2[%c0_2, %c0_3, %c0_4] : memref<1x16x8xf32, #tpu.memory_space<vmem>>, vector<1x16x8xf32>
    %3 = vector.shape_cast %2 : vector<1x16x8xf32> to vector<16x8xf32>
    %c0_5 = arith.constant 0 : index
    %c0_6 = arith.constant 0 : index
    %c0_7 = arith.constant 0 : index
    %4 = vector.load %arg3[%c0_5, %c0_6, %c0_7] : memref<1x8x1xf32, #tpu.memory_space<vmem>>, vector<1x8x1xf32>
    %5 = vector.shape_cast %4 : vector<1x8x1xf32> to vector<8x1xf32>
    %cst = arith.constant 1.000000e+00 : f32
    %6 = vector.broadcast %cst : f32 to vector<8x1xf32>
    %7 = arith.subf %5, %6 : vector<8x1xf32>
    %cst_8 = arith.constant 1.000000e+30 : f32
    %8 = vector.broadcast %cst_8 : f32 to vector<8x1xf32>
    %9 = arith.mulf %7, %8 : vector<8x1xf32>
    %c0_9 = arith.constant 0 : index
    %c0_10 = arith.constant 0 : index
    %10 = vector.load %arg4[%c0_9, %c0_10] : memref<96x8xf32, #tpu.memory_space<vmem>>, vector<96x8xf32>
    %cst_11 = arith.constant dense<0.000000e+00> : vector<96x256xf32>
    %11 = tpu.matmul %10, %1, %cst_11 {dimension_numbers = #tpu.dot_dimension_numbers<[1], [0], [0], [1], [0, 0, 1, 1], [], []>} : vector<96x8xf32>, vector<8x256xf32>, vector<96x256xf32> -> vector<96x256xf32>
    %c0_12 = arith.constant 0 : index
    %c0_13 = arith.constant 0 : index
    %12 = vector.load %arg5[%c0_12, %c0_13] : memref<96x1xf32, #tpu.memory_space<vmem>>, vector<96x1xf32>
    %13 = vector.broadcast %12 : vector<96x1xf32> to vector<96x256xf32>
    %14 = arith.addf %11, %13 : vector<96x256xf32>
    %15 = vector.extract_strided_slice %14 {offsets = [0, 0], sizes = [32, 256], strides = [1, 1]} : vector<96x256xf32> to vector<32x256xf32>
    %cst_14 = arith.constant 0.000000e+00 : f32
    %16 = vector.broadcast %cst_14 : f32 to vector<32x256xf32>
    %17 = arith.maximumf %15, %16 : vector<32x256xf32>
    %18 = vector.extract_strided_slice %14 {offsets = [32, 0], sizes = [32, 256], strides = [1, 1]} : vector<96x256xf32> to vector<32x256xf32>
    %19 = vector.extract_strided_slice %14 {offsets = [64, 0], sizes = [32, 256], strides = [1, 1]} : vector<96x256xf32> to vector<32x256xf32>
    %c0_15 = arith.constant 0 : index
    %c0_16 = arith.constant 0 : index
    %20 = vector.load %arg10[%c0_15, %c0_16] : memref<32x256xf32, #tpu.memory_space<vmem>>, vector<32x256xf32>
    %21 = arith.addf %19, %20 : vector<32x256xf32>
    %c0_17 = arith.constant 0 : index
    %c0_18 = arith.constant 0 : index
    %22 = vector.load %arg6[%c0_17, %c0_18] : memref<8x32xf32, #tpu.memory_space<vmem>>, vector<8x32xf32>
    %cst_19 = arith.constant dense<0.000000e+00> : vector<8x256xf32>
    %23 = tpu.matmul %22, %17, %cst_19 {dimension_numbers = #tpu.dot_dimension_numbers<[1], [0], [0], [1], [0, 0, 1, 1], [], []>} : vector<8x32xf32>, vector<32x256xf32>, vector<8x256xf32> -> vector<8x256xf32>
    %c0_20 = arith.constant 0 : index
    %c0_21 = arith.constant 0 : index
    %24 = vector.load %arg7[%c0_20, %c0_21] : memref<8x1xf32, #tpu.memory_space<vmem>>, vector<8x1xf32>
    %25 = vector.broadcast %24 : vector<8x1xf32> to vector<8x256xf32>
    %26 = arith.addf %23, %25 : vector<8x256xf32>
    %cst_22 = arith.constant 0.000000e+00 : f32
    %27 = vector.broadcast %cst_22 : f32 to vector<8x256xf32>
    %28 = arith.maximumf %26, %27 : vector<8x256xf32>
    %c0_23 = arith.constant 0 : index
    %c0_24 = arith.constant 0 : index
    %29 = vector.load %arg8[%c0_23, %c0_24] : memref<64x16xf32, #tpu.memory_space<vmem>>, vector<64x16xf32>
    %cst_25 = arith.constant dense<0.000000e+00> : vector<64x8xf32>
    %30 = tpu.matmul %29, %3, %cst_25 {dimension_numbers = #tpu.dot_dimension_numbers<[1], [0], [0], [1], [0, 0, 1, 1], [], []>} : vector<64x16xf32>, vector<16x8xf32>, vector<64x8xf32> -> vector<64x8xf32>
    %c0_26 = arith.constant 0 : index
    %c0_27 = arith.constant 0 : index
    %31 = vector.load %arg9[%c0_26, %c0_27] : memref<64x8xf32, #tpu.memory_space<vmem>>, vector<64x8xf32>
    %32 = arith.addf %30, %31 : vector<64x8xf32>
    %c0_28 = arith.constant 0 : index
    %c0_29 = arith.constant 0 : index
    %33 = vector.load %arg11[%c0_28, %c0_29] : memref<8x64xf32, #tpu.memory_space<vmem>>, vector<8x64xf32>
    %cst_30 = arith.constant dense<0.000000e+00> : vector<64x64xf32>
    %34 = tpu.matmul %32, %33, %cst_30 {dimension_numbers = #tpu.dot_dimension_numbers<[1], [0], [0], [1], [0, 0, 1, 1], [], []>} : vector<64x8xf32>, vector<8x64xf32>, vector<64x64xf32> -> vector<64x64xf32>
    %c0_31 = arith.constant 0 : index
    %c0_32 = arith.constant 0 : index
    %35 = vector.load %arg12[%c0_31, %c0_32] : memref<64x64xf32, #tpu.memory_space<vmem>>, vector<64x64xf32>
    %36 = arith.mulf %34, %35 : vector<64x64xf32>
    %37 = vector.extract_strided_slice %36 {offsets = [0, 0], sizes = [32, 64], strides = [1, 1]} : vector<64x64xf32> to vector<32x64xf32>
    %cst_33 = arith.constant dense<0.000000e+00> : vector<64x256xf32>
    %38 = tpu.matmul %37, %21, %cst_33 {dimension_numbers = #tpu.dot_dimension_numbers<[0], [0], [1], [1], [0, 1, 1, 1], [], []>} : vector<32x64xf32>, vector<32x256xf32>, vector<64x256xf32> -> vector<64x256xf32>
    %39 = vector.shape_cast %38 : vector<64x256xf32> to vector<8x8x256xf32>
    %40 = vector.shape_cast %9 : vector<8x1xf32> to vector<1x8x1xf32>
    %41 = vector.broadcast %40 : vector<1x8x1xf32> to vector<8x8x256xf32>
    %42 = arith.addf %39, %41 : vector<8x8x256xf32>
    %cst_34 = arith.constant dense<0xFF800000> : vector<8x256xf32>
    %43 = vector.multi_reduction <maximumf>, %42, %cst_34 [1] : vector<8x8x256xf32> to vector<8x256xf32>
    %44 = vector.shape_cast %43 : vector<8x256xf32> to vector<8x1x256xf32>
    %45 = vector.broadcast %44 : vector<8x1x256xf32> to vector<8x8x256xf32>
    %46 = arith.subf %42, %45 : vector<8x8x256xf32>
    %47 = math.exp %46 : vector<8x8x256xf32>
    %cst_35 = arith.constant dense<0.000000e+00> : vector<8x256xf32>
    %48 = vector.multi_reduction <add>, %47, %cst_35 [1] : vector<8x8x256xf32> to vector<8x256xf32>
    %49 = vector.shape_cast %48 : vector<8x256xf32> to vector<8x1x256xf32>
    %50 = tpu.reciprocal %49 {approx = true} : vector<8x1x256xf32> -> vector<8x1x256xf32>
    %51 = vector.broadcast %50 : vector<8x1x256xf32> to vector<8x8x256xf32>
    %52 = arith.mulf %47, %51 : vector<8x8x256xf32>
    %53 = vector.shape_cast %52 : vector<8x8x256xf32> to vector<64x256xf32>
    %54 = vector.extract_strided_slice %36 {offsets = [32, 0], sizes = [32, 64], strides = [1, 1]} : vector<64x64xf32> to vector<32x64xf32>
    %cst_36 = arith.constant dense<0.000000e+00> : vector<32x256xf32>
    %55 = tpu.matmul %54, %53, %cst_36 {dimension_numbers = #tpu.dot_dimension_numbers<[1], [0], [0], [1], [0, 0, 1, 1], [], []>} : vector<32x64xf32>, vector<64x256xf32>, vector<32x256xf32> -> vector<32x256xf32>
    %c0_37 = arith.constant 0 : index
    %c0_38 = arith.constant 0 : index
    %56 = vector.load %arg13[%c0_37, %c0_38] : memref<32x32xf32, #tpu.memory_space<vmem>>, vector<32x32xf32>
    %cst_39 = arith.constant dense<0.000000e+00> : vector<32x256xf32>
    %57 = tpu.matmul %56, %55, %cst_39 {dimension_numbers = #tpu.dot_dimension_numbers<[1], [0], [0], [1], [0, 0, 1, 1], [], []>} : vector<32x32xf32>, vector<32x256xf32>, vector<32x256xf32> -> vector<32x256xf32>
    %c0_40 = arith.constant 0 : index
    %c0_41 = arith.constant 0 : index
    %58 = vector.load %arg14[%c0_40, %c0_41] : memref<32x1xf32, #tpu.memory_space<vmem>>, vector<32x1xf32>
    %59 = vector.broadcast %58 : vector<32x1xf32> to vector<32x256xf32>
    %60 = arith.addf %57, %59 : vector<32x256xf32>
    %61 = arith.addf %18, %60 : vector<32x256xf32>
    %cst_42 = arith.constant dense<0.000000e+00> : vector<256xf32>
    %62 = vector.multi_reduction <add>, %61, %cst_42 [0] : vector<32x256xf32> to vector<256xf32>
    %63 = vector.shape_cast %62 : vector<256xf32> to vector<1x256xf32>
    %cst_43 = arith.constant 3.200000e+01 : f32
    %64 = vector.broadcast %cst_43 : f32 to vector<1x256xf32>
    %65 = arith.divf %63, %64 : vector<1x256xf32>
    %66 = vector.broadcast %65 : vector<1x256xf32> to vector<32x256xf32>
    %67 = arith.subf %61, %66 : vector<32x256xf32>
    %68 = arith.mulf %67, %67 : vector<32x256xf32>
    %cst_44 = arith.constant dense<0.000000e+00> : vector<256xf32>
    %69 = vector.multi_reduction <add>, %68, %cst_44 [0] : vector<32x256xf32> to vector<256xf32>
    %70 = vector.shape_cast %69 : vector<256xf32> to vector<1x256xf32>
    %cst_45 = arith.constant 3.200000e+01 : f32
    %71 = vector.broadcast %cst_45 : f32 to vector<1x256xf32>
    %72 = arith.divf %70, %71 : vector<1x256xf32>
    %73 = vector.broadcast %65 : vector<1x256xf32> to vector<32x256xf32>
    %74 = arith.subf %61, %73 : vector<32x256xf32>
    %cst_46 = arith.constant 9.99999974E-6 : f32
    %75 = vector.broadcast %cst_46 : f32 to vector<1x256xf32>
    %76 = arith.addf %72, %75 : vector<1x256xf32>
    %77 = math.rsqrt %76 : vector<1x256xf32>
    %78 = vector.broadcast %77 : vector<1x256xf32> to vector<32x256xf32>
    %79 = arith.mulf %74, %78 : vector<32x256xf32>
    %c0_47 = arith.constant 0 : index
    %c0_48 = arith.constant 0 : index
    %80 = vector.load %arg15[%c0_47, %c0_48] : memref<32x1xf32, #tpu.memory_space<vmem>>, vector<32x1xf32>
    %81 = vector.broadcast %80 : vector<32x1xf32> to vector<32x256xf32>
    %82 = arith.mulf %79, %81 : vector<32x256xf32>
    %c0_49 = arith.constant 0 : index
    %c0_50 = arith.constant 0 : index
    %83 = vector.load %arg16[%c0_49, %c0_50] : memref<32x1xf32, #tpu.memory_space<vmem>>, vector<32x1xf32>
    %84 = vector.broadcast %83 : vector<32x1xf32> to vector<32x256xf32>
    %85 = arith.addf %82, %84 : vector<32x256xf32>
    %c0_51 = arith.constant 0 : index
    %c0_52 = arith.constant 0 : index
    %86 = vector.load %arg17[%c0_51, %c0_52] : memref<8x32xf32, #tpu.memory_space<vmem>>, vector<8x32xf32>
    %cst_53 = arith.constant dense<0.000000e+00> : vector<8x256xf32>
    %87 = tpu.matmul %86, %85, %cst_53 {dimension_numbers = #tpu.dot_dimension_numbers<[1], [0], [0], [1], [0, 0, 1, 1], [], []>} : vector<8x32xf32>, vector<32x256xf32>, vector<8x256xf32> -> vector<8x256xf32>
    %c0_54 = arith.constant 0 : index
    %c0_55 = arith.constant 0 : index
    %88 = vector.load %arg18[%c0_54, %c0_55] : memref<8x1xf32, #tpu.memory_space<vmem>>, vector<8x1xf32>
    %89 = vector.broadcast %88 : vector<8x1xf32> to vector<8x256xf32>
    %90 = arith.addf %87, %89 : vector<8x256xf32>
    %cst_56 = arith.constant dense<0.000000e+00> : vector<8xf32>
    %91 = vector.multi_reduction <add>, %1, %cst_56 [1] : vector<8x256xf32> to vector<8xf32>
    %92 = vector.shape_cast %91 : vector<8xf32> to vector<8x1xf32>
    %cst_57 = arith.constant 2.560000e+02 : f32
    %93 = vector.broadcast %cst_57 : f32 to vector<8x1xf32>
    %94 = arith.divf %92, %93 : vector<8x1xf32>
    %cst_58 = arith.constant dense<0.000000e+00> : vector<8xf32>
    %95 = vector.multi_reduction <add>, %90, %cst_58 [1] : vector<8x256xf32> to vector<8xf32>
    %96 = vector.shape_cast %95 : vector<8xf32> to vector<8x1xf32>
    %cst_59 = arith.constant 2.560000e+02 : f32
    %97 = vector.broadcast %cst_59 : f32 to vector<8x1xf32>
    %98 = arith.divf %96, %97 : vector<8x1xf32>
    %cst_60 = arith.constant dense<0.000000e+00> : vector<8xf32>
    %99 = vector.multi_reduction <add>, %28, %cst_60 [1] : vector<8x256xf32> to vector<8xf32>
    %100 = vector.shape_cast %99 : vector<8xf32> to vector<8x1xf32>
    %cst_61 = arith.constant 2.560000e+02 : f32
    %101 = vector.broadcast %cst_61 : f32 to vector<8x1xf32>
    %102 = arith.divf %100, %101 : vector<8x1xf32>
    %c0_62 = arith.constant 0 : index
    %c0_63 = arith.constant 0 : index
    %103 = vector.load %arg19[%c0_62, %c0_63] : memref<32x8xf32, #tpu.memory_space<vmem>>, vector<32x8xf32>
    %cst_64 = arith.constant dense<0.000000e+00> : vector<32x1xf32>
    %104 = tpu.matmul %103, %94, %cst_64 {dimension_numbers = #tpu.dot_dimension_numbers<[1], [0], [0], [1], [0, 0, 1, 1], [], []>} : vector<32x8xf32>, vector<8x1xf32>, vector<32x1xf32> -> vector<32x1xf32>
    %c0_65 = arith.constant 0 : index
    %c0_66 = arith.constant 0 : index
    %105 = vector.load %arg20[%c0_65, %c0_66] : memref<32x8xf32, #tpu.memory_space<vmem>>, vector<32x8xf32>
    %cst_67 = arith.constant dense<0.000000e+00> : vector<32x1xf32>
    %106 = tpu.matmul %105, %98, %cst_67 {dimension_numbers = #tpu.dot_dimension_numbers<[1], [0], [0], [1], [0, 0, 1, 1], [], []>} : vector<32x8xf32>, vector<8x1xf32>, vector<32x1xf32> -> vector<32x1xf32>
    %107 = arith.addf %104, %106 : vector<32x1xf32>
    %c0_68 = arith.constant 0 : index
    %c0_69 = arith.constant 0 : index
    %108 = vector.load %arg21[%c0_68, %c0_69] : memref<32x8xf32, #tpu.memory_space<vmem>>, vector<32x8xf32>
    %cst_70 = arith.constant dense<0.000000e+00> : vector<32x1xf32>
    %109 = tpu.matmul %108, %102, %cst_70 {dimension_numbers = #tpu.dot_dimension_numbers<[1], [0], [0], [1], [0, 0, 1, 1], [], []>} : vector<32x8xf32>, vector<8x1xf32>, vector<32x1xf32> -> vector<32x1xf32>
    %110 = arith.addf %107, %109 : vector<32x1xf32>
    %c0_71 = arith.constant 0 : index
    %c0_72 = arith.constant 0 : index
    %111 = vector.load %arg22[%c0_71, %c0_72] : memref<32x1xf32, #tpu.memory_space<vmem>>, vector<32x1xf32>
    %112 = arith.addf %110, %111 : vector<32x1xf32>
    %cst_73 = arith.constant 0.000000e+00 : f32
    %113 = vector.broadcast %cst_73 : f32 to vector<32x1xf32>
    %114 = arith.maximumf %112, %113 : vector<32x1xf32>
    %c0_74 = arith.constant 0 : index
    %c0_75 = arith.constant 0 : index
    %115 = vector.load %arg23[%c0_74, %c0_75] : memref<3x32xf32, #tpu.memory_space<vmem>>, vector<3x32xf32>
    %cst_76 = arith.constant dense<0.000000e+00> : vector<3x1xf32>
    %116 = tpu.matmul %115, %114, %cst_76 {dimension_numbers = #tpu.dot_dimension_numbers<[1], [0], [0], [1], [0, 0, 1, 1], [], []>} : vector<3x32xf32>, vector<32x1xf32>, vector<3x1xf32> -> vector<3x1xf32>
    %c0_77 = arith.constant 0 : index
    %c0_78 = arith.constant 0 : index
    %117 = vector.load %arg24[%c0_77, %c0_78] : memref<3x1xf32, #tpu.memory_space<vmem>>, vector<3x1xf32>
    %118 = arith.addf %116, %117 : vector<3x1xf32>
    %cst_79 = arith.constant dense<0xFF800000> : vector<1xf32>
    %119 = vector.multi_reduction <maximumf>, %118, %cst_79 [0] : vector<3x1xf32> to vector<1xf32>
    %120 = vector.shape_cast %119 : vector<1xf32> to vector<1x1xf32>
    %121 = vector.broadcast %120 : vector<1x1xf32> to vector<3x1xf32>
    %122 = arith.subf %118, %121 : vector<3x1xf32>
    %123 = math.exp %122 : vector<3x1xf32>
    %cst_80 = arith.constant dense<0.000000e+00> : vector<1xf32>
    %124 = vector.multi_reduction <add>, %123, %cst_80 [0] : vector<3x1xf32> to vector<1xf32>
    %125 = vector.shape_cast %124 : vector<1xf32> to vector<1x1xf32>
    %126 = vector.broadcast %125 : vector<1x1xf32> to vector<3x1xf32>
    %127 = arith.divf %123, %126 : vector<3x1xf32>
    %128 = vector.extract_strided_slice %127 {offsets = [0, 0], sizes = [1, 1], strides = [1, 1]} : vector<3x1xf32> to vector<1x1xf32>
    %129 = vector.broadcast %128 : vector<1x1xf32> to vector<8x256xf32>
    %130 = arith.mulf %129, %1 : vector<8x256xf32>
    %131 = vector.extract_strided_slice %127 {offsets = [1, 0], sizes = [1, 1], strides = [1, 1]} : vector<3x1xf32> to vector<1x1xf32>
    %132 = vector.broadcast %131 : vector<1x1xf32> to vector<8x256xf32>
    %133 = arith.mulf %132, %90 : vector<8x256xf32>
    %134 = arith.addf %130, %133 : vector<8x256xf32>
    %135 = vector.extract_strided_slice %127 {offsets = [2, 0], sizes = [1, 1], strides = [1, 1]} : vector<3x1xf32> to vector<1x1xf32>
    %136 = vector.broadcast %135 : vector<1x1xf32> to vector<8x256xf32>
    %137 = arith.mulf %136, %28 : vector<8x256xf32>
    %138 = arith.addf %134, %137 : vector<8x256xf32>
    %c0_81 = arith.constant 0 : index
    %c0_82 = arith.constant 0 : index
    %c0_83 = arith.constant 0 : index
    %139 = vector.load %arg25[%c0_81, %c0_82, %c0_83] : memref<1x8x256xf32, #tpu.memory_space<vmem>>, vector<1x8x256xf32>
    %140 = vector.shape_cast %139 : vector<1x8x256xf32> to vector<8x256xf32>
    %141 = vector.shape_cast %138 : vector<8x256xf32> to vector<1x8x256xf32>
    tpu.vector_store %arg25[%c0_81, %c0_82, %c0_83], %141 {strides = array<i32>} : memref<1x8x256xf32, #tpu.memory_space<vmem>>, vector<1x8x256xf32>,
    return
  }
  func.func @transform_0(%arg0: i32) -> (i32, i32, i32) {
    %c0_i32 = arith.constant 0 : i32
    %c0_i32_0 = arith.constant 0 : i32
    %c0_i32_1 = arith.constant 0 : i32
    return %arg0, %c0_i32, %c0_i32_0 : i32, i32, i32
  }
  func.func @transform_1(%arg0: i32) -> (i32, i32, i32) {
    %c0_i32 = arith.constant 0 : i32
    %c0_i32_0 = arith.constant 0 : i32
    %c0_i32_1 = arith.constant 0 : i32
    return %arg0, %c0_i32, %c0_i32_0 : i32, i32, i32
  }
  func.func @transform_2(%arg0: i32) -> (i32, i32, i32) {
    %c0_i32 = arith.constant 0 : i32
    %c0_i32_0 = arith.constant 0 : i32
    %c0_i32_1 = arith.constant 0 : i32
    return %arg0, %c0_i32, %c0_i32_0 : i32, i32, i32
  }
  func.func @transform_3(%arg0: i32) -> (i32, i32) {
    %c0_i32 = arith.constant 0 : i32
    %c0_i32_0 = arith.constant 0 : i32
    %c0_i32_1 = arith.constant 0 : i32
    return %c0_i32, %c0_i32_0 : i32, i32
  }
  func.func @transform_4(%arg0: i32) -> (i32, i32) {
    %c0_i32 = arith.constant 0 : i32
    %c0_i32_0 = arith.constant 0 : i32
    %c0_i32_1 = arith.constant 0 : i32
    return %c0_i32, %c0_i32_0 : i32, i32
  }
  func.func @transform_5(%arg0: i32) -> (i32, i32) {
    %c0_i32 = arith.constant 0 : i32
    %c0_i32_0 = arith.constant 0 : i32
    %c0_i32_1 = arith.constant 0 : i32
    return %c0_i32, %c0_i32_0 : i32, i32
  }
  func.func @transform_6(%arg0: i32) -> (i32, i32) {
    %c0_i32 = arith.constant 0 : i32
    %c0_i32_0 = arith.constant 0 : i32
    %c0_i32_1 = arith.constant 0 : i32
    return %c0_i32, %c0_i32_0 : i32, i32
  }
  func.func @transform_7(%arg0: i32) -> (i32, i32) {
    %c0_i32 = arith.constant 0 : i32
    %c0_i32_0 = arith.constant 0 : i32
    %c0_i32_1 = arith.constant 0 : i32
    return %c0_i32, %c0_i32_0 : i32, i32
  }
  func.func @transform_8(%arg0: i32) -> (i32, i32) {
    %c0_i32 = arith.constant 0 : i32
    %c0_i32_0 = arith.constant 0 : i32
    %c0_i32_1 = arith.constant 0 : i32
    return %c0_i32, %c0_i32_0 : i32, i32
  }
  func.func @transform_9(%arg0: i32) -> (i32, i32) {
    %c0_i32 = arith.constant 0 : i32
    %c0_i32_0 = arith.constant 0 : i32
    %c0_i32_1 = arith.constant 0 : i32
    return %c0_i32, %c0_i32_0 : i32, i32
  }
  func.func @transform_10(%arg0: i32) -> (i32, i32) {
    %c0_i32 = arith.constant 0 : i32
    %c0_i32_0 = arith.constant 0 : i32
    %c0_i32_1 = arith.constant 0 : i32
    return %c0_i32, %c0_i32_0 : i32, i32
  }
  func.func @transform_11(%arg0: i32) -> (i32, i32) {
    %c0_i32 = arith.constant 0 : i32
    %c0_i32_0 = arith.constant 0 : i32
    %c0_i32_1 = arith.constant 0 : i32
    return %c0_i32, %c0_i32_0 : i32, i32
  }
  func.func @transform_12(%arg0: i32) -> (i32, i32) {
    %c0_i32 = arith.constant 0 : i32
    %c0_i32_0 = arith.constant 0 : i32
    %c0_i32_1 = arith.constant 0 : i32
    return %c0_i32, %c0_i32_0 : i32, i32
  }
  func.func @transform_13(%arg0: i32) -> (i32, i32) {
    %c0_i32 = arith.constant 0 : i32
    %c0_i32_0 = arith.constant 0 : i32
    %c0_i32_1 = arith.constant 0 : i32
    return %c0_i32, %c0_i32_0 : i32, i32
  }
  func.func @transform_14(%arg0: i32) -> (i32, i32) {
    %c0_i32 = arith.constant 0 : i32
    %c0_i32_0 = arith.constant 0 : i32
    %c0_i32_1 = arith.constant 0 : i32
    return %c0_i32, %c0_i32_0 : i32, i32
  }
  func.func @transform_15(%arg0: i32) -> (i32, i32) {
    %c0_i32 = arith.constant 0 : i32
    %c0_i32_0 = arith.constant 0 : i32
    %c0_i32_1 = arith.constant 0 : i32
    return %c0_i32, %c0_i32_0 : i32, i32
  }
  func.func @transform_16(%arg0: i32) -> (i32, i32) {
    %c0_i32 = arith.constant 0 : i32
    %c0_i32_0 = arith.constant 0 : i32
    %c0_i32_1 = arith.constant 0 : i32
    return %c0_i32, %c0_i32_0 : i32, i32
  }
  func.func @transform_17(%arg0: i32) -> (i32, i32) {
    %c0_i32 = arith.constant 0 : i32
    %c0_i32_0 = arith.constant 0 : i32
    %c0_i32_1 = arith.constant 0 : i32
    return %c0_i32, %c0_i32_0 : i32, i32
  }
  func.func @transform_18(%arg0: i32) -> (i32, i32) {
    %c0_i32 = arith.constant 0 : i32
    %c0_i32_0 = arith.constant 0 : i32
    %c0_i32_1 = arith.constant 0 : i32
    return %c0_i32, %c0_i32_0 : i32, i32
  }
  func.func @transform_19(%arg0: i32) -> (i32, i32) {
    %c0_i32 = arith.constant 0 : i32
    %c0_i32_0 = arith.constant 0 : i32
    %c0_i32_1 = arith.constant 0 : i32
    return %c0_i32, %c0_i32_0 : i32, i32
  }
  func.func @transform_20(%arg0: i32) -> (i32, i32) {
    %c0_i32 = arith.constant 0 : i32
    %c0_i32_0 = arith.constant 0 : i32
    %c0_i32_1 = arith.constant 0 : i32
    return %c0_i32, %c0_i32_0 : i32, i32
  }
  func.func @transform_21(%arg0: i32) -> (i32, i32) {
    %c0_i32 = arith.constant 0 : i32
    %c0_i32_0 = arith.constant 0 : i32
    %c0_i32_1 = arith.constant 0 : i32
    return %c0_i32, %c0_i32_0 : i32, i32
  }
  func.func @transform_22(%arg0: i32) -> (i32, i32) {
    %c0_i32 = arith.constant 0 : i32
    %c0_i32_0 = arith.constant 0 : i32
    %c0_i32_1 = arith.constant 0 : i32
    return %c0_i32, %c0_i32_0 : i32, i32
  }
  func.func @transform_23(%arg0: i32) -> (i32, i32) {
    %c0_i32 = arith.constant 0 : i32
    %c0_i32_0 = arith.constant 0 : i32
    %c0_i32_1 = arith.constant 0 : i32
    return %c0_i32, %c0_i32_0 : i32, i32
  }
  func.func @transform_24(%arg0: i32) -> (i32, i32, i32) {
    %c0_i32 = arith.constant 0 : i32
    %c0_i32_0 = arith.constant 0 : i32
    %c0_i32_1 = arith.constant 0 : i32
    return %arg0, %c0_i32, %c0_i32_0 : i32, i32, i32
  }
}

</mosaic_0001>

<llo_original>
// kernel: clip_stage_adapter_forward.1
$region0: #{clip_stage_adapter_forward.1}
  #allocation0 [shape = 'u32[]', space=smem, size = 0x4, offset = 0x4, fixed_abs, tag = 'smem constant byte address 0x4 - core index']
  #allocation1 [shape = 'u32[144,128]{1,0:T(1,128)}', space=vmem, size = 0x12000, scoped, tag = 'internal scratch']
  %s0 = inlined_call_operand.vmem [shape: f32[2,8,256], index: 0, kind: input, shape index: {}]
  %s1 = inlined_call_operand.vmem [shape: f32[2,16,8], index: 1, kind: input, shape index: {}]
  %s2 = inlined_call_operand.vmem [shape: f32[2,8,1], index: 2, kind: input, shape index: {}]
  %s3 = inlined_call_operand.vmem [shape: f32[96,8], index: 3, kind: input, shape index: {}]
  %s4 = inlined_call_operand.vmem [shape: f32[96,1], index: 4, kind: input, shape index: {}]
  %s5 = inlined_call_operand.vmem [shape: f32[8,32], index: 5, kind: input, shape index: {}]
  %s6 = inlined_call_operand.vmem [shape: f32[8,1], index: 6, kind: input, shape index: {}]
  %s7 = inlined_call_operand.vmem [shape: f32[64,16], index: 7, kind: input, shape index: {}]
  %s8 = inlined_call_operand.vmem [shape: f32[64,8], index: 8, kind: input, shape index: {}]
  %s9 = inlined_call_operand.vmem [shape: f32[32,256], index: 9, kind: input, shape index: {}]
  %s10 = inlined_call_operand.vmem [shape: f32[8,64], index: 10, kind: input, shape index: {}]
  %s11 = inlined_call_operand.vmem [shape: f32[64,64], index: 11, kind: input, shape index: {}]
  %s12 = inlined_call_operand.vmem [shape: f32[32,32], index: 12, kind: input, shape index: {}]
  %s13 = inlined_call_operand.vmem [shape: f32[32,1], index: 13, kind: input, shape index: {}]
  %s14 = inlined_call_operand.vmem [shape: f32[32,1], index: 14, kind: input, shape index: {}]
  %s15 = inlined_call_operand.vmem [shape: f32[32,1], index: 15, kind: input, shape index: {}]
  %s16 = inlined_call_operand.vmem [shape: f32[8,32], index: 16, kind: input, shape index: {}]
  %s17 = inlined_call_operand.vmem [shape: f32[8,1], index: 17, kind: input, shape index: {}]
  %s18 = inlined_call_operand.vmem [shape: f32[32,8], index: 18, kind: input, shape index: {}]
  %s19 = inlined_call_operand.vmem [shape: f32[32,8], index: 19, kind: input, shape index: {}]
  %s20 = inlined_call_operand.vmem [shape: f32[32,8], index: 20, kind: input, shape index: {}]
  %s21 = inlined_call_operand.vmem [shape: f32[32,1], index: 21, kind: input, shape index: {}]
  %s22 = inlined_call_operand.vmem [shape: f32[3,32], index: 22, kind: input, shape index: {}]
  %s23 = inlined_call_operand.vmem [shape: f32[3,1], index: 23, kind: input, shape index: {}]
  %s24 = inlined_call_operand.vmem [shape: f32[2,8,256], index: 24, kind: output, shape index: {}]
  %s25 = sld [smem:[#allocation0]]
  $region129: #{clip_stage_adapter_forward.1} parent=0
    _
  %s27 = ssub.s32 1, %s25
  %s28 = scalar_select 0, %s27, %s25
  loop: start=0, step=1, limit=4
  $region2: #{clip_stage_adapter_forward.1} parent=0 // loop_pre_header
    _
  $region3: #{clip_stage_adapter_forward.1} parent=0 // loop_header
    %s30 = sphi 0, %s34
    %p31 = scmp.ge.s32.totalorder %s30, 4
    %s40 = sphi 0, %s42
    %s43 = sphi 0, %s40
    %s44 = sphi 0, %s43
    %s60 = sphi 0, %s44
    %s66 = sphi 0, %s68
    %s69 = sphi 0, %s66
    %s70 = sphi 0, %s69
    %s86 = sphi 0, %s70
    %s92 = sphi 0, %s94
    %s95 = sphi 0, %s92
    %s96 = sphi 0, %s95
    %s112 = sphi 0, %s96
    %s116 = sphi 0, %s116
    %s118 = sphi 0, %s116
    %s119 = sphi 0, %s118
    %s133 = sphi 0, %s119
    %s137 = sphi 0, %s137
    %s139 = sphi 0, %s137
    %s140 = sphi 0, %s139
    %s154 = sphi 0, %s140
    %s158 = sphi 0, %s158
    %s160 = sphi 0, %s158
    %s161 = sphi 0, %s160
    %s175 = sphi 0, %s161
    %s179 = sphi 0, %s179
    %s181 = sphi 0, %s179
    %s182 = sphi 0, %s181
    %s196 = sphi 0, %s182
    %s200 = sphi 0, %s200
    %s202 = sphi 0, %s200
    %s203 = sphi 0, %s202
    %s217 = sphi 0, %s203
    %s221 = sphi 0, %s221
    %s223 = sphi 0, %s221
    %s224 = sphi 0, %s223
    %s238 = sphi 0, %s224
    %s242 = sphi 0, %s242
    %s244 = sphi 0, %s242
    %s245 = sphi 0, %s244
    %s259 = sphi 0, %s245
    %s263 = sphi 0, %s263
    %s265 = sphi 0, %s263
    %s266 = sphi 0, %s265
    %s280 = sphi 0, %s266
    %s284 = sphi 0, %s284
    %s286 = sphi 0, %s284
    %s287 = sphi 0, %s286
    %s301 = sphi 0, %s287
    %s305 = sphi 0, %s305
    %s307 = sphi 0, %s305
    %s308 = sphi 0, %s307
    %s322 = sphi 0, %s308
    %s326 = sphi 0, %s326
    %s328 = sphi 0, %s326
    %s329 = sphi 0, %s328
    %s343 = sphi 0, %s329
    %s347 = sphi 0, %s347
    %s349 = sphi 0, %s347
    %s350 = sphi 0, %s349
    %s364 = sphi 0, %s350
    %s368 = sphi 0, %s368
    %s370 = sphi 0, %s368
    %s371 = sphi 0, %s370
    %s385 = sphi 0, %s371
    %s389 = sphi 0, %s389
    %s391 = sphi 0, %s389
    %s392 = sphi 0, %s391
    %s406 = sphi 0, %s392
    %s410 = sphi 0, %s410
    %s412 = sphi 0, %s410
    %s413 = sphi 0, %s412
    %s427 = sphi 0, %s413
    %s431 = sphi 0, %s431
    %s433 = sphi 0, %s431
    %s434 = sphi 0, %s433
    %s448 = sphi 0, %s434
    %s452 = sphi 0, %s452
    %s454 = sphi 0, %s452
    %s455 = sphi 0, %s454
    %s469 = sphi 0, %s455
    %s473 = sphi 0, %s473
    %s475 = sphi 0, %s473
    %s476 = sphi 0, %s475
    %s490 = sphi 0, %s476
    %s494 = sphi 0, %s494
    %s496 = sphi 0, %s494
    %s497 = sphi 0, %s496
    %s511 = sphi 0, %s497
    %s515 = sphi 0, %s515
    %s517 = sphi 0, %s515
    %s518 = sphi 0, %s517
    %s532 = sphi 0, %s518
    %s536 = sphi 0, %s536
    %s538 = sphi 0, %s536
    %s539 = sphi 0, %s538
    %s553 = sphi 0, %s539
    %s559 = sphi 0, %s561
    %s562 = sphi 0, %s559
    %s563 = sphi 0, %s562
    %s579 = sphi 0, %s563
  $region4: #{clip_stage_adapter_forward.1} parent=0 // loop_header_branch
    %33 = sbr.rel (%p31) target = $region8
  $region5: #{clip_stage_adapter_forward.1} parent=0 // loop_body
    %s35 = ssub.s32 %s30, 1
    %s36 = ssub.s32 %s30, 2
    %s37 = sadd.s32 %s30, 1
    %s38 = ssub.s32 %s30, %s37
    %p39 = scmp.eq.s32.totalorder %s38, 0
    %s41 = sadd.s32 %s40, 1
    %s42 = scalar_select %p39, %s40, %s41
    %p45 = pneg %p39
    %p46 = scmp.eq.s32.totalorder %s30, 1
    %p47 = por %p45, %p46
    %p48 = scmp.ne.s32.totalorder %s40, %s43
    %p49 = scmp.eq.s32.totalorder %s30, 0
    %p50 = por %p48, %p49
    %p51 = scmp.ne.s32.totalorder %s40, %s43
    %p52 = scmp.eq.s32.totalorder %s35, 1
    %p53 = por %p51, %p52
    %p54 = scmp.ne.s32.totalorder %s43, %s44
    %p55 = scmp.eq.s32.totalorder %s35, 0
    %p56 = por %p54, %p55
    %p57 = scmp.ne.s32.totalorder %s43, %s44
    %p58 = scmp.eq.s32.totalorder %s36, 1
    %p59 = por %p57, %p58
    %p61 = scmp.ne.s32.totalorder %s44, %s60
    %p62 = scmp.eq.s32.totalorder %s36, 0
    %p63 = por %p61, %p62
    %s64 = ssub.s32 %s30, %s37
    %p65 = scmp.eq.s32.totalorder %s64, 0
    %s67 = sadd.s32 %s66, 1
    %s68 = scalar_select %p65, %s66, %s67
    %p71 = pneg %p65
    %p72 = scmp.eq.s32.totalorder %s30, 1
    %p73 = por %p71, %p72
    %p74 = scmp.ne.s32.totalorder %s66, %s69
    %p75 = scmp.eq.s32.totalorder %s30, 0
    %p76 = por %p74, %p75
    %p77 = scmp.ne.s32.totalorder %s66, %s69
    %p78 = scmp.eq.s32.totalorder %s35, 1
    %p79 = por %p77, %p78
    %p80 = scmp.ne.s32.totalorder %s69, %s70
    %p81 = scmp.eq.s32.totalorder %s35, 0
    %p82 = por %p80, %p81
    %p83 = scmp.ne.s32.totalorder %s69, %s70
    %p84 = scmp.eq.s32.totalorder %s36, 1
    %p85 = por %p83, %p84
    %p87 = scmp.ne.s32.totalorder %s70, %s86
    %p88 = scmp.eq.s32.totalorder %s36, 0
    %p89 = por %p87, %p88
    %s90 = ssub.s32 %s30, %s37
    %p91 = scmp.eq.s32.totalorder %s90, 0
    %s93 = sadd.s32 %s92, 1
    %s94 = scalar_select %p91, %s92, %s93
    %p97 = pneg %p91
    %p98 = scmp.eq.s32.totalorder %s30, 1
    %p99 = por %p97, %p98
    %p100 = scmp.ne.s32.totalorder %s92, %s95
    %p101 = scmp.eq.s32.totalorder %s30, 0
    %p102 = por %p100, %p101
    %p103 = scmp.ne.s32.totalorder %s92, %s95
    %p104 = scmp.eq.s32.totalorder %s35, 1
    %p105 = por %p103, %p104
    %p106 = scmp.ne.s32.totalorder %s95, %s96
    %p107 = scmp.eq.s32.totalorder %s35, 0
    %p108 = por %p106, %p107
    %p109 = scmp.ne.s32.totalorder %s95, %s96
    %p110 = scmp.eq.s32.totalorder %s36, 1
    %p111 = por %p109, %p110
    %p113 = scmp.ne.s32.totalorder %s96, %s112
    %p114 = scmp.eq.s32.totalorder %s36, 0
    %p115 = por %p113, %p114
    %s117 = sadd.s32 %s116, 1
    %p120 = scmp.eq.s32.totalorder %s30, 1
    %p121 = scmp.ne.s32.totalorder %s116, %s118
    %p122 = scmp.eq.s32.totalorder %s30, 0
    %p123 = por %p121, %p122
    %p124 = scmp.ne.s32.totalorder %s116, %s118
    %p125 = scmp.eq.s32.totalorder %s35, 1
    %p126 = por %p124, %p125
    %p127 = scmp.ne.s32.totalorder %s118, %s119
    %p128 = scmp.eq.s32.totalorder %s35, 0
    %p129 = por %p127, %p128
    %p130 = scmp.ne.s32.totalorder %s118, %s119
    %p131 = scmp.eq.s32.totalorder %s36, 1
    %p132 = por %p130, %p131
    %p134 = scmp.ne.s32.totalorder %s119, %s133
    %p135 = scmp.eq.s32.totalorder %s36, 0
    %p136 = por %p134, %p135
    %s138 = sadd.s32 %s137, 1
    %p141 = scmp.eq.s32.totalorder %s30, 1
    %p142 = scmp.ne.s32.totalorder %s137, %s139
    %p143 = scmp.eq.s32.totalorder %s30, 0
    %p144 = por %p142, %p143
    %p145 = scmp.ne.s32.totalorder %s137, %s139
    %p146 = scmp.eq.s32.totalorder %s35, 1
    %p147 = por %p145, %p146
    %p148 = scmp.ne.s32.totalorder %s139, %s140
    %p149 = scmp.eq.s32.totalorder %s35, 0
    %p150 = por %p148, %p149
    %p151 = scmp.ne.s32.totalorder %s139, %s140
    %p152 = scmp.eq.s32.totalorder %s36, 1
    %p153 = por %p151, %p152
    %p155 = scmp.ne.s32.totalorder %s140, %s154
    %p156 = scmp.eq.s32.totalorder %s36, 0
    %p157 = por %p155, %p156
    %s159 = sadd.s32 %s158, 1
    %p162 = scmp.eq.s32.totalorder %s30, 1
    %p163 = scmp.ne.s32.totalorder %s158, %s160
    %p164 = scmp.eq.s32.totalorder %s30, 0
    %p165 = por %p163, %p164
    %p166 = scmp.ne.s32.totalorder %s158, %s160
    %p167 = scmp.eq.s32.totalorder %s35, 1
    %p168 = por %p166, %p167
    %p169 = scmp.ne.s32.totalorder %s160, %s161
    %p170 = scmp.eq.s32.totalorder %s35, 0
    %p171 = por %p169, %p170
    %p172 = scmp.ne.s32.totalorder %s160, %s161
    %p173 = scmp.eq.s32.totalorder %s36, 1
    %p174 = por %p172, %p173
    %p176 = scmp.ne.s32.totalorder %s161, %s175
    %p177 = scmp.eq.s32.totalorder %s36, 0
    %p178 = por %p176, %p177
    %s180 = sadd.s32 %s179, 1
    %p183 = scmp.eq.s32.totalorder %s30, 1
    %p184 = scmp.ne.s32.totalorder %s179, %s181
    %p185 = scmp.eq.s32.totalorder %s30, 0
    %p186 = por %p184, %p185
    %p187 = scmp.ne.s32.totalorder %s179, %s181
    %p188 = scmp.eq.s32.totalorder %s35, 1
    %p189 = por %p187, %p188
    %p190 = scmp.ne.s32.totalorder %s181, %s182
    %p191 = scmp.eq.s32.totalorder %s35, 0
    %p192 = por %p190, %p191
    %p193 = scmp.ne.s32.totalorder %s181, %s182
    %p194 = scmp.eq.s32.totalorder %s36, 1
    %p195 = por %p193, %p194
    %p197 = scmp.ne.s32.totalorder %s182, %s196
    %p198 = scmp.eq.s32.totalorder %s36, 0
    %p199 = por %p197, %p198
    %s201 = sadd.s32 %s200, 1
    %p204 = scmp.eq.s32.totalorder %s30, 1
    %p205 = scmp.ne.s32.totalorder %s200, %s202
    %p206 = scmp.eq.s32.totalorder %s30, 0
    %p207 = por %p205, %p206
    %p208 = scmp.ne.s32.totalorder %s200, %s202
    %p209 = scmp.eq.s32.totalorder %s35, 1
    %p210 = por %p208, %p209
    %p211 = scmp.ne.s32.totalorder %s202, %s203
    %p212 = scmp.eq.s32.totalorder %s35, 0
    %p213 = por %p211, %p212
    %p214 = scmp.ne.s32.totalorder %s202, %s203
    %p215 = scmp.eq.s32.totalorder %s36, 1
    %p216 = por %p214, %p215
    %p218 = scmp.ne.s32.totalorder %s203, %s217
    %p219 = scmp.eq.s32.totalorder %s36, 0
    %p220 = por %p218, %p219
    %s222 = sadd.s32 %s221, 1
    %p225 = scmp.eq.s32.totalorder %s30, 1
    %p226 = scmp.ne.s32.totalorder %s221, %s223
    %p227 = scmp.eq.s32.totalorder %s30, 0
    %p228 = por %p226, %p227
    %p229 = scmp.ne.s32.totalorder %s221, %s223
    %p230 = scmp.eq.s32.totalorder %s35, 1
    %p231 = por %p229, %p230
    %p232 = scmp.ne.s32.totalorder %s223, %s224
    %p233 = scmp.eq.s32.totalorder %s35, 0
    %p234 = por %p232, %p233
    %p235 = scmp.ne.s32.totalorder %s223, %s224
    %p236 = scmp.eq.s32.totalorder %s36, 1
    %p237 = por %p235, %p236
    %p239 = scmp.ne.s32.totalorder %s224, %s238
    %p240 = scmp.eq.s32.totalorder %s36, 0
    %p241 = por %p239, %p240
    %s243 = sadd.s32 %s242, 1
    %p246 = scmp.eq.s32.totalorder %s30, 1
    %p247 = scmp.ne.s32.totalorder %s242, %s244
    %p248 = scmp.eq.s32.totalorder %s30, 0
    %p249 = por %p247, %p248
    %p250 = scmp.ne.s32.totalorder %s242, %s244
    %p251 = scmp.eq.s32.totalorder %s35, 1
    %p252 = por %p250, %p251
    %p253 = scmp.ne.s32.totalorder %s244, %s245
    %p254 = scmp.eq.s32.totalorder %s35, 0
    %p255 = por %p253, %p254
    %p256 = scmp.ne.s32.totalorder %s244, %s245
    %p257 = scmp.eq.s32.totalorder %s36, 1
    %p258 = por %p256, %p257
    %p260 = scmp.ne.s32.totalorder %s245, %s259
    %p261 = scmp.eq.s32.totalorder %s36, 0
    %p262 = por %p260, %p261
    %s264 = sadd.s32 %s263, 1
    %p267 = scmp.eq.s32.totalorder %s30, 1
    %p268 = scmp.ne.s32.totalorder %s263, %s265
    %p269 = scmp.eq.s32.totalorder %s30, 0
    %p270 = por %p268, %p269
    %p271 = scmp.ne.s32.totalorder %s263, %s265
    %p272 = scmp.eq.s32.totalorder %s35, 1
    %p273 = por %p271, %p272
    %p274 = scmp.ne.s32.totalorder %s265, %s266
    %p275 = scmp.eq.s32.totalorder %s35, 0
    %p276 = por %p274, %p275
    %p277 = scmp.ne.s32.totalorder %s265, %s266
    %p278 = scmp.eq.s32.totalorder %s36, 1
    %p279 = por %p277, %p278
    %p281 = scmp.ne.s32.totalorder %s266, %s280
    %p282 = scmp.eq.s32.totalorder %s36, 0
    %p283 = por %p281, %p282
    %s285 = sadd.s32 %s284, 1
    %p288 = scmp.eq.s32.totalorder %s30, 1
    %p289 = scmp.ne.s32.totalorder %s284, %s286
    %p290 = scmp.eq.s32.totalorder %s30, 0
    %p291 = por %p289, %p290
    %p292 = scmp.ne.s32.totalorder %s284, %s286
    %p293 = scmp.eq.s32.totalorder %s35, 1
    %p294 = por %p292, %p293
    %p295 = scmp.ne.s32.totalorder %s286, %s287
    %p296 = scmp.eq.s32.totalorder %s35, 0
    %p297 = por %p295, %p296
    %p298 = scmp.ne.s32.totalorder %s286, %s287
    %p299 = scmp.eq.s32.totalorder %s36, 1
    %p300 = por %p298, %p299
    %p302 = scmp.ne.s32.totalorder %s287, %s301
    %p303 = scmp.eq.s32.totalorder %s36, 0
    %p304 = por %p302, %p303
    %s306 = sadd.s32 %s305, 1
    %p309 = scmp.eq.s32.totalorder %s30, 1
    %p310 = scmp.ne.s32.totalorder %s305, %s307
    %p311 = scmp.eq.s32.totalorder %s30, 0
    %p312 = por %p310, %p311
    %p313 = scmp.ne.s32.totalorder %s305, %s307
    %p314 = scmp.eq.s32.totalorder %s35, 1
    %p315 = por %p313, %p314
    %p316 = scmp.ne.s32.totalorder %s307, %s308
    %p317 = scmp.eq.s32.totalorder %s35, 0
    %p318 = por %p316, %p317
    %p319 = scmp.ne.s32.totalorder %s307, %s308
    %p320 = scmp.eq.s32.totalorder %s36, 1
    %p321 = por %p319, %p320
    %p323 = scmp.ne.s32.totalorder %s308, %s322
    %p324 = scmp.eq.s32.totalorder %s36, 0
    %p325 = por %p323, %p324
    %s327 = sadd.s32 %s326, 1
    %p330 = scmp.eq.s32.totalorder %s30, 1
    %p331 = scmp.ne.s32.totalorder %s326, %s328
    %p332 = scmp.eq.s32.totalorder %s30, 0
    %p333 = por %p331, %p332
    %p334 = scmp.ne.s32.totalorder %s326, %s328
    %p335 = scmp.eq.s32.totalorder %s35, 1
    %p336 = por %p334, %p335
    %p337 = scmp.ne.s32.totalorder %s328, %s329
    %p338 = scmp.eq.s32.totalorder %s35, 0
    %p339 = por %p337, %p338
    %p340 = scmp.ne.s32.totalorder %s328, %s329
    %p341 = scmp.eq.s32.totalorder %s36, 1
    %p342 = por %p340, %p341
    %p344 = scmp.ne.s32.totalorder %s329, %s343
    %p345 = scmp.eq.s32.totalorder %s36, 0
    %p346 = por %p344, %p345
    %s348 = sadd.s32 %s347, 1
    %p351 = scmp.eq.s32.totalorder %s30, 1
    %p352 = scmp.ne.s32.totalorder %s347, %s349
    %p353 = scmp.eq.s32.totalorder %s30, 0
    %p354 = por %p352, %p353
    %p355 = scmp.ne.s32.totalorder %s347, %s349
    %p356 = scmp.eq.s32.totalorder %s35, 1
    %p357 = por %p355, %p356
    %p358 = scmp.ne.s32.totalorder %s349, %s350
    %p359 = scmp.eq.s32.totalorder %s35, 0
    %p360 = por %p358, %p359
    %p361 = scmp.ne.s32.totalorder %s349, %s350
    %p362 = scmp.eq.s32.totalorder %s36, 1
    %p363 = por %p361, %p362
    %p365 = scmp.ne.s32.totalorder %s350, %s364
    %p366 = scmp.eq.s32.totalorder %s36, 0
    %p367 = por %p365, %p366
    %s369 = sadd.s32 %s368, 1
    %p372 = scmp.eq.s32.totalorder %s30, 1
    %p373 = scmp.ne.s32.totalorder %s368, %s370
    %p374 = scmp.eq.s32.totalorder %s30, 0
    %p375 = por %p373, %p374
    %p376 = scmp.ne.s32.totalorder %s368, %s370
    %p377 = scmp.eq.s32.totalorder %s35, 1
    %p378 = por %p376, %p377
    %p379 = scmp.ne.s32.totalorder %s370, %s371
    %p380 = scmp.eq.s32.totalorder %s35, 0
    %p381 = por %p379, %p380
    %p382 = scmp.ne.s32.totalorder %s370, %s371
    %p383 = scmp.eq.s32.totalorder %s36, 1
    %p384 = por %p382, %p383
    %p386 = scmp.ne.s32.totalorder %s371, %s385
    %p387 = scmp.eq.s32.totalorder %s36, 0
    %p388 = por %p386, %p387
    %s390 = sadd.s32 %s389, 1
    %p393 = scmp.eq.s32.totalorder %s30, 1
    %p394 = scmp.ne.s32.totalorder %s389, %s391
    %p395 = scmp.eq.s32.totalorder %s30, 0
    %p396 = por %p394, %p395
    %p397 = scmp.ne.s32.totalorder %s389, %s391
    %p398 = scmp.eq.s32.totalorder %s35, 1
    %p399 = por %p397, %p398
    %p400 = scmp.ne.s32.totalorder %s391, %s392
    %p401 = scmp.eq.s32.totalorder %s35, 0
    %p402 = por %p400, %p401
    %p403 = scmp.ne.s32.totalorder %s391, %s392
    %p404 = scmp.eq.s32.totalorder %s36, 1
    %p405 = por %p403, %p404
    %p407 = scmp.ne.s32.totalorder %s392, %s406
    %p408 = scmp.eq.s32.totalorder %s36, 0
    %p409 = por %p407, %p408
    %s411 = sadd.s32 %s410, 1
    %p414 = scmp.eq.s32.totalorder %s30, 1
    %p415 = scmp.ne.s32.totalorder %s410, %s412
    %p416 = scmp.eq.s32.totalorder %s30, 0
    %p417 = por %p415, %p416
    %p418 = scmp.ne.s32.totalorder %s410, %s412
    %p419 = scmp.eq.s32.totalorder %s35, 1
    %p420 = por %p418, %p419
    %p421 = scmp.ne.s32.totalorder %s412, %s413
    %p422 = scmp.eq.s32.totalorder %s35, 0
    %p423 = por %p421, %p422
    %p424 = scmp.ne.s32.totalorder %s412, %s413
    %p425 = scmp.eq.s32.totalorder %s36, 1
    %p426 = por %p424, %p425
    %p428 = scmp.ne.s32.totalorder %s413, %s427
    %p429 = scmp.eq.s32.totalorder %s36, 0
    %p430 = por %p428, %p429
    %s432 = sadd.s32 %s431, 1
    %p435 = scmp.eq.s32.totalorder %s30, 1
    %p436 = scmp.ne.s32.totalorder %s431, %s433
    %p437 = scmp.eq.s32.totalorder %s30, 0
    %p438 = por %p436, %p437
    %p439 = scmp.ne.s32.totalorder %s431, %s433
    %p440 = scmp.eq.s32.totalorder %s35, 1
    %p441 = por %p439, %p440
    %p442 = scmp.ne.s32.totalorder %s433, %s434
    %p443 = scmp.eq.s32.totalorder %s35, 0
    %p444 = por %p442, %p443
    %p445 = scmp.ne.s32.totalorder %s433, %s434
    %p446 = scmp.eq.s32.totalorder %s36, 1
    %p447 = por %p445, %p446
    %p449 = scmp.ne.s32.totalorder %s434, %s448
    %p450 = scmp.eq.s32.totalorder %s36, 0
    %p451 = por %p449, %p450
    %s453 = sadd.s32 %s452, 1
    %p456 = scmp.eq.s32.totalorder %s30, 1
    %p457 = scmp.ne.s32.totalorder %s452, %s454
    %p458 = scmp.eq.s32.totalorder %s30, 0
    %p459 = por %p457, %p458
    %p460 = scmp.ne.s32.totalorder %s452, %s454
    %p461 = scmp.eq.s32.totalorder %s35, 1
    %p462 = por %p460, %p461
    %p463 = scmp.ne.s32.totalorder %s454, %s455
    %p464 = scmp.eq.s32.totalorder %s35, 0
    %p465 = por %p463, %p464
    %p466 = scmp.ne.s32.totalorder %s454, %s455
    %p467 = scmp.eq.s32.totalorder %s36, 1
    %p468 = por %p466, %p467
    %p470 = scmp.ne.s32.totalorder %s455, %s469
    %p471 = scmp.eq.s32.totalorder %s36, 0
    %p472 = por %p470, %p471
    %s474 = sadd.s32 %s473, 1
    %p477 = scmp.eq.s32.totalorder %s30, 1
    %p478 = scmp.ne.s32.totalorder %s473, %s475
    %p479 = scmp.eq.s32.totalorder %s30, 0
    %p480 = por %p478, %p479
    %p481 = scmp.ne.s32.totalorder %s473, %s475
    %p482 = scmp.eq.s32.totalorder %s35, 1
    %p483 = por %p481, %p482
    %p484 = scmp.ne.s32.totalorder %s475, %s476
    %p485 = scmp.eq.s32.totalorder %s35, 0
    %p486 = por %p484, %p485
    %p487 = scmp.ne.s32.totalorder %s475, %s476
    %p488 = scmp.eq.s32.totalorder %s36, 1
    %p489 = por %p487, %p488
    %p491 = scmp.ne.s32.totalorder %s476, %s490
    %p492 = scmp.eq.s32.totalorder %s36, 0
    %p493 = por %p491, %p492
    %s495 = sadd.s32 %s494, 1
    %p498 = scmp.eq.s32.totalorder %s30, 1
    %p499 = scmp.ne.s32.totalorder %s494, %s496
    %p500 = scmp.eq.s32.totalorder %s30, 0
    %p501 = por %p499, %p500
    %p502 = scmp.ne.s32.totalorder %s494, %s496
    %p503 = scmp.eq.s32.totalorder %s35, 1
    %p504 = por %p502, %p503
    %p505 = scmp.ne.s32.totalorder %s496, %s497
    %p506 = scmp.eq.s32.totalorder %s35, 0
    %p507 = por %p505, %p506
    %p508 = scmp.ne.s32.totalorder %s496, %s497
    %p509 = scmp.eq.s32.totalorder %s36, 1
    %p510 = por %p508, %p509
    %p512 = scmp.ne.s32.totalorder %s497, %s511
    %p513 = scmp.eq.s32.totalorder %s36, 0
    %p514 = por %p512, %p513
    %s516 = sadd.s32 %s515, 1
    %p519 = scmp.eq.s32.totalorder %s30, 1
    %p520 = scmp.ne.s32.totalorder %s515, %s517
    %p521 = scmp.eq.s32.totalorder %s30, 0
    %p522 = por %p520, %p521
    %p523 = scmp.ne.s32.totalorder %s515, %s517
    %p524 = scmp.eq.s32.totalorder %s35, 1
    %p525 = por %p523, %p524
    %p526 = scmp.ne.s32.totalorder %s517, %s518
    %p527 = scmp.eq.s32.totalorder %s35, 0
    %p528 = por %p526, %p527
    %p529 = scmp.ne.s32.totalorder %s517, %s518
    %p530 = scmp.eq.s32.totalorder %s36, 1
    %p531 = por %p529, %p530
    %p533 = scmp.ne.s32.totalorder %s518, %s532
    %p534 = scmp.eq.s32.totalorder %s36, 0
    %p535 = por %p533, %p534
    %s537 = sadd.s32 %s536, 1
    %p540 = scmp.eq.s32.totalorder %s30, 1
    %p541 = scmp.ne.s32.totalorder %s536, %s538
    %p542 = scmp.eq.s32.totalorder %s30, 0
    %p543 = por %p541, %p542
    %p544 = scmp.ne.s32.totalorder %s536, %s538
    %p545 = scmp.eq.s32.totalorder %s35, 1
    %p546 = por %p544, %p545
    %p547 = scmp.ne.s32.totalorder %s538, %s539
    %p548 = scmp.eq.s32.totalorder %s35, 0
    %p549 = por %p547, %p548
    %p550 = scmp.ne.s32.totalorder %s538, %s539
    %p551 = scmp.eq.s32.totalorder %s36, 1
    %p552 = por %p550, %p551
    %p554 = scmp.ne.s32.totalorder %s539, %s553
    %p555 = scmp.eq.s32.totalorder %s36, 0
    %p556 = por %p554, %p555
    %s557 = ssub.s32 %s30, %s37
    %p558 = scmp.eq.s32.totalorder %s557, 0
    %s560 = sadd.s32 %s559, 1
    %s561 = scalar_select %p558, %s559, %s560
    %p564 = pneg %p558
    %p565 = scmp.eq.s32.totalorder %s30, 1
    %p566 = por %p564, %p565
    %p567 = scmp.ne.s32.totalorder %s559, %s562
    %p568 = scmp.eq.s32.totalorder %s30, 0
    %p569 = por %p567, %p568
    %p570 = scmp.ne.s32.totalorder %s559, %s562
    %p571 = scmp.eq.s32.totalorder %s35, 1
    %p572 = por %p570, %p571
    %p573 = scmp.ne.s32.totalorder %s562, %s563
    %p574 = scmp.eq.s32.totalorder %s35, 0
    %p575 = por %p573, %p574
    %p576 = scmp.ne.s32.totalorder %s562, %s563
    %p577 = scmp.eq.s32.totalorder %s36, 1
    %p578 = por %p576, %p577
    %p580 = scmp.ne.s32.totalorder %s563, %s579
    %p581 = scmp.eq.s32.totalorder %s36, 0
    %p582 = por %p580, %p581
    %p583 = scmp.le.s32.totalorder 1, %s30
    %p584 = scmp.lt.s32.totalorder %s30, 3
    %p585 = pnand %p583, %p584
    %p586 = pneg %p585
    // Predicated region
    $region9: #{clip_stage_adapter_forward.1} parent=5 // pred_check
      _
    $region10: #{clip_stage_adapter_forward.1} parent=5 // pred_check_branch
      %588 = sbr.rel (%p585) target = $region12
    $region11: #{clip_stage_adapter_forward.1} parent=5 // pred_region
      %s589 = ssub.s32 %s30, 1
      // Predicated region
      $region13: #{clip_stage_adapter_forward.1} parent=11 // pred_check
        %p590 = pneg %p129
      $region14: #{clip_stage_adapter_forward.1} parent=11 // pred_check_branch
        %592 = sbr.rel (%p590) target = $region16
      $region15: #{clip_stage_adapter_forward.1} parent=11 // pred_region
        _
      $region16: #{clip_stage_adapter_forward.1} parent=11 // pred_fallthru
        _
      // Predicated region
      $region17: #{clip_stage_adapter_forward.1} parent=11 // pred_check
        %p593 = pneg %p150
      $region18: #{clip_stage_adapter_forward.1} parent=11 // pred_check_branch
        %595 = sbr.rel (%p593) target = $region20
      $region19: #{clip_stage_adapter_forward.1} parent=11 // pred_region
        _
      $region20: #{clip_stage_adapter_forward.1} parent=11 // pred_fallthru
        _
      // Predicated region
      $region21: #{clip_stage_adapter_forward.1} parent=11 // pred_check
        %p596 = pneg %p171
      $region22: #{clip_stage_adapter_forward.1} parent=11 // pred_check_branch
        %598 = sbr.rel (%p596) target = $region24
      $region23: #{clip_stage_adapter_forward.1} parent=11 // pred_region
        _
      $region24: #{clip_stage_adapter_forward.1} parent=11 // pred_fallthru
        _
      // Predicated region
      $region25: #{clip_stage_adapter_forward.1} parent=11 // pred_check
        %p599 = pneg %p192
      $region26: #{clip_stage_adapter_forward.1} parent=11 // pred_check_branch
        %601 = sbr.rel (%p599) target = $region28
      $region27: #{clip_stage_adapter_forward.1} parent=11 // pred_region
        _
      $region28: #{clip_stage_adapter_forward.1} parent=11 // pred_fallthru
        _
      // Predicated region
      $region29: #{clip_stage_adapter_forward.1} parent=11 // pred_check
        %p602 = pneg %p213
      $region30: #{clip_stage_adapter_forward.1} parent=11 // pred_check_branch
        %604 = sbr.rel (%p602) target = $region32
      $region31: #{clip_stage_adapter_forward.1} parent=11 // pred_region
        _
      $region32: #{clip_stage_adapter_forward.1} parent=11 // pred_fallthru
        _
      // Predicated region
      $region33: #{clip_stage_adapter_forward.1} parent=11 // pred_check
        %p605 = pneg %p234
      $region34: #{clip_stage_adapter_forward.1} parent=11 // pred_check_branch
        %607 = sbr.rel (%p605) target = $region36
      $region35: #{clip_stage_adapter_forward.1} parent=11 // pred_region
        _
      $region36: #{clip_stage_adapter_forward.1} parent=11 // pred_fallthru
        _
      // Predicated region
      $region37: #{clip_stage_adapter_forward.1} parent=11 // pred_check
        %p608 = pneg %p255
      $region38: #{clip_stage_adapter_forward.1} parent=11 // pred_check_branch
        %610 = sbr.rel (%p608) target = $region40
      $region39: #{clip_stage_adapter_forward.1} parent=11 // pred_region
        _
      $region40: #{clip_stage_adapter_forward.1} parent=11 // pred_fallthru
        _
      // Predicated region
      $region41: #{clip_stage_adapter_forward.1} parent=11 // pred_check
        %p611 = pneg %p276
      $region42: #{clip_stage_adapter_forward.1} parent=11 // pred_check_branch
        %613 = sbr.rel (%p611) target = $region44
      $region43: #{clip_stage_adapter_forward.1} parent=11 // pred_region
        _
      $region44: #{clip_stage_adapter_forward.1} parent=11 // pred_fallthru
        _
      // Predicated region
      $region45: #{clip_stage_adapter_forward.1} parent=11 // pred_check
        %p614 = pneg %p297
      $region46: #{clip_stage_adapter_forward.1} parent=11 // pred_check_branch
        %616 = sbr.rel (%p614) target = $region48
      $region47: #{clip_stage_adapter_forward.1} parent=11 // pred_region
        _
      $region48: #{clip_stage_adapter_forward.1} parent=11 // pred_fallthru
        _
      // Predicated region
      $region49: #{clip_stage_adapter_forward.1} parent=11 // pred_check
        %p617 = pneg %p318
      $region50: #{clip_stage_adapter_forward.1} parent=11 // pred_check_branch
        %619 = sbr.rel (%p617) target = $region52
      $region51: #{clip_stage_adapter_forward.1} parent=11 // pred_region
        _
      $region52: #{clip_stage_adapter_forward.1} parent=11 // pred_fallthru
        _
      // Predicated region
      $region53: #{clip_stage_adapter_forward.1} parent=11 // pred_check
        %p620 = pneg %p339
      $region54: #{clip_stage_adapter_forward.1} parent=11 // pred_check_branch
        %622 = sbr.rel (%p620) target = $region56
      $region55: #{clip_stage_adapter_forward.1} parent=11 // pred_region
        _
      $region56: #{clip_stage_adapter_forward.1} parent=11 // pred_fallthru
        _
      // Predicated region
      $region57: #{clip_stage_adapter_forward.1} parent=11 // pred_check
        %p623 = pneg %p360
      $region58: #{clip_stage_adapter_forward.1} parent=11 // pred_check_branch
        %625 = sbr.rel (%p623) target = $region60
      $region59: #{clip_stage_adapter_forward.1} parent=11 // pred_region
        _
      $region60: #{clip_stage_adapter_forward.1} parent=11 // pred_fallthru
        _
      // Predicated region
      $region61: #{clip_stage_adapter_forward.1} parent=11 // pred_check
        %p626 = pneg %p381
      $region62: #{clip_stage_adapter_forward.1} parent=11 // pred_check_branch
        %628 = sbr.rel (%p626) target = $region64
      $region63: #{clip_stage_adapter_forward.1} parent=11 // pred_region
        _
      $region64: #{clip_stage_adapter_forward.1} parent=11 // pred_fallthru
        _
      // Predicated region
      $region65: #{clip_stage_adapter_forward.1} parent=11 // pred_check
        %p629 = pneg %p402
      $region66: #{clip_stage_adapter_forward.1} parent=11 // pred_check_branch
        %631 = sbr.rel (%p629) target = $region68
      $region67: #{clip_stage_adapter_forward.1} parent=11 // pred_region
        _
      $region68: #{clip_stage_adapter_forward.1} parent=11 // pred_fallthru
        _
      // Predicated region
      $region69: #{clip_stage_adapter_forward.1} parent=11 // pred_check
        %p632 = pneg %p423
      $region70: #{clip_stage_adapter_forward.1} parent=11 // pred_check_branch
        %634 = sbr.rel (%p632) target = $region72
      $region71: #{clip_stage_adapter_forward.1} parent=11 // pred_region
        _
      $region72: #{clip_stage_adapter_forward.1} parent=11 // pred_fallthru
        _
      // Predicated region
      $region73: #{clip_stage_adapter_forward.1} parent=11 // pred_check
        %p635 = pneg %p444
      $region74: #{clip_stage_adapter_forward.1} parent=11 // pred_check_branch
        %637 = sbr.rel (%p635) target = $region76
      $region75: #{clip_stage_adapter_forward.1} parent=11 // pred_region
        _
      $region76: #{clip_stage_adapter_forward.1} parent=11 // pred_fallthru
        _
      // Predicated region
      $region77: #{clip_stage_adapter_forward.1} parent=11 // pred_check
        %p638 = pneg %p465
      $region78: #{clip_stage_adapter_forward.1} parent=11 // pred_check_branch
        %640 = sbr.rel (%p638) target = $region80
      $region79: #{clip_stage_adapter_forward.1} parent=11 // pred_region
        _
      $region80: #{clip_stage_adapter_forward.1} parent=11 // pred_fallthru
        _
      // Predicated region
      $region81: #{clip_stage_adapter_forward.1} parent=11 // pred_check
        %p641 = pneg %p486
      $region82: #{clip_stage_adapter_forward.1} parent=11 // pred_check_branch
        %643 = sbr.rel (%p641) target = $region84
      $region83: #{clip_stage_adapter_forward.1} parent=11 // pred_region
        _
      $region84: #{clip_stage_adapter_forward.1} parent=11 // pred_fallthru
        _
      // Predicated region
      $region85: #{clip_stage_adapter_forward.1} parent=11 // pred_check
        %p644 = pneg %p507
      $region86: #{clip_stage_adapter_forward.1} parent=11 // pred_check_branch
        %646 = sbr.rel (%p644) target = $region88
      $region87: #{clip_stage_adapter_forward.1} parent=11 // pred_region
        _
      $region88: #{clip_stage_adapter_forward.1} parent=11 // pred_fallthru
        _
      // Predicated region
      $region89: #{clip_stage_adapter_forward.1} parent=11 // pred_check
        %p647 = pneg %p528
      $region90: #{clip_stage_adapter_forward.1} parent=11 // pred_check_branch
        %649 = sbr.rel (%p647) target = $region92
      $region91: #{clip_stage_adapter_forward.1} parent=11 // pred_region
        _
      $region92: #{clip_stage_adapter_forward.1} parent=11 // pred_fallthru
        _
      // Predicated region
      $region93: #{clip_stage_adapter_forward.1} parent=11 // pred_check
        %p650 = pneg %p549
      $region94: #{clip_stage_adapter_forward.1} parent=11 // pred_check_branch
        %652 = sbr.rel (%p650) target = $region96
      $region95: #{clip_stage_adapter_forward.1} parent=11 // pred_region
        _
      $region96: #{clip_stage_adapter_forward.1} parent=11 // pred_fallthru
        _
    $region12: #{clip_stage_adapter_forward.1} parent=5 // pred_fallthru
      _
    %p653 = scmp.lt.s32.totalorder %s30, 2
    // Predicated region
    $region97: #{clip_stage_adapter_forward.1} parent=5 // pred_check
      %p654 = pneg %p653
    $region98: #{clip_stage_adapter_forward.1} parent=5 // pred_check_branch
      %656 = sbr.rel (%p654) target = $region100
    $region99: #{clip_stage_adapter_forward.1} parent=5 // pred_region
      // Predicated region
      $region101: #{clip_stage_adapter_forward.1} parent=99 // pred_check
        %p657 = pneg %p50
      $region102: #{clip_stage_adapter_forward.1} parent=99 // pred_check_branch
        %659 = sbr.rel (%p657) target = $region104
      $region103: #{clip_stage_adapter_forward.1} parent=99 // pred_region
        %p660 = scmp.lt.s32.totalorder %s30, 1
        %s661 = scalar_select %p660, %s30, 1
        %s662 = smul.addr %s661, 2
        %s663 = smul.addr %s662, 8
        %s664 = scalar_lea.vmem %s0, %s663
      $region104: #{clip_stage_adapter_forward.1} parent=99 // pred_fallthru
        _
      // Predicated region
      $region105: #{clip_stage_adapter_forward.1} parent=99 // pred_check
        %p665 = pneg %p76
      $region106: #{clip_stage_adapter_forward.1} parent=99 // pred_check_branch
        %667 = sbr.rel (%p665) target = $region108
      $region107: #{clip_stage_adapter_forward.1} parent=99 // pred_region
        %p668 = scmp.lt.s32.totalorder %s30, 1
        %s669 = scalar_select %p668, %s30, 1
        %s670 = smul.addr %s669, 2
        %s671 = smul.addr %s670, 8
        %s672 = scalar_lea.vmem %s1, %s671
      $region108: #{clip_stage_adapter_forward.1} parent=99 // pred_fallthru
        _
      // Predicated region
      $region109: #{clip_stage_adapter_forward.1} parent=99 // pred_check
        %p673 = pneg %p102
      $region110: #{clip_stage_adapter_forward.1} parent=99 // pred_check_branch
        %675 = sbr.rel (%p673) target = $region112
      $region111: #{clip_stage_adapter_forward.1} parent=99 // pred_region
        %p676 = scmp.lt.s32.totalorder %s30, 1
        %s677 = scalar_select %p676, %s30, 1
        %s678 = smul.addr %s677, 8
        %s679 = scalar_lea.vmem %s2, %s678
      $region112: #{clip_stage_adapter_forward.1} parent=99 // pred_fallthru
        _
    $region100: #{clip_stage_adapter_forward.1} parent=5 // pred_fallthru
      _
    %p680 = scmp.le.s32.totalorder 1, %s30
    %p681 = scmp.lt.s32.totalorder %s30, 3
    %p682 = pnand %p680, %p681
    %p683 = pneg %p682
    // Predicated region
    $region113: #{clip_stage_adapter_forward.1} parent=5 // pred_check
      _
    $region114: #{clip_stage_adapter_forward.1} parent=5 // pred_check_branch
      %685 = sbr.rel (%p682) target = $region116
    $region115: #{clip_stage_adapter_forward.1} parent=5 // pred_region
      %s686 = ssub.s32 %s30, 1
      %p687 = scmp.lt.s32.totalorder %s35, 1
      %s688 = scalar_select %p687, %s35, 1
      %s689 = smul.addr %s688, 2
      %s690 = smul.addr %s689, 8
      %s691 = scalar_lea.vmem %s0, %s690
      %p692 = pneg %p56
      %p693 = pneg %p53
      %p694 = scmp.lt.s32.totalorder %s35, 1
      %s695 = scalar_select %p694, %s35, 1
      %s696 = smul.addr %s695, 2
      %s697 = smul.addr %s696, 8
      %s698 = scalar_lea.vmem %s1, %s697
      %p699 = pneg %p82
      %p700 = pneg %p79
      %p701 = scmp.lt.s32.totalorder %s35, 1
      %s702 = scalar_select %p701, %s35, 1
      %s703 = smul.addr %s702, 8
      %s704 = scalar_lea.vmem %s2, %s703
      %p705 = pneg %p108
      %p706 = pneg %p105
      %p707 = pneg %p129
      %p708 = pneg %p126
      %p709 = pneg %p150
      %p710 = pneg %p147
      %p711 = pneg %p171
      %p712 = pneg %p168
      %p713 = pneg %p192
      %p714 = pneg %p189
      %p715 = pneg %p213
      %p716 = pneg %p210
      %p717 = pneg %p234
      %p718 = pneg %p231
      %p719 = pneg %p255
      %p720 = pneg %p252
      %p721 = pneg %p276
      %p722 = pneg %p273
      %p723 = pneg %p297
      %p724 = pneg %p294
      %p725 = pneg %p318
      %p726 = pneg %p315
      %p727 = pneg %p339
      %p728 = pneg %p336
      %p729 = pneg %p360
      %p730 = pneg %p357
      %p731 = pneg %p381
      %p732 = pneg %p378
      %p733 = pneg %p402
      %p734 = pneg %p399
      %p735 = pneg %p423
      %p736 = pneg %p420
      %p737 = pneg %p444
      %p738 = pneg %p441
      %p739 = pneg %p465
      %p740 = pneg %p462
      %p741 = pneg %p486
      %p742 = pneg %p483
      %p743 = pneg %p507
      %p744 = pneg %p504
      %p745 = pneg %p528
      %p746 = pneg %p525
      %p747 = pneg %p549
      %p748 = pneg %p546
      %p749 = pneg %p575
      %p750 = pneg %p572
      %p751 = scmp.lt.s32.totalorder %s35, 1
      %s752 = scalar_select %p751, %s35, 1
      %s753 = smul.addr %s752, 2
      %s754 = smul.addr %s753, 8
      %s755 = scalar_lea.vmem %s24, %s754
      %p756 = scmp.lt.s32.totalorder %s35, 1
      %s757 = scalar_select %p756, %s35, 1
      %s758 = smul.addr %s757, 2
      %s759 = smul.addr %s758, 8
      %s760 = scalar_lea.vmem %s0, %s759
      %p761 = scmp.lt.s32.totalorder %s35, 1
      %s762 = scalar_select %p761, %s35, 1
      %s763 = smul.addr %s762, 2
      %s764 = smul.addr %s763, 8
      %s765 = scalar_lea.vmem %s1, %s764
      %p766 = scmp.lt.s32.totalorder %s35, 1
      %s767 = scalar_select %p766, %s35, 1
      %s768 = smul.addr %s767, 8
      %s769 = scalar_lea.vmem %s2, %s768
      %p770 = scmp.lt.s32.totalorder %s35, 1
      %s771 = scalar_select %p770, %s35, 1
      %s772 = smul.addr %s771, 2
      %s773 = smul.addr %s772, 8
      %s774 = scalar_lea.vmem %s24, %s773
      %v775 = vld [vmem:[%s760] sm:$0xff]
      %v776 = vld [vmem:[%s760 + $0x8] sm:$0xff]
      %v777 = vld [vmem:[%s765] sm:$0xff]
      %v778 = vld [vmem:[%s765 + $0x8] sm:$0xff]
      %v779 = vld [vmem:[%s769] sm:$0xff]
      %v780 = vsub.f32 %v779, 1.0
      %v781 = vmul.f32 %v780, 1e+30
      %v782 = vld [vmem:[%s3] sm:$0xff]
      %v783 = vld [vmem:[%s3 + $0x8] sm:$0xff]
      %v784 = vld [vmem:[%s3 + $0x10] sm:$0xff]
      %v785 = vld [vmem:[%s3 + $0x18] sm:$0xff]
      %v786 = vld [vmem:[%s3 + $0x20] sm:$0xff]
      %v787 = vld [vmem:[%s3 + $0x28] sm:$0xff]
      %v788 = vld [vmem:[%s3 + $0x30] sm:$0xff]
      %v789 = vld [vmem:[%s3 + $0x38] sm:$0xff]
      %v790 = vld [vmem:[%s3 + $0x40] sm:$0xff]
      %v791 = vld [vmem:[%s3 + $0x48] sm:$0xff]
      %v792 = vld [vmem:[%s3 + $0x50] sm:$0xff]
      %v793 = vld [vmem:[%s3 + $0x58] sm:$0xff]
      %v794 = vld [vmem:[%s4] sm:$0xff]
      %v795 = vld [vmem:[%s4 + $0x8] sm:$0xff]
      %v796 = vld [vmem:[%s4 + $0x10] sm:$0xff]
      %v797 = vld [vmem:[%s4 + $0x18] sm:$0xff]
      %v798 = vld [vmem:[%s4 + $0x20] sm:$0xff]
      %v799 = vld [vmem:[%s4 + $0x28] sm:$0xff]
      %v800 = vld [vmem:[%s4 + $0x30] sm:$0xff]
      %v801 = vld [vmem:[%s4 + $0x38] sm:$0xff]
      %v802 = vld [vmem:[%s4 + $0x40] sm:$0xff]
      %v803 = vld [vmem:[%s4 + $0x48] sm:$0xff]
      %v804 = vld [vmem:[%s4 + $0x50] sm:$0xff]
      %v805 = vld [vmem:[%s4 + $0x58] sm:$0xff]
      %807 = vset.pattern.permute.xlu0 0
      %808 = vperm.xlu0 %807, %v794
      %v809 = vpop.permute.xlu0 %808
      %812 = vset.pattern.permute.xlu0 0
      %813 = vperm.xlu0 %812, %v795
      %v814 = vpop.permute.xlu0 %813
      %817 = vset.pattern.permute.xlu0 0
      %818 = vperm.xlu0 %817, %v796
      %v819 = vpop.permute.xlu0 %818
      %822 = vset.pattern.permute.xlu0 0
      %823 = vperm.xlu0 %822, %v797
      %v824 = vpop.permute.xlu0 %823
      %827 = vset.pattern.permute.xlu0 0
      %828 = vperm.xlu0 %827, %v798
      %v829 = vpop.permute.xlu0 %828
      %832 = vset.pattern.permute.xlu0 0
      %833 = vperm.xlu0 %832, %v799
      %v834 = vpop.permute.xlu0 %833
      %837 = vset.pattern.permute.xlu0 0
      %838 = vperm.xlu0 %837, %v800
      %v839 = vpop.permute.xlu0 %838
      %842 = vset.pattern.permute.xlu0 0
      %843 = vperm.xlu0 %842, %v801
      %v844 = vpop.permute.xlu0 %843
      %847 = vset.pattern.permute.xlu0 0
      %848 = vperm.xlu0 %847, %v802
      %v849 = vpop.permute.xlu0 %848
      %852 = vset.pattern.permute.xlu0 0
      %853 = vperm.xlu0 %852, %v803
      %v854 = vpop.permute.xlu0 %853
      %857 = vset.pattern.permute.xlu0 0
      %858 = vperm.xlu0 %857, %v804
      %v859 = vpop.permute.xlu0 %858
      %862 = vset.pattern.permute.xlu0 0
      %863 = vperm.xlu0 %862, %v805
      %v864 = vpop.permute.xlu0 %863
      %vm866 = vcmask 64512
      %v868 = vsel %vm866, %v782, 0
      %v871 = vsel %vm866, %v783, 0
      %v874 = vsel %vm866, %v784, 0
      %v877 = vsel %vm866, %v785, 0
      %v880 = vsel %vm866, %v786, 0
      %v883 = vsel %vm866, %v787, 0
      %v886 = vsel %vm866, %v788, 0
      %v889 = vsel %vm866, %v789, 0
      %v892 = vsel %vm866, %v790, 0
      %v895 = vsel %vm866, %v791, 0
      %v898 = vsel %vm866, %v792, 0
      %v901 = vsel %vm866, %v793, 0
      %903 = vmatprep.subr.mxu0 %v776
      %904 = vmatpush1.msra.mxu0 %v775
      %905 = vmatprep.subr.mxu0 0.0
      %906 = vmatpush1.msra.mxu0 0.0
      %907 = vmatprep.subr.mxu0 0.0
      %908 = vmatpush1.msra.mxu0 0.0
      %909 = vmatprep.subr.mxu0 0.0
      %910 = vmatpush1.msra.mxu0 0.0
      %911 = vmatprep.subr.mxu0 0.0
      %912 = vmatpush1.msra.mxu0 0.0
      %913 = vmatprep.subr.mxu0 0.0
      %914 = vmatpush1.msra.mxu0 0.0
      %915 = vmatprep.subr.mxu0 0.0
      %916 = vmatpush1.msra.mxu0 0.0
      %917 = vmatprep.subr.mxu0 0.0
      %918 = vmatpush1.msra.mxu0 0.0
      %919 = vmatprep.subr.mxu0 0.0
      %920 = vmatpush1.msra.mxu0 0.0
      %921 = vmatprep.subr.mxu0 0.0
      %922 = vmatpush1.msra.mxu0 0.0
      %923 = vmatprep.subr.mxu0 0.0
      %924 = vmatpush1.msra.mxu0 0.0
      %925 = vmatprep.subr.mxu0 0.0
      %926 = vmatpush1.msra.mxu0 0.0
      %927 = vmatprep.subr.mxu0 0.0
      %928 = vmatpush1.msra.mxu0 0.0
      %929 = vmatprep.subr.mxu0 0.0
      %930 = vmatpush1.msra.mxu0 0.0
      %931 = vmatprep.subr.mxu0 0.0
      %932 = vmatpush1.msra.mxu0 0.0
      %933 = vmatprep.subr.mxu0 0.0
      %934 = vmatpush1.msra.mxu0 0.0
      %935 = vmatprep.subr.mxu0 0.0
      %936 = vmatpush1.msra.mxu0 0.0
      %937 = vmatprep.subr.mxu0 0.0
      %938 = vmatpush1.msra.mxu0 0.0
      %939 = vmatprep.subr.mxu0 0.0
      %940 = vmatpush1.msra.mxu0 0.0
      %941 = vmatprep.subr.mxu0 0.0
      %942 = vmatpush1.msra.mxu0 0.0
      %943 = vmatprep.subr.mxu0 0.0
      %944 = vmatpush1.msra.mxu0 0.0
      %945 = vmatprep.subr.mxu0 0.0
      %946 = vmatpush1.msra.mxu0 0.0
      %947 = vmatprep.subr.mxu0 0.0
      %948 = vmatpush1.msra.mxu0 0.0
      %949 = vmatprep.subr.mxu0 0.0
      %950 = vmatpush1.msra.mxu0 0.0
      %951 = vmatprep.subr.mxu0 0.0
      %952 = vmatpush1.msra.mxu0 0.0
      %953 = vmatprep.subr.mxu0 0.0
      %954 = vmatpush1.msra.mxu0 0.0
      %955 = vmatprep.subr.mxu0 0.0
      %956 = vmatpush1.msra.mxu0 0.0
      %957 = vmatprep.subr.mxu0 0.0
      %958 = vmatpush1.msra.mxu0 0.0
      %959 = vmatprep.subr.mxu0 0.0
      %960 = vmatpush1.msra.mxu0 0.0
      %961 = vmatprep.subr.mxu0 0.0
      %962 = vmatpush1.msra.mxu0 0.0
      %963 = vmatprep.subr.mxu0 0.0
      %964 = vmatpush1.msra.mxu0 0.0
      %965 = vmatprep.subr.mxu0 0.0
      %966 = vmatpush1.msra.mxu0 0.0
      %967 = vmatprep.mubr.f32.mxu0 0.0
      %968 = vmatmul.mubr.f32.gmra.mrb[0].mxu0 %v868
      %v969 = vpop.f32.mrb[0].mxu0
      %v970 = vadd.f32 %v809, %v969
      %v971 = vpop.f32.mrb[0].mxu0
      %v972 = vadd.f32 %v809, %v971
      %973 = vmatprep.mubr.f32.mxu0 0.0
      %974 = vmatmul.mubr.f32.gmra.mrb[0].mxu0 %v871
      %v975 = vpop.f32.mrb[0].mxu0
      %v976 = vadd.f32 %v814, %v975
      %v977 = vpop.f32.mrb[0].mxu0
      %v978 = vadd.f32 %v814, %v977
      %979 = vmatprep.mubr.f32.mxu0 0.0
      %980 = vmatmul.mubr.f32.gmra.mrb[0].mxu0 %v874
      %v981 = vpop.f32.mrb[0].mxu0
      %v982 = vadd.f32 %v819, %v981
      %v983 = vpop.f32.mrb[0].mxu0
      %v984 = vadd.f32 %v819, %v983
      %985 = vmatprep.mubr.f32.mxu0 0.0
      %986 = vmatmul.mubr.f32.gmra.mrb[0].mxu0 %v877
      %v987 = vpop.f32.mrb[0].mxu0
      %v988 = vadd.f32 %v824, %v987
      %v989 = vpop.f32.mrb[0].mxu0
      %v990 = vadd.f32 %v824, %v989
      %991 = vmatprep.mubr.f32.mxu0 0.0
      %992 = vmatmul.mubr.f32.gmra.mrb[0].mxu0 %v880
      %v993 = vpop.f32.mrb[0].mxu0
      %v994 = vadd.f32 %v829, %v993
      %v995 = vpop.f32.mrb[0].mxu0
      %v996 = vadd.f32 %v829, %v995
      %997 = vmatprep.mubr.f32.mxu0 0.0
      %998 = vmatmul.mubr.f32.gmra.mrb[0].mxu0 %v883
      %v999 = vpop.f32.mrb[0].mxu0
      %v1000 = vadd.f32 %v834, %v999
      %v1001 = vpop.f32.mrb[0].mxu0
      %v1002 = vadd.f32 %v834, %v1001
      %1003 = vmatprep.mubr.f32.mxu0 0.0
      %1004 = vmatmul.mubr.f32.gmra.mrb[0].mxu0 %v886
      %v1005 = vpop.f32.mrb[0].mxu0
      %v1006 = vadd.f32 %v839, %v1005
      %v1007 = vpop.f32.mrb[0].mxu0
      %v1008 = vadd.f32 %v839, %v1007
      %1009 = vmatprep.mubr.f32.mxu0 0.0
      %1010 = vmatmul.mubr.f32.gmra.mrb[0].mxu0 %v889
      %v1011 = vpop.f32.mrb[0].mxu0
      %v1012 = vadd.f32 %v844, %v1011
      %v1013 = vpop.f32.mrb[0].mxu0
      %v1014 = vadd.f32 %v844, %v1013
      %1015 = vmatprep.mubr.f32.mxu0 0.0
      %1016 = vmatmul.mubr.f32.gmra.mrb[0].mxu0 %v892
      %v1017 = vpop.f32.mrb[0].mxu0
      %v1018 = vadd.f32 %v849, %v1017
      %v1019 = vpop.f32.mrb[0].mxu0
      %v1020 = vadd.f32 %v849, %v1019
      %1021 = vmatprep.mubr.f32.mxu0 0.0
      %1022 = vmatmul.mubr.f32.gmra.mrb[0].mxu0 %v895
      %v1023 = vpop.f32.mrb[0].mxu0
      %v1024 = vadd.f32 %v854, %v1023
      %v1025 = vpop.f32.mrb[0].mxu0
      %v1026 = vadd.f32 %v854, %v1025
      %1027 = vmatprep.mubr.f32.mxu0 0.0
      %1028 = vmatmul.mubr.f32.gmra.mrb[0].mxu0 %v898
      %v1029 = vpop.f32.mrb[0].mxu0
      %v1030 = vadd.f32 %v859, %v1029
      %v1031 = vpop.f32.mrb[0].mxu0
      %v1032 = vadd.f32 %v859, %v1031
      %1033 = vmatprep.mubr.f32.mxu0 0.0
      %1034 = vmatmul.mubr.f32.gmra.mrb[0].mxu0 %v901
      %v1035 = vpop.f32.mrb[0].mxu0
      %v1036 = vadd.f32 %v864, %v1035
      %v1037 = vpop.f32.mrb[0].mxu0
      %v1038 = vadd.f32 %v864, %v1037
      %1039 = vdwg.mxu0
      %v1040 = vmax.f32 %v970, 0.0
      %v1041 = vmax.f32 %v972, 0.0
      %v1042 = vmax.f32 %v976, 0.0
      %v1043 = vmax.f32 %v978, 0.0
      %v1044 = vmax.f32 %v982, 0.0
      %v1045 = vmax.f32 %v984, 0.0
      %v1046 = vmax.f32 %v988, 0.0
      %v1047 = vmax.f32 %v990, 0.0
      %v1048 = vld [vmem:[%s9] sm:$0xff]
      %v1049 = vld [vmem:[%s9 + $0x8] sm:$0xff]
      %v1050 = vld [vmem:[%s9 + $0x10] sm:$0xff]
      %v1051 = vld [vmem:[%s9 + $0x18] sm:$0xff]
      %v1052 = vld [vmem:[%s9 + $0x20] sm:$0xff]
      %v1053 = vld [vmem:[%s9 + $0x28] sm:$0xff]
      %v1054 = vld [vmem:[%s9 + $0x30] sm:$0xff]
      %v1055 = vld [vmem:[%s9 + $0x38] sm:$0xff]
      %v1056 = vadd.f32 %v1018, %v1048
      %v1057 = vadd.f32 %v1020, %v1049
      %v1058 = vadd.f32 %v1024, %v1050
      %v1059 = vadd.f32 %v1026, %v1051
      %v1060 = vadd.f32 %v1030, %v1052
      %v1061 = vadd.f32 %v1032, %v1053
      %v1062 = vadd.f32 %v1036, %v1054
      %v1063 = vadd.f32 %v1038, %v1055
      %v1064 = vld [vmem:[%s5] sm:$0xff]
      %v1065 = vld [vmem:[%s6] sm:$0xff]
      %1067 = vset.pattern.permute.xlu0 0
      %1068 = vperm.xlu0 %1067, %v1065
      %v1069 = vpop.permute.xlu0 %1068
      %vm1071 = vcmask 261120
      %v1073 = vsel %vm1071, %v1064, 0
      %1075 = vmatprep.subr.mxu0 %v1041
      %1076 = vmatpush1.msra.mxu0 %v1040
      %1077 = vmatprep.subr.mxu0 %v1043
      %1078 = vmatpush1.msra.mxu0 %v1042
      %1079 = vmatprep.subr.mxu0 %v1045
      %1080 = vmatpush1.msra.mxu0 %v1044
      %1081 = vmatprep.subr.mxu0 %v1047
      %1082 = vmatpush1.msra.mxu0 %v1046
      %1083 = vmatprep.subr.mxu0 0.0
      %1084 = vmatpush1.msra.mxu0 0.0
      %1085 = vmatprep.subr.mxu0 0.0
      %1086 = vmatpush1.msra.mxu0 0.0
      %1087 = vmatprep.subr.mxu0 0.0
      %1088 = vmatpush1.msra.mxu0 0.0
      %1089 = vmatprep.subr.mxu0 0.0
      %1090 = vmatpush1.msra.mxu0 0.0
      %1091 = vmatprep.subr.mxu0 0.0
      %1092 = vmatpush1.msra.mxu0 0.0
      %1093 = vmatprep.subr.mxu0 0.0
      %1094 = vmatpush1.msra.mxu0 0.0
      %1095 = vmatprep.subr.mxu0 0.0
      %1096 = vmatpush1.msra.mxu0 0.0
      %1097 = vmatprep.subr.mxu0 0.0
      %1098 = vmatpush1.msra.mxu0 0.0
      %1099 = vmatprep.subr.mxu0 0.0
      %1100 = vmatpush1.msra.mxu0 0.0
      %1101 = vmatprep.subr.mxu0 0.0
      %1102 = vmatpush1.msra.mxu0 0.0
      %1103 = vmatprep.subr.mxu0 0.0
      %1104 = vmatpush1.msra.mxu0 0.0
      %1105 = vmatprep.subr.mxu0 0.0
      %1106 = vmatpush1.msra.mxu0 0.0
      %1107 = vmatprep.subr.mxu0 0.0
      %1108 = vmatpush1.msra.mxu0 0.0
      %1109 = vmatprep.subr.mxu0 0.0
      %1110 = vmatpush1.msra.mxu0 0.0
      %1111 = vmatprep.subr.mxu0 0.0
      %1112 = vmatpush1.msra.mxu0 0.0
      %1113 = vmatprep.subr.mxu0 0.0
      %1114 = vmatpush1.msra.mxu0 0.0
      %1115 = vmatprep.subr.mxu0 0.0
      %1116 = vmatpush1.msra.mxu0 0.0
      %1117 = vmatprep.subr.mxu0 0.0
      %1118 = vmatpush1.msra.mxu0 0.0
      %1119 = vmatprep.subr.mxu0 0.0
      %1120 = vmatpush1.msra.mxu0 0.0
      %1121 = vmatprep.subr.mxu0 0.0
      %1122 = vmatpush1.msra.mxu0 0.0
      %1123 = vmatprep.subr.mxu0 0.0
      %1124 = vmatpush1.msra.mxu0 0.0
      %1125 = vmatprep.subr.mxu0 0.0
      %1126 = vmatpush1.msra.mxu0 0.0
      %1127 = vmatprep.subr.mxu0 0.0
      %1128 = vmatpush1.msra.mxu0 0.0
      %1129 = vmatprep.subr.mxu0 0.0
      %1130 = vmatpush1.msra.mxu0 0.0
      %1131 = vmatprep.subr.mxu0 0.0
      %1132 = vmatpush1.msra.mxu0 0.0
      %1133 = vmatprep.subr.mxu0 0.0
      %1134 = vmatpush1.msra.mxu0 0.0
      %1135 = vmatprep.subr.mxu0 0.0
      %1136 = vmatpush1.msra.mxu0 0.0
      %1137 = vmatprep.subr.mxu0 0.0
      %1138 = vmatpush1.msra.mxu0 0.0
      %1139 = vmatprep.mubr.f32.mxu0 0.0
      %1140 = vmatmul.mubr.f32.gmra.mrb[0].mxu0 %v1073
      %v1141 = vpop.f32.mrb[0].mxu0
      %v1142 = vadd.f32 %v1069, %v1141
      %v1143 = vpop.f32.mrb[0].mxu0
      %v1144 = vadd.f32 %v1069, %v1143
      %1145 = vdwg.mxu0
      %v1146 = vmax.f32 %v1142, 0.0
      %v1147 = vmax.f32 %v1144, 0.0
      %v1148 = vld [vmem:[%s7] sm:$0xff]
      %v1149 = vld [vmem:[%s7 + $0x8] sm:$0xff]
      %v1150 = vld [vmem:[%s7 + $0x10] sm:$0xff]
      %v1151 = vld [vmem:[%s7 + $0x18] sm:$0xff]
      %v1152 = vld [vmem:[%s7 + $0x20] sm:$0xff]
      %v1153 = vld [vmem:[%s7 + $0x28] sm:$0xff]
      %v1154 = vld [vmem:[%s7 + $0x30] sm:$0xff]
      %v1155 = vld [vmem:[%s7 + $0x38] sm:$0xff]
      %v1156 = vld [vmem:[%s8] sm:$0xff]
      %v1157 = vld [vmem:[%s8 + $0x8] sm:$0xff]
      %v1158 = vld [vmem:[%s8 + $0x10] sm:$0xff]
      %v1159 = vld [vmem:[%s8 + $0x18] sm:$0xff]
      %v1160 = vld [vmem:[%s8 + $0x20] sm:$0xff]
      %v1161 = vld [vmem:[%s8 + $0x28] sm:$0xff]
      %v1162 = vld [vmem:[%s8 + $0x30] sm:$0xff]
      %v1163 = vld [vmem:[%s8 + $0x38] sm:$0xff]
      %vm1164 = vcmask 130048
      %v1166 = vsel %vm1164, %v1148, 0
      %v1169 = vsel %vm1164, %v1149, 0
      %v1172 = vsel %vm1164, %v1150, 0
      %v1175 = vsel %vm1164, %v1151, 0
      %v1178 = vsel %vm1164, %v1152, 0
      %v1181 = vsel %vm1164, %v1153, 0
      %v1184 = vsel %vm1164, %v1154, 0
      %v1187 = vsel %vm1164, %v1155, 0
      %1189 = vmatprep.subr.mxu0 0.0
      %1190 = vmatpush1.msra.mxu0 %v777
      %1191 = vmatprep.subr.mxu0 0.0
      %1192 = vmatpush1.msra.mxu0 %v778
      %1193 = vmatprep.subr.mxu0 0.0
      %1194 = vmatpush1.msra.mxu0 0.0
      %1195 = vmatprep.subr.mxu0 0.0
      %1196 = vmatpush1.msra.mxu0 0.0
      %1197 = vmatprep.subr.mxu0 0.0
      %1198 = vmatpush1.msra.mxu0 0.0
      %1199 = vmatprep.subr.mxu0 0.0
      %1200 = vmatpush1.msra.mxu0 0.0
      %1201 = vmatprep.subr.mxu0 0.0
      %1202 = vmatpush1.msra.mxu0 0.0
      %1203 = vmatprep.subr.mxu0 0.0
      %1204 = vmatpush1.msra.mxu0 0.0
      %1205 = vmatprep.subr.mxu0 0.0
      %1206 = vmatpush1.msra.mxu0 0.0
      %1207 = vmatprep.subr.mxu0 0.0
      %1208 = vmatpush1.msra.mxu0 0.0
      %1209 = vmatprep.subr.mxu0 0.0
      %1210 = vmatpush1.msra.mxu0 0.0
      %1211 = vmatprep.subr.mxu0 0.0
      %1212 = vmatpush1.msra.mxu0 0.0
      %1213 = vmatprep.subr.mxu0 0.0
      %1214 = vmatpush1.msra.mxu0 0.0
      %1215 = vmatprep.subr.mxu0 0.0
      %1216 = vmatpush1.msra.mxu0 0.0
      %1217 = vmatprep.subr.mxu0 0.0
      %1218 = vmatpush1.msra.mxu0 0.0
      %1219 = vmatprep.subr.mxu0 0.0
      %1220 = vmatpush1.msra.mxu0 0.0
      %1221 = vmatprep.subr.mxu0 0.0
      %1222 = vmatpush1.msra.mxu0 0.0
      %1223 = vmatprep.subr.mxu0 0.0
      %1224 = vmatpush1.msra.mxu0 0.0
      %1225 = vmatprep.subr.mxu0 0.0
      %1226 = vmatpush1.msra.mxu0 0.0
      %1227 = vmatprep.subr.mxu0 0.0
      %1228 = vmatpush1.msra.mxu0 0.0
      %1229 = vmatprep.subr.mxu0 0.0
      %1230 = vmatpush1.msra.mxu0 0.0
      %1231 = vmatprep.subr.mxu0 0.0
      %1232 = vmatpush1.msra.mxu0 0.0
      %1233 = vmatprep.subr.mxu0 0.0
      %1234 = vmatpush1.msra.mxu0 0.0
      %1235 = vmatprep.subr.mxu0 0.0
      %1236 = vmatpush1.msra.mxu0 0.0
      %1237 = vmatprep.subr.mxu0 0.0
      %1238 = vmatpush1.msra.mxu0 0.0
      %1239 = vmatprep.subr.mxu0 0.0
      %1240 = vmatpush1.msra.mxu0 0.0
      %1241 = vmatprep.subr.mxu0 0.0
      %1242 = vmatpush1.msra.mxu0 0.0
      %1243 = vmatprep.subr.mxu0 0.0
      %1244 = vmatpush1.msra.mxu0 0.0
      %1245 = vmatprep.subr.mxu0 0.0
      %1246 = vmatpush1.msra.mxu0 0.0
      %1247 = vmatprep.subr.mxu0 0.0
      %1248 = vmatpush1.msra.mxu0 0.0
      %1249 = vmatprep.subr.mxu0 0.0
      %1250 = vmatpush1.msra.mxu0 0.0
      %1251 = vmatprep.subr.mxu0 0.0
      %1252 = vmatpush1.msra.mxu0 0.0
      %1253 = vmatprep.mubr.f32.mxu0 0.0
      %1254 = vmatmul.mubr.f32.gmra.mrb[0].mxu0 %v1166
      %v1255 = vpop.f32.mrb[0].mxu0
      %v1256 = vadd.f32 %v1156, %v1255
      %v1257 = vpop.f32.mrb[0].mxu0
      %1258 = vmatprep.mubr.f32.mxu0 0.0
      %1259 = vmatmul.mubr.f32.gmra.mrb[0].mxu0 %v1169
      %v1260 = vpop.f32.mrb[0].mxu0
      %v1261 = vadd.f32 %v1157, %v1260
      %v1262 = vpop.f32.mrb[0].mxu0
      %1263 = vmatprep.mubr.f32.mxu0 0.0
      %1264 = vmatmul.mubr.f32.gmra.mrb[0].mxu0 %v1172
      %v1265 = vpop.f32.mrb[0].mxu0
      %v1266 = vadd.f32 %v1158, %v1265
      %v1267 = vpop.f32.mrb[0].mxu0
      %1268 = vmatprep.mubr.f32.mxu0 0.0
      %1269 = vmatmul.mubr.f32.gmra.mrb[0].mxu0 %v1175
      %v1270 = vpop.f32.mrb[0].mxu0
      %v1271 = vadd.f32 %v1159, %v1270
      %v1272 = vpop.f32.mrb[0].mxu0
      %1273 = vmatprep.mubr.f32.mxu0 0.0
      %1274 = vmatmul.mubr.f32.gmra.mrb[0].mxu0 %v1178
      %v1275 = vpop.f32.mrb[0].mxu0
      %v1276 = vadd.f32 %v1160, %v1275
      %v1277 = vpop.f32.mrb[0].mxu0
      %1278 = vmatprep.mubr.f32.mxu0 0.0
      %1279 = vmatmul.mubr.f32.gmra.mrb[0].mxu0 %v1181
      %v1280 = vpop.f32.mrb[0].mxu0
      %v1281 = vadd.f32 %v1161, %v1280
      %v1282 = vpop.f32.mrb[0].mxu0
      %1283 = vmatprep.mubr.f32.mxu0 0.0
      %1284 = vmatmul.mubr.f32.gmra.mrb[0].mxu0 %v1184
      %v1285 = vpop.f32.mrb[0].mxu0
      %v1286 = vadd.f32 %v1162, %v1285
      %v1287 = vpop.f32.mrb[0].mxu0
      %1288 = vmatprep.mubr.f32.mxu0 0.0
      %1289 = vmatmul.mubr.f32.gmra.mrb[0].mxu0 %v1187
      %v1290 = vpop.f32.mrb[0].mxu0
      %v1291 = vadd.f32 %v1163, %v1290
      %v1292 = vpop.f32.mrb[0].mxu0
      %1293 = vdwg.mxu0
      %v1294 = vld [vmem:[%s10] sm:$0xff]
      %v1296 = vsel %vm866, %v1256, 0
      %v1299 = vsel %vm866, %v1261, 0
      %v1302 = vsel %vm866, %v1266, 0
      %v1305 = vsel %vm866, %v1271, 0
      %v1308 = vsel %vm866, %v1276, 0
      %v1311 = vsel %vm866, %v1281, 0
      %v1314 = vsel %vm866, %v1286, 0
      %v1317 = vsel %vm866, %v1291, 0
      %1319 = vmatprep.subr.mxu0 0.0
      %1320 = vmatpush1.msra.mxu0 %v1294
      %1321 = vmatprep.subr.mxu0 0.0
      %1322 = vmatpush1.msra.mxu0 0.0
      %1323 = vmatprep.subr.mxu0 0.0
      %1324 = vmatpush1.msra.mxu0 0.0
      %1325 = vmatprep.subr.mxu0 0.0
      %1326 = vmatpush1.msra.mxu0 0.0
      %1327 = vmatprep.subr.mxu0 0.0
      %1328 = vmatpush1.msra.mxu0 0.0
      %1329 = vmatprep.subr.mxu0 0.0
      %1330 = vmatpush1.msra.mxu0 0.0
      %1331 = vmatprep.subr.mxu0 0.0
      %1332 = vmatpush1.msra.mxu0 0.0
      %1333 = vmatprep.subr.mxu0 0.0
      %1334 = vmatpush1.msra.mxu0 0.0
      %1335 = vmatprep.subr.mxu0 0.0
      %1336 = vmatpush1.msra.mxu0 0.0
      %1337 = vmatprep.subr.mxu0 0.0
      %1338 = vmatpush1.msra.mxu0 0.0
      %1339 = vmatprep.subr.mxu0 0.0
      %1340 = vmatpush1.msra.mxu0 0.0
      %1341 = vmatprep.subr.mxu0 0.0
      %1342 = vmatpush1.msra.mxu0 0.0
      %1343 = vmatprep.subr.mxu0 0.0
      %1344 = vmatpush1.msra.mxu0 0.0
      %1345 = vmatprep.subr.mxu0 0.0
      %1346 = vmatpush1.msra.mxu0 0.0
      %1347 = vmatprep.subr.mxu0 0.0
      %1348 = vmatpush1.msra.mxu0 0.0
      %1349 = vmatprep.subr.mxu0 0.0
      %1350 = vmatpush1.msra.mxu0 0.0
      %1351 = vmatprep.subr.mxu0 0.0
      %1352 = vmatpush1.msra.mxu0 0.0
      %1353 = vmatprep.subr.mxu0 0.0
      %1354 = vmatpush1.msra.mxu0 0.0
      %1355 = vmatprep.subr.mxu0 0.0
      %1356 = vmatpush1.msra.mxu0 0.0
      %1357 = vmatprep.subr.mxu0 0.0
      %1358 = vmatpush1.msra.mxu0 0.0
      %1359 = vmatprep.subr.mxu0 0.0
      %1360 = vmatpush1.msra.mxu0 0.0
      %1361 = vmatprep.subr.mxu0 0.0
      %1362 = vmatpush1.msra.mxu0 0.0
      %1363 = vmatprep.subr.mxu0 0.0
      %1364 = vmatpush1.msra.mxu0 0.0
      %1365 = vmatprep.subr.mxu0 0.0
      %1366 = vmatpush1.msra.mxu0 0.0
      %1367 = vmatprep.subr.mxu0 0.0
      %1368 = vmatpush1.msra.mxu0 0.0
      %1369 = vmatprep.subr.mxu0 0.0
      %1370 = vmatpush1.msra.mxu0 0.0
      %1371 = vmatprep.subr.mxu0 0.0
      %1372 = vmatpush1.msra.mxu0 0.0
      %1373 = vmatprep.subr.mxu0 0.0
      %1374 = vmatpush1.msra.mxu0 0.0
      %1375 = vmatprep.subr.mxu0 0.0
      %1376 = vmatpush1.msra.mxu0 0.0
      %1377 = vmatprep.subr.mxu0 0.0
      %1378 = vmatpush1.msra.mxu0 0.0
      %1379 = vmatprep.subr.mxu0 0.0
      %1380 = vmatpush1.msra.mxu0 0.0
      %1381 = vmatprep.subr.mxu0 0.0
      %1382 = vmatpush1.msra.mxu0 0.0
      %1383 = vmatprep.mubr.f32.mxu0 0.0
      %1384 = vmatmul.mubr.f32.gmra.mrb[0].mxu0 %v1296
      %v1385 = vpop.f32.mrb[0].mxu0
      %v1386 = vadd.f32 0.0, %v1385
      %v1387 = vpop.f32.mrb[0].mxu0
      %1388 = vmatprep.mubr.f32.mxu0 0.0
      %1389 = vmatmul.mubr.f32.gmra.mrb[0].mxu0 %v1299
      %v1390 = vpop.f32.mrb[0].mxu0
      %v1391 = vadd.f32 0.0, %v1390
      %v1392 = vpop.f32.mrb[0].mxu0
      %1393 = vmatprep.mubr.f32.mxu0 0.0
      %1394 = vmatmul.mubr.f32.gmra.mrb[0].mxu0 %v1302
      %v1395 = vpop.f32.mrb[0].mxu0
      %v1396 = vadd.f32 0.0, %v1395
      %v1397 = vpop.f32.mrb[0].mxu0
      %1398 = vmatprep.mubr.f32.mxu0 0.0
      %1399 = vmatmul.mubr.f32.gmra.mrb[0].mxu0 %v1305
      %v1400 = vpop.f32.mrb[0].mxu0
      %v1401 = vadd.f32 0.0, %v1400
      %v1402 = vpop.f32.mrb[0].mxu0
      %1403 = vmatprep.mubr.f32.mxu0 0.0
      %1404 = vmatmul.mubr.f32.gmra.mrb[0].mxu0 %v1308
      %v1405 = vpop.f32.mrb[0].mxu0
      %v1406 = vadd.f32 0.0, %v1405
      %v1407 = vpop.f32.mrb[0].mxu0
      %1408 = vmatprep.mubr.f32.mxu0 0.0
      %1409 = vmatmul.mubr.f32.gmra.mrb[0].mxu0 %v1311
      %v1410 = vpop.f32.mrb[0].mxu0
      %v1411 = vadd.f32 0.0, %v1410
      %v1412 = vpop.f32.mrb[0].mxu0
      %1413 = vmatprep.mubr.f32.mxu0 0.0
      %1414 = vmatmul.mubr.f32.gmra.mrb[0].mxu0 %v1314
      %v1415 = vpop.f32.mrb[0].mxu0
      %v1416 = vadd.f32 0.0, %v1415
      %v1417 = vpop.f32.mrb[0].mxu0
      %1418 = vmatprep.mubr.f32.mxu0 0.0
      %1419 = vmatmul.mubr.f32.gmra.mrb[0].mxu0 %v1317
      %v1420 = vpop.f32.mrb[0].mxu0
      %v1421 = vadd.f32 0.0, %v1420
      %v1422 = vpop.f32.mrb[0].mxu0
      %1423 = vdwg.mxu0
      %v1424 = vld [vmem:[%s11] sm:$0xff]
      %v1425 = vld [vmem:[%s11 + $0x8] sm:$0xff]
      %v1426 = vld [vmem:[%s11 + $0x10] sm:$0xff]
      %v1427 = vld [vmem:[%s11 + $0x18] sm:$0xff]
      %v1428 = vld [vmem:[%s11 + $0x20] sm:$0xff]
      %v1429 = vld [vmem:[%s11 + $0x28] sm:$0xff]
      %v1430 = vld [vmem:[%s11 + $0x30] sm:$0xff]
      %v1431 = vld [vmem:[%s11 + $0x38] sm:$0xff]
      %v1432 = vmul.f32 %v1386, %v1424
      %v1433 = vmul.f32 %v1391, %v1425
      %v1434 = vmul.f32 %v1396, %v1426
      %v1435 = vmul.f32 %v1401, %v1427
      %v1436 = vmul.f32 %v1406, %v1428
      %v1437 = vmul.f32 %v1411, %v1429
      %v1438 = vmul.f32 %v1416, %v1430
      %v1439 = vmul.f32 %v1421, %v1431
      %1440 = vxpose.xlu0.b32.start [1/16] %v1432, 128
      %1441 = vxpose.xlu0.b32.cont [2/16] %v1433, 128
      %1442 = vxpose.xlu0.b32.cont [3/16] %v1434, 128
      %1443 = vxpose.xlu0.b32.cont [4/16] %v1435, 128
      %1444 = vxpose.xlu0.b32.cont [5/16] 0.0, 128
      %1445 = vxpose.xlu0.b32.cont [6/16] 0.0, 128
      %1446 = vxpose.xlu0.b32.cont [7/16] 0.0, 128
      %1447 = vxpose.xlu0.b32.cont [8/16] 0.0, 128
      %1448 = vxpose.xlu0.b32.cont [9/16] 0.0, 128
      %1449 = vxpose.xlu0.b32.cont [10/16] 0.0, 128
      %1450 = vxpose.xlu0.b32.cont [11/16] 0.0, 128
      %1451 = vxpose.xlu0.b32.cont [12/16] 0.0, 128
      %1452 = vxpose.xlu0.b32.cont [13/16] 0.0, 128
      %1453 = vxpose.xlu0.b32.cont [14/16] 0.0, 128
      %1454 = vxpose.xlu0.b32.cont [15/16] 0.0, 128
      %1455 = vxpose.xlu0.b32.end [16/16] 0.0, 128
      %v1456 = vpop.trf.xlu0
      %v1457 = vpop.trf.xlu0
      %v1458 = vpop.trf.xlu0
      %v1459 = vpop.trf.xlu0
      %v1460 = vpop.trf.xlu0
      %v1461 = vpop.trf.xlu0
      %v1462 = vpop.trf.xlu0
      %v1463 = vpop.trf.xlu0
      %v1464 = vpop.trf.xlu0
      %v1465 = vpop.trf.xlu0
      %v1466 = vpop.trf.xlu0
      %v1467 = vpop.trf.xlu0
      %v1468 = vpop.trf.xlu0
      %v1469 = vpop.trf.xlu0
      %v1470 = vpop.trf.xlu0
      %v1471 = vpop.trf.xlu0
      %v1473 = vsel %vm1071, %v1456, 0
      %v1476 = vsel %vm1071, %v1457, 0
      %v1479 = vsel %vm1071, %v1458, 0
      %v1482 = vsel %vm1071, %v1459, 0
      %v1485 = vsel %vm1071, %v1460, 0
      %v1488 = vsel %vm1071, %v1461, 0
      %v1491 = vsel %vm1071, %v1462, 0
      %v1494 = vsel %vm1071, %v1463, 0
      %1496 = vmatprep.subr.mxu0 %v1057
      %1497 = vmatpush1.msra.mxu0 %v1056
      %1498 = vmatprep.subr.mxu0 %v1059
      %1499 = vmatpush1.msra.mxu0 %v1058
      %1500 = vmatprep.subr.mxu0 %v1061
      %1501 = vmatpush1.msra.mxu0 %v1060
      %1502 = vmatprep.subr.mxu0 %v1063
      %1503 = vmatpush1.msra.mxu0 %v1062
      %1504 = vmatprep.subr.mxu0 0.0
      %1505 = vmatpush1.msra.mxu0 0.0
      %1506 = vmatprep.subr.mxu0 0.0
      %1507 = vmatpush1.msra.mxu0 0.0
      %1508 = vmatprep.subr.mxu0 0.0
      %1509 = vmatpush1.msra.mxu0 0.0
      %1510 = vmatprep.subr.mxu0 0.0
      %1511 = vmatpush1.msra.mxu0 0.0
      %1512 = vmatprep.subr.mxu0 0.0
      %1513 = vmatpush1.msra.mxu0 0.0
      %1514 = vmatprep.subr.mxu0 0.0
      %1515 = vmatpush1.msra.mxu0 0.0
      %1516 = vmatprep.subr.mxu0 0.0
      %1517 = vmatpush1.msra.mxu0 0.0
      %1518 = vmatprep.subr.mxu0 0.0
      %1519 = vmatpush1.msra.mxu0 0.0
      %1520 = vmatprep.subr.mxu0 0.0
      %1521 = vmatpush1.msra.mxu0 0.0
      %1522 = vmatprep.subr.mxu0 0.0
      %1523 = vmatpush1.msra.mxu0 0.0
      %1524 = vmatprep.subr.mxu0 0.0
      %1525 = vmatpush1.msra.mxu0 0.0
      %1526 = vmatprep.subr.mxu0 0.0
      %1527 = vmatpush1.msra.mxu0 0.0
      %1528 = vmatprep.subr.mxu0 0.0
      %1529 = vmatpush1.msra.mxu0 0.0
      %1530 = vmatprep.subr.mxu0 0.0
      %1531 = vmatpush1.msra.mxu0 0.0
      %1532 = vmatprep.subr.mxu0 0.0
      %1533 = vmatpush1.msra.mxu0 0.0
      %1534 = vmatprep.subr.mxu0 0.0
      %1535 = vmatpush1.msra.mxu0 0.0
      %1536 = vmatprep.subr.mxu0 0.0
      %1537 = vmatpush1.msra.mxu0 0.0
      %1538 = vmatprep.subr.mxu0 0.0
      %1539 = vmatpush1.msra.mxu0 0.0
      %1540 = vmatprep.subr.mxu0 0.0
      %1541 = vmatpush1.msra.mxu0 0.0
      %1542 = vmatprep.subr.mxu0 0.0
      %1543 = vmatpush1.msra.mxu0 0.0
      %1544 = vmatprep.subr.mxu0 0.0
      %1545 = vmatpush1.msra.mxu0 0.0
      %1546 = vmatprep.subr.mxu0 0.0
      %1547 = vmatpush1.msra.mxu0 0.0
      %1548 = vmatprep.subr.mxu0 0.0
      %1549 = vmatpush1.msra.mxu0 0.0
      %1550 = vmatprep.subr.mxu0 0.0
      %1551 = vmatpush1.msra.mxu0 0.0
      %1552 = vmatprep.subr.mxu0 0.0
      %1553 = vmatpush1.msra.mxu0 0.0
      %1554 = vmatprep.subr.mxu0 0.0
      %1555 = vmatpush1.msra.mxu0 0.0
      %1556 = vmatprep.subr.mxu0 0.0
      %1557 = vmatpush1.msra.mxu0 0.0
      %1558 = vmatprep.subr.mxu0 0.0
      %1559 = vmatpush1.msra.mxu0 0.0
      %1560 = vmatprep.mubr.f32.mxu0 0.0
      %1561 = vmatmul.mubr.f32.gmra.mrb[0].mxu0 %v1473
      %v1562 = vpop.f32.mrb[0].mxu0
      %v1563 = vadd.f32 0.0, %v1562
      %v1564 = vpop.f32.mrb[0].mxu0
      %v1565 = vadd.f32 0.0, %v1564
      %1566 = vmatprep.mubr.f32.mxu0 0.0
      %1567 = vmatmul.mubr.f32.gmra.mrb[0].mxu0 %v1476
      %v1568 = vpop.f32.mrb[0].mxu0
      %v1569 = vadd.f32 0.0, %v1568
      %v1570 = vpop.f32.mrb[0].mxu0
      %v1571 = vadd.f32 0.0, %v1570
      %1572 = vmatprep.mubr.f32.mxu0 0.0
      %1573 = vmatmul.mubr.f32.gmra.mrb[0].mxu0 %v1479
      %v1574 = vpop.f32.mrb[0].mxu0
      %v1575 = vadd.f32 0.0, %v1574
      %v1576 = vpop.f32.mrb[0].mxu0
      %v1577 = vadd.f32 0.0, %v1576
      %1578 = vmatprep.mubr.f32.mxu0 0.0
      %1579 = vmatmul.mubr.f32.gmra.mrb[0].mxu0 %v1482
      %v1580 = vpop.f32.mrb[0].mxu0
      %v1581 = vadd.f32 0.0, %v1580
      %v1582 = vpop.f32.mrb[0].mxu0
      %v1583 = vadd.f32 0.0, %v1582
      %1584 = vmatprep.mubr.f32.mxu0 0.0
      %1585 = vmatmul.mubr.f32.gmra.mrb[0].mxu0 %v1485
      %v1586 = vpop.f32.mrb[0].mxu0
      %v1587 = vadd.f32 0.0, %v1586
      %v1588 = vpop.f32.mrb[0].mxu0
      %v1589 = vadd.f32 0.0, %v1588
      %1590 = vmatprep.mubr.f32.mxu0 0.0
      %1591 = vmatmul.mubr.f32.gmra.mrb[0].mxu0 %v1488
      %v1592 = vpop.f32.mrb[0].mxu0
      %v1593 = vadd.f32 0.0, %v1592
      %v1594 = vpop.f32.mrb[0].mxu0
      %v1595 = vadd.f32 0.0, %v1594
      %1596 = vmatprep.mubr.f32.mxu0 0.0
      %1597 = vmatmul.mubr.f32.gmra.mrb[0].mxu0 %v1491
      %v1598 = vpop.f32.mrb[0].mxu0
      %v1599 = vadd.f32 0.0, %v1598
      %v1600 = vpop.f32.mrb[0].mxu0
      %v1601 = vadd.f32 0.0, %v1600
      %1602 = vmatprep.mubr.f32.mxu0 0.0
      %1603 = vmatmul.mubr.f32.gmra.mrb[0].mxu0 %v1494
      %v1604 = vpop.f32.mrb[0].mxu0
      %v1605 = vadd.f32 0.0, %v1604
      %v1606 = vpop.f32.mrb[0].mxu0
      %v1607 = vadd.f32 0.0, %v1606
      %1608 = vdwg.mxu0
      %1610 = vset.pattern.permute.xlu0 0
      %1611 = vperm.xlu0 %1610, %v781
      %v1612 = vpop.permute.xlu0 %1611
      %v1614 = vadd.f32 %v1563, %v1612
      %v1615 = vadd.f32 %v1565, %v1612
      %v1616 = vadd.f32 %v1569, %v1612
      %v1617 = vadd.f32 %v1571, %v1612
      %v1618 = vadd.f32 %v1575, %v1612
      %v1619 = vadd.f32 %v1577, %v1612
      %v1620 = vadd.f32 %v1581, %v1612
      %v1621 = vadd.f32 %v1583, %v1612
      %v1622 = vadd.f32 %v1587, %v1612
      %v1623 = vadd.f32 %v1589, %v1612
      %v1624 = vadd.f32 %v1593, %v1612
      %v1625 = vadd.f32 %v1595, %v1612
      %v1626 = vadd.f32 %v1599, %v1612
      %v1627 = vadd.f32 %v1601, %v1612
      %v1628 = vadd.f32 %v1605, %v1612
      %v1629 = vadd.f32 %v1607, %v1612
      %v1630 = vrot.slane %v1614, 4
      %v1631 = vmax.f32 %v1614, %v1630
      %v1632 = vrot.slane %v1631, 2
      %v1633 = vmax.f32 %v1631, %v1632
      %v1634 = vrot.slane %v1633, 1
      %v1635 = vmax.f32 %v1633, %v1634
      %v1636 = vrot.slane %v1615, 4
      %v1637 = vmax.f32 %v1615, %v1636
      %v1638 = vrot.slane %v1637, 2
      %v1639 = vmax.f32 %v1637, %v1638
      %v1640 = vrot.slane %v1639, 1
      %v1641 = vmax.f32 %v1639, %v1640
      %v1642 = vrot.slane %v1616, 4
      %v1643 = vmax.f32 %v1616, %v1642
      %v1644 = vrot.slane %v1643, 2
      %v1645 = vmax.f32 %v1643, %v1644
      %v1646 = vrot.slane %v1645, 1
      %v1647 = vmax.f32 %v1645, %v1646
      %v1648 = vrot.slane %v1617, 4
      %v1649 = vmax.f32 %v1617, %v1648
      %v1650 = vrot.slane %v1649, 2
      %v1651 = vmax.f32 %v1649, %v1650
      %v1652 = vrot.slane %v1651, 1
      %v1653 = vmax.f32 %v1651, %v1652
      %v1654 = vrot.slane %v1618, 4
      %v1655 = vmax.f32 %v1618, %v1654
      %v1656 = vrot.slane %v1655, 2
      %v1657 = vmax.f32 %v1655, %v1656
      %v1658 = vrot.slane %v1657, 1
      %v1659 = vmax.f32 %v1657, %v1658
      %v1660 = vrot.slane %v1619, 4
      %v1661 = vmax.f32 %v1619, %v1660
      %v1662 = vrot.slane %v1661, 2
      %v1663 = vmax.f32 %v1661, %v1662
      %v1664 = vrot.slane %v1663, 1
      %v1665 = vmax.f32 %v1663, %v1664
      %v1666 = vrot.slane %v1620, 4
      %v1667 = vmax.f32 %v1620, %v1666
      %v1668 = vrot.slane %v1667, 2
      %v1669 = vmax.f32 %v1667, %v1668
      %v1670 = vrot.slane %v1669, 1
      %v1671 = vmax.f32 %v1669, %v1670
      %v1672 = vrot.slane %v1621, 4
      %v1673 = vmax.f32 %v1621, %v1672
      %v1674 = vrot.slane %v1673, 2
      %v1675 = vmax.f32 %v1673, %v1674
      %v1676 = vrot.slane %v1675, 1
      %v1677 = vmax.f32 %v1675, %v1676
      %v1678 = vrot.slane %v1622, 4
      %v1679 = vmax.f32 %v1622, %v1678
      %v1680 = vrot.slane %v1679, 2
      %v1681 = vmax.f32 %v1679, %v1680
      %v1682 = vrot.slane %v1681, 1
      %v1683 = vmax.f32 %v1681, %v1682
      %v1684 = vrot.slane %v1623, 4
      %v1685 = vmax.f32 %v1623, %v1684
      %v1686 = vrot.slane %v1685, 2
      %v1687 = vmax.f32 %v1685, %v1686
      %v1688 = vrot.slane %v1687, 1
      %v1689 = vmax.f32 %v1687, %v1688
      %v1690 = vrot.slane %v1624, 4
      %v1691 = vmax.f32 %v1624, %v1690
      %v1692 = vrot.slane %v1691, 2
      %v1693 = vmax.f32 %v1691, %v1692
      %v1694 = vrot.slane %v1693, 1
      %v1695 = vmax.f32 %v1693, %v1694
      %v1696 = vrot.slane %v1625, 4
      %v1697 = vmax.f32 %v1625, %v1696
      %v1698 = vrot.slane %v1697, 2
      %v1699 = vmax.f32 %v1697, %v1698
      %v1700 = vrot.slane %v1699, 1
      %v1701 = vmax.f32 %v1699, %v1700
      %v1702 = vrot.slane %v1626, 4
      %v1703 = vmax.f32 %v1626, %v1702
      %v1704 = vrot.slane %v1703, 2
      %v1705 = vmax.f32 %v1703, %v1704
      %v1706 = vrot.slane %v1705, 1
      %v1707 = vmax.f32 %v1705, %v1706
      %v1708 = vrot.slane %v1627, 4
      %v1709 = vmax.f32 %v1627, %v1708
      %v1710 = vrot.slane %v1709, 2
      %v1711 = vmax.f32 %v1709, %v1710
      %v1712 = vrot.slane %v1711, 1
      %v1713 = vmax.f32 %v1711, %v1712
      %v1714 = vrot.slane %v1628, 4
      %v1715 = vmax.f32 %v1628, %v1714
      %v1716 = vrot.slane %v1715, 2
      %v1717 = vmax.f32 %v1715, %v1716
      %v1718 = vrot.slane %v1717, 1
      %v1719 = vmax.f32 %v1717, %v1718
      %v1720 = vrot.slane %v1629, 4
      %v1721 = vmax.f32 %v1629, %v1720
      %v1722 = vrot.slane %v1721, 2
      %v1723 = vmax.f32 %v1721, %v1722
      %v1724 = vrot.slane %v1723, 1
      %v1725 = vmax.f32 %v1723, %v1724
      %v1726 = vsub.f32 %v1614, %v1635
      %v1727 = vsub.f32 %v1615, %v1641
      %v1728 = vsub.f32 %v1616, %v1647
      %v1729 = vsub.f32 %v1617, %v1653
      %v1730 = vsub.f32 %v1618, %v1659
      %v1731 = vsub.f32 %v1619, %v1665
      %v1732 = vsub.f32 %v1620, %v1671
      %v1733 = vsub.f32 %v1621, %v1677
      %v1734 = vsub.f32 %v1622, %v1683
      %v1735 = vsub.f32 %v1623, %v1689
      %v1736 = vsub.f32 %v1624, %v1695
      %v1737 = vsub.f32 %v1625, %v1701
      %v1738 = vsub.f32 %v1626, %v1707
      %v1739 = vsub.f32 %v1627, %v1713
      %v1740 = vsub.f32 %v1628, %v1719
      %v1741 = vsub.f32 %v1629, %v1725
      %v1742 = vmul.f32 %v1726, 1.442695
      %v1743 = vpow.pop %v1742
      %v1744 = vmul.f32 %v1727, 1.442695
      %v1745 = vpow.pop %v1744
      %v1746 = vmul.f32 %v1728, 1.442695
      %v1747 = vpow.pop %v1746
      %v1748 = vmul.f32 %v1729, 1.442695
      %v1749 = vpow.pop %v1748
      %v1750 = vmul.f32 %v1730, 1.442695
      %v1751 = vpow.pop %v1750
      %v1752 = vmul.f32 %v1731, 1.442695
      %v1753 = vpow.pop %v1752
      %v1754 = vmul.f32 %v1732, 1.442695
      %v1755 = vpow.pop %v1754
      %v1756 = vmul.f32 %v1733, 1.442695
      %v1757 = vpow.pop %v1756
      %v1758 = vmul.f32 %v1734, 1.442695
      %v1759 = vpow.pop %v1758
      %v1760 = vmul.f32 %v1735, 1.442695
      %v1761 = vpow.pop %v1760
      %v1762 = vmul.f32 %v1736, 1.442695
      %v1763 = vpow.pop %v1762
      %v1764 = vmul.f32 %v1737, 1.442695
      %v1765 = vpow.pop %v1764
      %v1766 = vmul.f32 %v1738, 1.442695
      %v1767 = vpow.pop %v1766
      %v1768 = vmul.f32 %v1739, 1.442695
      %v1769 = vpow.pop %v1768
      %v1770 = vmul.f32 %v1740, 1.442695
      %v1771 = vpow.pop %v1770
      %v1772 = vmul.f32 %v1741, 1.442695
      %v1773 = vpow.pop %v1772
      %v1774 = vrot.slane %v1743, 4
      %v1775 = vadd.f32 %v1743, %v1774
      %v1776 = vrot.slane %v1775, 2
      %v1777 = vadd.f32 %v1775, %v1776
      %v1778 = vrot.slane %v1777, 1
      %v1779 = vadd.f32 %v1777, %v1778
      %v1780 = vrot.slane %v1745, 4
      %v1781 = vadd.f32 %v1745, %v1780
      %v1782 = vrot.slane %v1781, 2
      %v1783 = vadd.f32 %v1781, %v1782
      %v1784 = vrot.slane %v1783, 1
      %v1785 = vadd.f32 %v1783, %v1784
      %v1786 = vrot.slane %v1747, 4
      %v1787 = vadd.f32 %v1747, %v1786
      %v1788 = vrot.slane %v1787, 2
      %v1789 = vadd.f32 %v1787, %v1788
      %v1790 = vrot.slane %v1789, 1
      %v1791 = vadd.f32 %v1789, %v1790
      %v1792 = vrot.slane %v1749, 4
      %v1793 = vadd.f32 %v1749, %v1792
      %v1794 = vrot.slane %v1793, 2
      %v1795 = vadd.f32 %v1793, %v1794
      %v1796 = vrot.slane %v1795, 1
      %v1797 = vadd.f32 %v1795, %v1796
      %v1798 = vrot.slane %v1751, 4
      %v1799 = vadd.f32 %v1751, %v1798
      %v1800 = vrot.slane %v1799, 2
      %v1801 = vadd.f32 %v1799, %v1800
      %v1802 = vrot.slane %v1801, 1
      %v1803 = vadd.f32 %v1801, %v1802
      %v1804 = vrot.slane %v1753, 4
      %v1805 = vadd.f32 %v1753, %v1804
      %v1806 = vrot.slane %v1805, 2
      %v1807 = vadd.f32 %v1805, %v1806
      %v1808 = vrot.slane %v1807, 1
      %v1809 = vadd.f32 %v1807, %v1808
      %v1810 = vrot.slane %v1755, 4
      %v1811 = vadd.f32 %v1755, %v1810
      %v1812 = vrot.slane %v1811, 2
      %v1813 = vadd.f32 %v1811, %v1812
      %v1814 = vrot.slane %v1813, 1
      %v1815 = vadd.f32 %v1813, %v1814
      %v1816 = vrot.slane %v1757, 4
      %v1817 = vadd.f32 %v1757, %v1816
      %v1818 = vrot.slane %v1817, 2
      %v1819 = vadd.f32 %v1817, %v1818
      %v1820 = vrot.slane %v1819, 1
      %v1821 = vadd.f32 %v1819, %v1820
      %v1822 = vrot.slane %v1759, 4
      %v1823 = vadd.f32 %v1759, %v1822
      %v1824 = vrot.slane %v1823, 2
      %v1825 = vadd.f32 %v1823, %v1824
      %v1826 = vrot.slane %v1825, 1
      %v1827 = vadd.f32 %v1825, %v1826
      %v1828 = vrot.slane %v1761, 4
      %v1829 = vadd.f32 %v1761, %v1828
      %v1830 = vrot.slane %v1829, 2
      %v1831 = vadd.f32 %v1829, %v1830
      %v1832 = vrot.slane %v1831, 1
      %v1833 = vadd.f32 %v1831, %v1832
      %v1834 = vrot.slane %v1763, 4
      %v1835 = vadd.f32 %v1763, %v1834
      %v1836 = vrot.slane %v1835, 2
      %v1837 = vadd.f32 %v1835, %v1836
      %v1838 = vrot.slane %v1837, 1
      %v1839 = vadd.f32 %v1837, %v1838
      %v1840 = vrot.slane %v1765, 4
      %v1841 = vadd.f32 %v1765, %v1840
      %v1842 = vrot.slane %v1841, 2
      %v1843 = vadd.f32 %v1841, %v1842
      %v1844 = vrot.slane %v1843, 1
      %v1845 = vadd.f32 %v1843, %v1844
      %v1846 = vrot.slane %v1767, 4
      %v1847 = vadd.f32 %v1767, %v1846
      %v1848 = vrot.slane %v1847, 2
      %v1849 = vadd.f32 %v1847, %v1848
      %v1850 = vrot.slane %v1849, 1
      %v1851 = vadd.f32 %v1849, %v1850
      %v1852 = vrot.slane %v1769, 4
      %v1853 = vadd.f32 %v1769, %v1852
      %v1854 = vrot.slane %v1853, 2
      %v1855 = vadd.f32 %v1853, %v1854
      %v1856 = vrot.slane %v1855, 1
      %v1857 = vadd.f32 %v1855, %v1856
      %v1858 = vrot.slane %v1771, 4
      %v1859 = vadd.f32 %v1771, %v1858
      %v1860 = vrot.slane %v1859, 2
      %v1861 = vadd.f32 %v1859, %v1860
      %v1862 = vrot.slane %v1861, 1
      %v1863 = vadd.f32 %v1861, %v1862
      %v1864 = vrot.slane %v1773, 4
      %v1865 = vadd.f32 %v1773, %v1864
      %v1866 = vrot.slane %v1865, 2
      %v1867 = vadd.f32 %v1865, %v1866
      %v1868 = vrot.slane %v1867, 1
      %v1869 = vadd.f32 %v1867, %v1868
      %v1870 = vrcp.pop %v1779
      %v1871 = vrcp.pop %v1785
      %v1872 = vrcp.pop %v1791
      %v1873 = vrcp.pop %v1797
      %v1874 = vrcp.pop %v1803
      %v1875 = vrcp.pop %v1809
      %v1876 = vrcp.pop %v1815
      %v1877 = vrcp.pop %v1821
      %v1878 = vrcp.pop %v1827
      %v1879 = vrcp.pop %v1833
      %v1880 = vrcp.pop %v1839
      %v1881 = vrcp.pop %v1845
      %v1882 = vrcp.pop %v1851
      %v1883 = vrcp.pop %v1857
      %v1884 = vrcp.pop %v1863
      %v1885 = vrcp.pop %v1869
      %v1886 = vmul.f32 %v1743, %v1870
      %v1887 = vmul.f32 %v1745, %v1871
      %v1888 = vmul.f32 %v1747, %v1872
      %v1889 = vmul.f32 %v1749, %v1873
      %v1890 = vmul.f32 %v1751, %v1874
      %v1891 = vmul.f32 %v1753, %v1875
      %v1892 = vmul.f32 %v1755, %v1876
      %v1893 = vmul.f32 %v1757, %v1877
      %v1894 = vmul.f32 %v1759, %v1878
      %v1895 = vmul.f32 %v1761, %v1879
      %v1896 = vmul.f32 %v1763, %v1880
      %v1897 = vmul.f32 %v1765, %v1881
      %v1898 = vmul.f32 %v1767, %v1882
      %v1899 = vmul.f32 %v1769, %v1883
      %v1900 = vmul.f32 %v1771, %v1884
      %v1901 = vmul.f32 %v1773, %v1885
      %vm1902 = vcmask 523264
      %v1904 = vsel %vm1902, %v1436, 0
      %v1907 = vsel %vm1902, %v1437, 0
      %v1910 = vsel %vm1902, %v1438, 0
      %v1913 = vsel %vm1902, %v1439, 0
      %1915 = vmatprep.subr.mxu0 %v1887
      %1916 = vmatpush1.msra.mxu0 %v1886
      %1917 = vmatprep.subr.mxu0 %v1889
      %1918 = vmatpush1.msra.mxu0 %v1888
      %1919 = vmatprep.subr.mxu0 %v1891
      %1920 = vmatpush1.msra.mxu0 %v1890
      %1921 = vmatprep.subr.mxu0 %v1893
      %1922 = vmatpush1.msra.mxu0 %v1892
      %1923 = vmatprep.subr.mxu0 %v1895
      %1924 = vmatpush1.msra.mxu0 %v1894
      %1925 = vmatprep.subr.mxu0 %v1897
      %1926 = vmatpush1.msra.mxu0 %v1896
      %1927 = vmatprep.subr.mxu0 %v1899
      %1928 = vmatpush1.msra.mxu0 %v1898
      %1929 = vmatprep.subr.mxu0 %v1901
      %1930 = vmatpush1.msra.mxu0 %v1900
      %1931 = vmatprep.subr.mxu0 0.0
      %1932 = vmatpush1.msra.mxu0 0.0
      %1933 = vmatprep.subr.mxu0 0.0
      %1934 = vmatpush1.msra.mxu0 0.0
      %1935 = vmatprep.subr.mxu0 0.0
      %1936 = vmatpush1.msra.mxu0 0.0
      %1937 = vmatprep.subr.mxu0 0.0
      %1938 = vmatpush1.msra.mxu0 0.0
      %1939 = vmatprep.subr.mxu0 0.0
      %1940 = vmatpush1.msra.mxu0 0.0
      %1941 = vmatprep.subr.mxu0 0.0
      %1942 = vmatpush1.msra.mxu0 0.0
      %1943 = vmatprep.subr.mxu0 0.0
      %1944 = vmatpush1.msra.mxu0 0.0
      %1945 = vmatprep.subr.mxu0 0.0
      %1946 = vmatpush1.msra.mxu0 0.0
      %1947 = vmatprep.subr.mxu0 0.0
      %1948 = vmatpush1.msra.mxu0 0.0
      %1949 = vmatprep.subr.mxu0 0.0
      %1950 = vmatpush1.msra.mxu0 0.0
      %1951 = vmatprep.subr.mxu0 0.0
      %1952 = vmatpush1.msra.mxu0 0.0
      %1953 = vmatprep.subr.mxu0 0.0
      %1954 = vmatpush1.msra.mxu0 0.0
      %1955 = vmatprep.subr.mxu0 0.0
      %1956 = vmatpush1.msra.mxu0 0.0
      %1957 = vmatprep.subr.mxu0 0.0
      %1958 = vmatpush1.msra.mxu0 0.0
      %1959 = vmatprep.subr.mxu0 0.0
      %1960 = vmatpush1.msra.mxu0 0.0
      %1961 = vmatprep.subr.mxu0 0.0
      %1962 = vmatpush1.msra.mxu0 0.0
      %1963 = vmatprep.subr.mxu0 0.0
      %1964 = vmatpush1.msra.mxu0 0.0
      %1965 = vmatprep.subr.mxu0 0.0
      %1966 = vmatpush1.msra.mxu0 0.0
      %1967 = vmatprep.subr.mxu0 0.0
      %1968 = vmatpush1.msra.mxu0 0.0
      %1969 = vmatprep.subr.mxu0 0.0
      %1970 = vmatpush1.msra.mxu0 0.0
      %1971 = vmatprep.subr.mxu0 0.0
      %1972 = vmatpush1.msra.mxu0 0.0
      %1973 = vmatprep.subr.mxu0 0.0
      %1974 = vmatpush1.msra.mxu0 0.0
      %1975 = vmatprep.subr.mxu0 0.0
      %1976 = vmatpush1.msra.mxu0 0.0
      %1977 = vmatprep.subr.mxu0 0.0
      %1978 = vmatpush1.msra.mxu0 0.0
      %1979 = vmatprep.mubr.f32.mxu0 0.0
      %1980 = vmatmul.mubr.f32.gmra.mrb[0].mxu0 %v1904
      %v1981 = vpop.f32.mrb[0].mxu0
      %v1982 = vadd.f32 0.0, %v1981
      %v1983 = vpop.f32.mrb[0].mxu0
      %v1984 = vadd.f32 0.0, %v1983
      %1985 = vmatprep.mubr.f32.mxu0 0.0
      %1986 = vmatmul.mubr.f32.gmra.mrb[0].mxu0 %v1907
      %v1987 = vpop.f32.mrb[0].mxu0
      %v1988 = vadd.f32 0.0, %v1987
      %v1989 = vpop.f32.mrb[0].mxu0
      %v1990 = vadd.f32 0.0, %v1989
      %1991 = vmatprep.mubr.f32.mxu0 0.0
      %1992 = vmatmul.mubr.f32.gmra.mrb[0].mxu0 %v1910
      %v1993 = vpop.f32.mrb[0].mxu0
      %v1994 = vadd.f32 0.0, %v1993
      %v1995 = vpop.f32.mrb[0].mxu0
      %v1996 = vadd.f32 0.0, %v1995
      %1997 = vmatprep.mubr.f32.mxu0 0.0
      %1998 = vmatmul.mubr.f32.gmra.mrb[0].mxu0 %v1913
      %v1999 = vpop.f32.mrb[0].mxu0
      %v2000 = vadd.f32 0.0, %v1999
      %v2001 = vpop.f32.mrb[0].mxu0
      %v2002 = vadd.f32 0.0, %v2001
      %2003 = vdwg.mxu0
      %v2004 = vld [vmem:[%s12] sm:$0xff]
      %v2005 = vld [vmem:[%s12 + $0x8] sm:$0xff]
      %v2006 = vld [vmem:[%s12 + $0x10] sm:$0xff]
      %v2007 = vld [vmem:[%s12 + $0x18] sm:$0xff]
      %v2008 = vld [vmem:[%s13] sm:$0xff]
      %v2009 = vld [vmem:[%s13 + $0x8] sm:$0xff]
      %v2010 = vld [vmem:[%s13 + $0x10] sm:$0xff]
      %v2011 = vld [vmem:[%s13 + $0x18] sm:$0xff]
      %2013 = vset.pattern.permute.xlu0 0
      %2014 = vperm.xlu0 %2013, %v2008
      %v2015 = vpop.permute.xlu0 %2014
      %2018 = vset.pattern.permute.xlu0 0
      %2019 = vperm.xlu0 %2018, %v2009
      %v2020 = vpop.permute.xlu0 %2019
      %2023 = vset.pattern.permute.xlu0 0
      %2024 = vperm.xlu0 %2023, %v2010
      %v2025 = vpop.permute.xlu0 %2024
      %2028 = vset.pattern.permute.xlu0 0
      %2029 = vperm.xlu0 %2028, %v2011
      %v2030 = vpop.permute.xlu0 %2029
      %v2033 = vsel %vm1071, %v2004, 0
      %v2036 = vsel %vm1071, %v2005, 0
      %v2039 = vsel %vm1071, %v2006, 0
      %v2042 = vsel %vm1071, %v2007, 0
      %2044 = vmatprep.subr.mxu0 %v1984
      %2045 = vmatpush1.msra.mxu0 %v1982
      %2046 = vmatprep.subr.mxu0 %v1990
      %2047 = vmatpush1.msra.mxu0 %v1988
      %2048 = vmatprep.subr.mxu0 %v1996
      %2049 = vmatpush1.msra.mxu0 %v1994
      %2050 = vmatprep.subr.mxu0 %v2002
      %2051 = vmatpush1.msra.mxu0 %v2000
      %2052 = vmatprep.subr.mxu0 0.0
      %2053 = vmatpush1.msra.mxu0 0.0
      %2054 = vmatprep.subr.mxu0 0.0
      %2055 = vmatpush1.msra.mxu0 0.0
      %2056 = vmatprep.subr.mxu0 0.0
      %2057 = vmatpush1.msra.mxu0 0.0
      %2058 = vmatprep.subr.mxu0 0.0
      %2059 = vmatpush1.msra.mxu0 0.0
      %2060 = vmatprep.subr.mxu0 0.0
      %2061 = vmatpush1.msra.mxu0 0.0
      %2062 = vmatprep.subr.mxu0 0.0
      %2063 = vmatpush1.msra.mxu0 0.0
      %2064 = vmatprep.subr.mxu0 0.0
      %2065 = vmatpush1.msra.mxu0 0.0
      %2066 = vmatprep.subr.mxu0 0.0
      %2067 = vmatpush1.msra.mxu0 0.0
      %2068 = vmatprep.subr.mxu0 0.0
      %2069 = vmatpush1.msra.mxu0 0.0
      %2070 = vmatprep.subr.mxu0 0.0
      %2071 = vmatpush1.msra.mxu0 0.0
      %2072 = vmatprep.subr.mxu0 0.0
      %2073 = vmatpush1.msra.mxu0 0.0
      %2074 = vmatprep.subr.mxu0 0.0
      %2075 = vmatpush1.msra.mxu0 0.0
      %2076 = vmatprep.subr.mxu0 0.0
      %2077 = vmatpush1.msra.mxu0 0.0
      %2078 = vmatprep.subr.mxu0 0.0
      %2079 = vmatpush1.msra.mxu0 0.0
      %2080 = vmatprep.subr.mxu0 0.0
      %2081 = vmatpush1.msra.mxu0 0.0
      %2082 = vmatprep.subr.mxu0 0.0
      %2083 = vmatpush1.msra.mxu0 0.0
      %2084 = vmatprep.subr.mxu0 0.0
      %2085 = vmatpush1.msra.mxu0 0.0
      %2086 = vmatprep.subr.mxu0 0.0
      %2087 = vmatpush1.msra.mxu0 0.0
      %2088 = vmatprep.subr.mxu0 0.0
      %2089 = vmatpush1.msra.mxu0 0.0
      %2090 = vmatprep.subr.mxu0 0.0
      %2091 = vmatpush1.msra.mxu0 0.0
      %2092 = vmatprep.subr.mxu0 0.0
      %2093 = vmatpush1.msra.mxu0 0.0
      %2094 = vmatprep.subr.mxu0 0.0
      %2095 = vmatpush1.msra.mxu0 0.0
      %2096 = vmatprep.subr.mxu0 0.0
      %2097 = vmatpush1.msra.mxu0 0.0
      %2098 = vmatprep.subr.mxu0 0.0
      %2099 = vmatpush1.msra.mxu0 0.0
      %2100 = vmatprep.subr.mxu0 0.0
      %2101 = vmatpush1.msra.mxu0 0.0
      %2102 = vmatprep.subr.mxu0 0.0
      %2103 = vmatpush1.msra.mxu0 0.0
      %2104 = vmatprep.subr.mxu0 0.0
      %2105 = vmatpush1.msra.mxu0 0.0
      %2106 = vmatprep.subr.mxu0 0.0
      %2107 = vmatpush1.msra.mxu0 0.0
      %2108 = vmatprep.mubr.f32.mxu0 0.0
      %2109 = vmatmul.mubr.f32.gmra.mrb[0].mxu0 %v2033
      %v2110 = vpop.f32.mrb[0].mxu0
      %v2111 = vadd.f32 %v2015, %v2110
      %v2112 = vpop.f32.mrb[0].mxu0
      %v2113 = vadd.f32 %v2015, %v2112
      %2114 = vmatprep.mubr.f32.mxu0 0.0
      %2115 = vmatmul.mubr.f32.gmra.mrb[0].mxu0 %v2036
      %v2116 = vpop.f32.mrb[0].mxu0
      %v2117 = vadd.f32 %v2020, %v2116
      %v2118 = vpop.f32.mrb[0].mxu0
      %v2119 = vadd.f32 %v2020, %v2118
      %2120 = vmatprep.mubr.f32.mxu0 0.0
      %2121 = vmatmul.mubr.f32.gmra.mrb[0].mxu0 %v2039
      %v2122 = vpop.f32.mrb[0].mxu0
      %v2123 = vadd.f32 %v2025, %v2122
      %v2124 = vpop.f32.mrb[0].mxu0
      %v2125 = vadd.f32 %v2025, %v2124
      %2126 = vmatprep.mubr.f32.mxu0 0.0
      %2127 = vmatmul.mubr.f32.gmra.mrb[0].mxu0 %v2042
      %v2128 = vpop.f32.mrb[0].mxu0
      %v2129 = vadd.f32 %v2030, %v2128
      %v2130 = vpop.f32.mrb[0].mxu0
      %v2131 = vadd.f32 %v2030, %v2130
      %2132 = vdwg.mxu0
      %v2133 = vadd.f32 %v994, %v2111
      %v2134 = vadd.f32 %v996, %v2113
      %v2135 = vadd.f32 %v1000, %v2117
      %v2136 = vadd.f32 %v1002, %v2119
      %v2137 = vadd.f32 %v1006, %v2123
      %v2138 = vadd.f32 %v1008, %v2125
      %v2139 = vadd.f32 %v1012, %v2129
      %v2140 = vadd.f32 %v1014, %v2131
      %v2141 = vadd.f32 %v2133, %v2135
      %v2142 = vadd.f32 %v2141, %v2137
      %v2143 = vadd.f32 %v2142, %v2139
      %v2144 = vrot.slane %v2143, 4
      %v2145 = vadd.f32 %v2143, %v2144
      %v2146 = vrot.slane %v2145, 2
      %v2147 = vadd.f32 %v2145, %v2146
      %v2148 = vrot.slane %v2147, 1
      %v2149 = vadd.f32 %v2147, %v2148
      %v2150 = vadd.f32 %v2134, %v2136
      %v2151 = vadd.f32 %v2150, %v2138
      %v2152 = vadd.f32 %v2151, %v2140
      %v2153 = vrot.slane %v2152, 4
      %v2154 = vadd.f32 %v2152, %v2153
      %v2155 = vrot.slane %v2154, 2
      %v2156 = vadd.f32 %v2154, %v2155
      %v2157 = vrot.slane %v2156, 1
      %v2158 = vadd.f32 %v2156, %v2157
      %v2159 = vrcp.pop 32.0
      %v2160 = vmul.f32 %v2149, %v2159
      %v2161 = vmul.f32 %v2158, %v2159
      %v2162 = vsub.f32 %v2133, %v2160
      %v2163 = vsub.f32 %v2134, %v2161
      %v2164 = vsub.f32 %v2135, %v2160
      %v2165 = vsub.f32 %v2136, %v2161
      %v2166 = vsub.f32 %v2137, %v2160
      %v2167 = vsub.f32 %v2138, %v2161
      %v2168 = vsub.f32 %v2139, %v2160
      %v2169 = vsub.f32 %v2140, %v2161
      %v2170 = vmul.f32 %v2162, %v2162
      %v2171 = vmul.f32 %v2163, %v2163
      %v2172 = vmul.f32 %v2164, %v2164
      %v2173 = vmul.f32 %v2165, %v2165
      %v2174 = vmul.f32 %v2166, %v2166
      %v2175 = vmul.f32 %v2167, %v2167
      %v2176 = vmul.f32 %v2168, %v2168
      %v2177 = vmul.f32 %v2169, %v2169
      %v2178 = vadd.f32 %v2170, %v2172
      %v2179 = vadd.f32 %v2178, %v2174
      %v2180 = vadd.f32 %v2179, %v2176
      %v2181 = vrot.slane %v2180, 4
      %v2182 = vadd.f32 %v2180, %v2181
      %v2183 = vrot.slane %v2182, 2
      %v2184 = vadd.f32 %v2182, %v2183
      %v2185 = vrot.slane %v2184, 1
      %v2186 = vadd.f32 %v2184, %v2185
      %v2187 = vadd.f32 %v2171, %v2173
      %v2188 = vadd.f32 %v2187, %v2175
      %v2189 = vadd.f32 %v2188, %v2177
      %v2190 = vrot.slane %v2189, 4
      %v2191 = vadd.f32 %v2189, %v2190
      %v2192 = vrot.slane %v2191, 2
      %v2193 = vadd.f32 %v2191, %v2192
      %v2194 = vrot.slane %v2193, 1
      %v2195 = vadd.f32 %v2193, %v2194
      %v2196 = vmul.f32 %v2186, %v2159
      %v2197 = vmul.f32 %v2195, %v2159
      %v2198 = vadd.f32 %v2196, 1e-05
      %v2199 = vadd.f32 %v2197, 1e-05
      %v2200 = vrsqrt.pop %v2198
      %v2201 = vrsqrt.pop %v2199
      %v2202 = vmul.f32 %v2162, %v2200
      %v2203 = vmul.f32 %v2163, %v2201
      %v2204 = vmul.f32 %v2164, %v2200
      %v2205 = vmul.f32 %v2165, %v2201
      %v2206 = vmul.f32 %v2166, %v2200
      %v2207 = vmul.f32 %v2167, %v2201
      %v2208 = vmul.f32 %v2168, %v2200
      %v2209 = vmul.f32 %v2169, %v2201
      %v2210 = vld [vmem:[%s14] sm:$0xff]
      %v2211 = vld [vmem:[%s14 + $0x8] sm:$0xff]
      %v2212 = vld [vmem:[%s14 + $0x10] sm:$0xff]
      %v2213 = vld [vmem:[%s14 + $0x18] sm:$0xff]
      %2215 = vset.pattern.permute.xlu0 0
      %2216 = vperm.xlu0 %2215, %v2210
      %v2217 = vpop.permute.xlu0 %2216
      %2220 = vset.pattern.permute.xlu0 0
      %2221 = vperm.xlu0 %2220, %v2211
      %v2222 = vpop.permute.xlu0 %2221
      %2225 = vset.pattern.permute.xlu0 0
      %2226 = vperm.xlu0 %2225, %v2212
      %v2227 = vpop.permute.xlu0 %2226
      %2230 = vset.pattern.permute.xlu0 0
      %2231 = vperm.xlu0 %2230, %v2213
      %v2232 = vpop.permute.xlu0 %2231
      %v2234 = vmul.f32 %v2202, %v2217
      %v2235 = vmul.f32 %v2203, %v2217
      %v2236 = vmul.f32 %v2204, %v2222
      %v2237 = vmul.f32 %v2205, %v2222
      %v2238 = vmul.f32 %v2206, %v2227
      %v2239 = vmul.f32 %v2207, %v2227
      %v2240 = vmul.f32 %v2208, %v2232
      %v2241 = vmul.f32 %v2209, %v2232
      %v2242 = vld [vmem:[%s15] sm:$0xff]
      %v2243 = vld [vmem:[%s15 + $0x8] sm:$0xff]
      %v2244 = vld [vmem:[%s15 + $0x10] sm:$0xff]
      %v2245 = vld [vmem:[%s15 + $0x18] sm:$0xff]
      %2247 = vset.pattern.permute.xlu0 0
      %2248 = vperm.xlu0 %2247, %v2242
      %v2249 = vpop.permute.xlu0 %2248
      %2252 = vset.pattern.permute.xlu0 0
      %2253 = vperm.xlu0 %2252, %v2243
      %v2254 = vpop.permute.xlu0 %2253
      %2257 = vset.pattern.permute.xlu0 0
      %2258 = vperm.xlu0 %2257, %v2244
      %v2259 = vpop.permute.xlu0 %2258
      %2262 = vset.pattern.permute.xlu0 0
      %2263 = vperm.xlu0 %2262, %v2245
      %v2264 = vpop.permute.xlu0 %2263
      %v2266 = vadd.f32 %v2234, %v2249
      %v2267 = vadd.f32 %v2235, %v2249
      %v2268 = vadd.f32 %v2236, %v2254
      %v2269 = vadd.f32 %v2237, %v2254
      %v2270 = vadd.f32 %v2238, %v2259
      %v2271 = vadd.f32 %v2239, %v2259
      %v2272 = vadd.f32 %v2240, %v2264
      %v2273 = vadd.f32 %v2241, %v2264
      %v2274 = vld [vmem:[%s16] sm:$0xff]
      %v2275 = vld [vmem:[%s17] sm:$0xff]
      %2277 = vset.pattern.permute.xlu0 0
      %2278 = vperm.xlu0 %2277, %v2275
      %v2279 = vpop.permute.xlu0 %2278
      %v2282 = vsel %vm1071, %v2274, 0
      %2284 = vmatprep.subr.mxu0 %v2267
      %2285 = vmatpush1.msra.mxu0 %v2266
      %2286 = vmatprep.subr.mxu0 %v2269
      %2287 = vmatpush1.msra.mxu0 %v2268
      %2288 = vmatprep.subr.mxu0 %v2271
      %2289 = vmatpush1.msra.mxu0 %v2270
      %2290 = vmatprep.subr.mxu0 %v2273
      %2291 = vmatpush1.msra.mxu0 %v2272
      %2292 = vmatprep.subr.mxu0 0.0
      %2293 = vmatpush1.msra.mxu0 0.0
      %2294 = vmatprep.subr.mxu0 0.0
      %2295 = vmatpush1.msra.mxu0 0.0
      %2296 = vmatprep.subr.mxu0 0.0
      %2297 = vmatpush1.msra.mxu0 0.0
      %2298 = vmatprep.subr.mxu0 0.0
      %2299 = vmatpush1.msra.mxu0 0.0
      %2300 = vmatprep.subr.mxu0 0.0
      %2301 = vmatpush1.msra.mxu0 0.0
      %2302 = vmatprep.subr.mxu0 0.0
      %2303 = vmatpush1.msra.mxu0 0.0
      %2304 = vmatprep.subr.mxu0 0.0
      %2305 = vmatpush1.msra.mxu0 0.0
      %2306 = vmatprep.subr.mxu0 0.0
      %2307 = vmatpush1.msra.mxu0 0.0
      %2308 = vmatprep.subr.mxu0 0.0
      %2309 = vmatpush1.msra.mxu0 0.0
      %2310 = vmatprep.subr.mxu0 0.0
      %2311 = vmatpush1.msra.mxu0 0.0
      %2312 = vmatprep.subr.mxu0 0.0
      %2313 = vmatpush1.msra.mxu0 0.0
      %2314 = vmatprep.subr.mxu0 0.0
      %2315 = vmatpush1.msra.mxu0 0.0
      %2316 = vmatprep.subr.mxu0 0.0
      %2317 = vmatpush1.msra.mxu0 0.0
      %2318 = vmatprep.subr.mxu0 0.0
      %2319 = vmatpush1.msra.mxu0 0.0
      %2320 = vmatprep.subr.mxu0 0.0
      %2321 = vmatpush1.msra.mxu0 0.0
      %2322 = vmatprep.subr.mxu0 0.0
      %2323 = vmatpush1.msra.mxu0 0.0
      %2324 = vmatprep.subr.mxu0 0.0
      %2325 = vmatpush1.msra.mxu0 0.0
      %2326 = vmatprep.subr.mxu0 0.0
      %2327 = vmatpush1.msra.mxu0 0.0
      %2328 = vmatprep.subr.mxu0 0.0
      %2329 = vmatpush1.msra.mxu0 0.0
      %2330 = vmatprep.subr.mxu0 0.0
      %2331 = vmatpush1.msra.mxu0 0.0
      %2332 = vmatprep.subr.mxu0 0.0
      %2333 = vmatpush1.msra.mxu0 0.0
      %2334 = vmatprep.subr.mxu0 0.0
      %2335 = vmatpush1.msra.mxu0 0.0
      %2336 = vmatprep.subr.mxu0 0.0
      %2337 = vmatpush1.msra.mxu0 0.0
      %2338 = vmatprep.subr.mxu0 0.0
      %2339 = vmatpush1.msra.mxu0 0.0
      %2340 = vmatprep.subr.mxu0 0.0
      %2341 = vmatpush1.msra.mxu0 0.0
      %2342 = vmatprep.subr.mxu0 0.0
      %2343 = vmatpush1.msra.mxu0 0.0
      %2344 = vmatprep.subr.mxu0 0.0
      %2345 = vmatpush1.msra.mxu0 0.0
      %2346 = vmatprep.subr.mxu0 0.0
      %2347 = vmatpush1.msra.mxu0 0.0
      %2348 = vmatprep.mubr.f32.mxu0 0.0
      %2349 = vmatmul.mubr.f32.gmra.mrb[0].mxu0 %v2282
      %v2350 = vpop.f32.mrb[0].mxu0
      %v2351 = vadd.f32 %v2279, %v2350
      %v2352 = vpop.f32.mrb[0].mxu0
      %v2353 = vadd.f32 %v2279, %v2352
      %2354 = vdwg.mxu0
      %v2355 = vadd.f32 %v775, %v776
      %2356 = vadd.xlane.f32.xlu0 %v2355
      %v2357 = vpop.xlane.xlu0 %2356
      %v2358 = vrcp.pop 256.0
      %v2359 = vmul.f32 %v2357, %v2358
      %v2360 = vadd.f32 %v2351, %v2353
      %2361 = vadd.xlane.f32.xlu0 %v2360
      %v2362 = vpop.xlane.xlu0 %2361
      %v2363 = vmul.f32 %v2362, %v2358
      %v2364 = vadd.f32 %v1146, %v1147
      %2365 = vadd.xlane.f32.xlu0 %v2364
      %v2366 = vpop.xlane.xlu0 %2365
      %v2367 = vmul.f32 %v2366, %v2358
      %v2368 = vld [vmem:[%s18] sm:$0xff]
      %v2369 = vld [vmem:[%s18 + $0x8] sm:$0xff]
      %v2370 = vld [vmem:[%s18 + $0x10] sm:$0xff]
      %v2371 = vld [vmem:[%s18 + $0x18] sm:$0xff]
      %v2372 = vld [vmem:[%s19] sm:$0xff]
      %v2373 = vld [vmem:[%s19 + $0x8] sm:$0xff]
      %v2374 = vld [vmem:[%s19 + $0x10] sm:$0xff]
      %v2375 = vld [vmem:[%s19 + $0x18] sm:$0xff]
      %v2377 = vsel %vm866, %v2372, 0
      %v2380 = vsel %vm866, %v2373, 0
      %v2383 = vsel %vm866, %v2374, 0
      %v2386 = vsel %vm866, %v2375, 0
      %2388 = vmatprep.subr.mxu0 0.0
      %2389 = vmatpush1.msra.mxu0 %v2363
      %2390 = vmatprep.subr.mxu0 0.0
      %2391 = vmatpush1.msra.mxu0 0.0
      %2392 = vmatprep.subr.mxu0 0.0
      %2393 = vmatpush1.msra.mxu0 0.0
      %2394 = vmatprep.subr.mxu0 0.0
      %2395 = vmatpush1.msra.mxu0 0.0
      %2396 = vmatprep.subr.mxu0 0.0
      %2397 = vmatpush1.msra.mxu0 0.0
      %2398 = vmatprep.subr.mxu0 0.0
      %2399 = vmatpush1.msra.mxu0 0.0
      %2400 = vmatprep.subr.mxu0 0.0
      %2401 = vmatpush1.msra.mxu0 0.0
      %2402 = vmatprep.subr.mxu0 0.0
      %2403 = vmatpush1.msra.mxu0 0.0
      %2404 = vmatprep.subr.mxu0 0.0
      %2405 = vmatpush1.msra.mxu0 0.0
      %2406 = vmatprep.subr.mxu0 0.0
      %2407 = vmatpush1.msra.mxu0 0.0
      %2408 = vmatprep.subr.mxu0 0.0
      %2409 = vmatpush1.msra.mxu0 0.0
      %2410 = vmatprep.subr.mxu0 0.0
      %2411 = vmatpush1.msra.mxu0 0.0
      %2412 = vmatprep.subr.mxu0 0.0
      %2413 = vmatpush1.msra.mxu0 0.0
      %2414 = vmatprep.subr.mxu0 0.0
      %2415 = vmatpush1.msra.mxu0 0.0
      %2416 = vmatprep.subr.mxu0 0.0
      %2417 = vmatpush1.msra.mxu0 0.0
      %2418 = vmatprep.subr.mxu0 0.0
      %2419 = vmatpush1.msra.mxu0 0.0
      %2420 = vmatprep.subr.mxu0 0.0
      %2421 = vmatpush1.msra.mxu0 0.0
      %2422 = vmatprep.subr.mxu0 0.0
      %2423 = vmatpush1.msra.mxu0 0.0
      %2424 = vmatprep.subr.mxu0 0.0
      %2425 = vmatpush1.msra.mxu0 0.0
      %2426 = vmatprep.subr.mxu0 0.0
      %2427 = vmatpush1.msra.mxu0 0.0
      %2428 = vmatprep.subr.mxu0 0.0
      %2429 = vmatpush1.msra.mxu0 0.0
      %2430 = vmatprep.subr.mxu0 0.0
      %2431 = vmatpush1.msra.mxu0 0.0
      %2432 = vmatprep.subr.mxu0 0.0
      %2433 = vmatpush1.msra.mxu0 0.0
      %2434 = vmatprep.subr.mxu0 0.0
      %2435 = vmatpush1.msra.mxu0 0.0
      %2436 = vmatprep.subr.mxu0 0.0
      %2437 = vmatpush1.msra.mxu0 0.0
      %2438 = vmatprep.subr.mxu0 0.0
      %2439 = vmatpush1.msra.mxu0 0.0
      %2440 = vmatprep.subr.mxu0 0.0
      %2441 = vmatpush1.msra.mxu0 0.0
      %2442 = vmatprep.subr.mxu0 0.0
      %2443 = vmatpush1.msra.mxu0 0.0
      %2444 = vmatprep.subr.mxu0 0.0
      %2445 = vmatpush1.msra.mxu0 0.0
      %2446 = vmatprep.subr.mxu0 0.0
      %2447 = vmatpush1.msra.mxu0 0.0
      %2448 = vmatprep.subr.mxu0 0.0
      %2449 = vmatpush1.msra.mxu0 0.0
      %2450 = vmatprep.subr.mxu0 0.0
      %2451 = vmatpush1.msra.mxu0 0.0
      %2452 = vmatprep.mubr.f32.mxu0 0.0
      %2453 = vmatmul.mubr.f32.gmra.mrb[0].mxu0 %v2377
      %v2454 = vpop.f32.mrb[0].mxu0
      %v2455 = vadd.f32 0.0, %v2454
      %v2456 = vpop.f32.mrb[0].mxu0
      %2457 = vmatprep.mubr.f32.mxu0 0.0
      %2458 = vmatmul.mubr.f32.gmra.mrb[0].mxu0 %v2380
      %v2459 = vpop.f32.mrb[0].mxu0
      %v2460 = vadd.f32 0.0, %v2459
      %v2461 = vpop.f32.mrb[0].mxu0
      %2462 = vmatprep.mubr.f32.mxu0 0.0
      %2463 = vmatmul.mubr.f32.gmra.mrb[0].mxu0 %v2383
      %v2464 = vpop.f32.mrb[0].mxu0
      %v2465 = vadd.f32 0.0, %v2464
      %v2466 = vpop.f32.mrb[0].mxu0
      %2467 = vmatprep.mubr.f32.mxu0 0.0
      %2468 = vmatmul.mubr.f32.gmra.mrb[0].mxu0 %v2386
      %v2469 = vpop.f32.mrb[0].mxu0
      %v2470 = vadd.f32 0.0, %v2469
      %v2471 = vpop.f32.mrb[0].mxu0
      %2472 = vdwg.mxu0
      %v2474 = vsel %vm866, %v2368, 0
      %v2477 = vsel %vm866, %v2369, 0
      %v2480 = vsel %vm866, %v2370, 0
      %v2483 = vsel %vm866, %v2371, 0
      %2485 = vmatprep.subr.mxu0 0.0
      %2486 = vmatpush1.msra.mxu0 %v2359
      %2487 = vmatprep.subr.mxu0 0.0
      %2488 = vmatpush1.msra.mxu0 0.0
      %2489 = vmatprep.subr.mxu0 0.0
      %2490 = vmatpush1.msra.mxu0 0.0
      %2491 = vmatprep.subr.mxu0 0.0
      %2492 = vmatpush1.msra.mxu0 0.0
      %2493 = vmatprep.subr.mxu0 0.0
      %2494 = vmatpush1.msra.mxu0 0.0
      %2495 = vmatprep.subr.mxu0 0.0
      %2496 = vmatpush1.msra.mxu0 0.0
      %2497 = vmatprep.subr.mxu0 0.0
      %2498 = vmatpush1.msra.mxu0 0.0
      %2499 = vmatprep.subr.mxu0 0.0
      %2500 = vmatpush1.msra.mxu0 0.0
      %2501 = vmatprep.subr.mxu0 0.0
      %2502 = vmatpush1.msra.mxu0 0.0
      %2503 = vmatprep.subr.mxu0 0.0
      %2504 = vmatpush1.msra.mxu0 0.0
      %2505 = vmatprep.subr.mxu0 0.0
      %2506 = vmatpush1.msra.mxu0 0.0
      %2507 = vmatprep.subr.mxu0 0.0
      %2508 = vmatpush1.msra.mxu0 0.0
      %2509 = vmatprep.subr.mxu0 0.0
      %2510 = vmatpush1.msra.mxu0 0.0
      %2511 = vmatprep.subr.mxu0 0.0
      %2512 = vmatpush1.msra.mxu0 0.0
      %2513 = vmatprep.subr.mxu0 0.0
      %2514 = vmatpush1.msra.mxu0 0.0
      %2515 = vmatprep.subr.mxu0 0.0
      %2516 = vmatpush1.msra.mxu0 0.0
      %2517 = vmatprep.subr.mxu0 0.0
      %2518 = vmatpush1.msra.mxu0 0.0
      %2519 = vmatprep.subr.mxu0 0.0
      %2520 = vmatpush1.msra.mxu0 0.0
      %2521 = vmatprep.subr.mxu0 0.0
      %2522 = vmatpush1.msra.mxu0 0.0
      %2523 = vmatprep.subr.mxu0 0.0
      %2524 = vmatpush1.msra.mxu0 0.0
      %2525 = vmatprep.subr.mxu0 0.0
      %2526 = vmatpush1.msra.mxu0 0.0
      %2527 = vmatprep.subr.mxu0 0.0
      %2528 = vmatpush1.msra.mxu0 0.0
      %2529 = vmatprep.subr.mxu0 0.0
      %2530 = vmatpush1.msra.mxu0 0.0
      %2531 = vmatprep.subr.mxu0 0.0
      %2532 = vmatpush1.msra.mxu0 0.0
      %2533 = vmatprep.subr.mxu0 0.0
      %2534 = vmatpush1.msra.mxu0 0.0
      %2535 = vmatprep.subr.mxu0 0.0
      %2536 = vmatpush1.msra.mxu0 0.0
      %2537 = vmatprep.subr.mxu0 0.0
      %2538 = vmatpush1.msra.mxu0 0.0
      %2539 = vmatprep.subr.mxu0 0.0
      %2540 = vmatpush1.msra.mxu0 0.0
      %2541 = vmatprep.subr.mxu0 0.0
      %2542 = vmatpush1.msra.mxu0 0.0
      %2543 = vmatprep.subr.mxu0 0.0
      %2544 = vmatpush1.msra.mxu0 0.0
      %2545 = vmatprep.subr.mxu0 0.0
      %2546 = vmatpush1.msra.mxu0 0.0
      %2547 = vmatprep.subr.mxu0 0.0
      %2548 = vmatpush1.msra.mxu0 0.0
      %2549 = vmatprep.mubr.f32.mxu0 0.0
      %2550 = vmatmul.mubr.f32.gmra.mrb[0].mxu0 %v2474
      %v2551 = vpop.f32.mrb[0].mxu0
      %v2552 = vadd.f32 %v2455, %v2551
      %v2553 = vpop.f32.mrb[0].mxu0
      %2554 = vmatprep.mubr.f32.mxu0 0.0
      %2555 = vmatmul.mubr.f32.gmra.mrb[0].mxu0 %v2477
      %v2556 = vpop.f32.mrb[0].mxu0
      %v2557 = vadd.f32 %v2460, %v2556
      %v2558 = vpop.f32.mrb[0].mxu0
      %2559 = vmatprep.mubr.f32.mxu0 0.0
      %2560 = vmatmul.mubr.f32.gmra.mrb[0].mxu0 %v2480
      %v2561 = vpop.f32.mrb[0].mxu0
      %v2562 = vadd.f32 %v2465, %v2561
      %v2563 = vpop.f32.mrb[0].mxu0
      %2564 = vmatprep.mubr.f32.mxu0 0.0
      %2565 = vmatmul.mubr.f32.gmra.mrb[0].mxu0 %v2483
      %v2566 = vpop.f32.mrb[0].mxu0
      %v2567 = vadd.f32 %v2470, %v2566
      %v2568 = vpop.f32.mrb[0].mxu0
      %2569 = vdwg.mxu0
      %v2570 = vld [vmem:[%s20] sm:$0xff]
      %v2571 = vld [vmem:[%s20 + $0x8] sm:$0xff]
      %v2572 = vld [vmem:[%s20 + $0x10] sm:$0xff]
      %v2573 = vld [vmem:[%s20 + $0x18] sm:$0xff]
      %v2575 = vsel %vm866, %v2570, 0
      %v2578 = vsel %vm866, %v2571, 0
      %v2581 = vsel %vm866, %v2572, 0
      %v2584 = vsel %vm866, %v2573, 0
      %2586 = vmatprep.subr.mxu0 0.0
      %2587 = vmatpush1.msra.mxu0 %v2367
      %2588 = vmatprep.subr.mxu0 0.0
      %2589 = vmatpush1.msra.mxu0 0.0
      %2590 = vmatprep.subr.mxu0 0.0
      %2591 = vmatpush1.msra.mxu0 0.0
      %2592 = vmatprep.subr.mxu0 0.0
      %2593 = vmatpush1.msra.mxu0 0.0
      %2594 = vmatprep.subr.mxu0 0.0
      %2595 = vmatpush1.msra.mxu0 0.0
      %2596 = vmatprep.subr.mxu0 0.0
      %2597 = vmatpush1.msra.mxu0 0.0
      %2598 = vmatprep.subr.mxu0 0.0
      %2599 = vmatpush1.msra.mxu0 0.0
      %2600 = vmatprep.subr.mxu0 0.0
      %2601 = vmatpush1.msra.mxu0 0.0
      %2602 = vmatprep.subr.mxu0 0.0
      %2603 = vmatpush1.msra.mxu0 0.0
      %2604 = vmatprep.subr.mxu0 0.0
      %2605 = vmatpush1.msra.mxu0 0.0
      %2606 = vmatprep.subr.mxu0 0.0
      %2607 = vmatpush1.msra.mxu0 0.0
      %2608 = vmatprep.subr.mxu0 0.0
      %2609 = vmatpush1.msra.mxu0 0.0
      %2610 = vmatprep.subr.mxu0 0.0
      %2611 = vmatpush1.msra.mxu0 0.0
      %2612 = vmatprep.subr.mxu0 0.0
      %2613 = vmatpush1.msra.mxu0 0.0
      %2614 = vmatprep.subr.mxu0 0.0
      %2615 = vmatpush1.msra.mxu0 0.0
      %2616 = vmatprep.subr.mxu0 0.0
      %2617 = vmatpush1.msra.mxu0 0.0
      %2618 = vmatprep.subr.mxu0 0.0
      %2619 = vmatpush1.msra.mxu0 0.0
      %2620 = vmatprep.subr.mxu0 0.0
      %2621 = vmatpush1.msra.mxu0 0.0
      %2622 = vmatprep.subr.mxu0 0.0
      %2623 = vmatpush1.msra.mxu0 0.0
      %2624 = vmatprep.subr.mxu0 0.0
      %2625 = vmatpush1.msra.mxu0 0.0
      %2626 = vmatprep.subr.mxu0 0.0
      %2627 = vmatpush1.msra.mxu0 0.0
      %2628 = vmatprep.subr.mxu0 0.0
      %2629 = vmatpush1.msra.mxu0 0.0
      %2630 = vmatprep.subr.mxu0 0.0
      %2631 = vmatpush1.msra.mxu0 0.0
      %2632 = vmatprep.subr.mxu0 0.0
      %2633 = vmatpush1.msra.mxu0 0.0
      %2634 = vmatprep.subr.mxu0 0.0
      %2635 = vmatpush1.msra.mxu0 0.0
      %2636 = vmatprep.subr.mxu0 0.0
      %2637 = vmatpush1.msra.mxu0 0.0
      %2638 = vmatprep.subr.mxu0 0.0
      %2639 = vmatpush1.msra.mxu0 0.0
      %2640 = vmatprep.subr.mxu0 0.0
      %2641 = vmatpush1.msra.mxu0 0.0
      %2642 = vmatprep.subr.mxu0 0.0
      %2643 = vmatpush1.msra.mxu0 0.0
      %2644 = vmatprep.subr.mxu0 0.0
      %2645 = vmatpush1.msra.mxu0 0.0
      %2646 = vmatprep.subr.mxu0 0.0
      %2647 = vmatpush1.msra.mxu0 0.0
      %2648 = vmatprep.subr.mxu0 0.0
      %2649 = vmatpush1.msra.mxu0 0.0
      %2650 = vmatprep.mubr.f32.mxu0 0.0
      %2651 = vmatmul.mubr.f32.gmra.mrb[0].mxu0 %v2575
      %v2652 = vpop.f32.mrb[0].mxu0
      %v2653 = vadd.f32 0.0, %v2652
      %v2654 = vpop.f32.mrb[0].mxu0
      %2655 = vmatprep.mubr.f32.mxu0 0.0
      %2656 = vmatmul.mubr.f32.gmra.mrb[0].mxu0 %v2578
      %v2657 = vpop.f32.mrb[0].mxu0
      %v2658 = vadd.f32 0.0, %v2657
      %v2659 = vpop.f32.mrb[0].mxu0
      %2660 = vmatprep.mubr.f32.mxu0 0.0
      %2661 = vmatmul.mubr.f32.gmra.mrb[0].mxu0 %v2581
      %v2662 = vpop.f32.mrb[0].mxu0
      %v2663 = vadd.f32 0.0, %v2662
      %v2664 = vpop.f32.mrb[0].mxu0
      %2665 = vmatprep.mubr.f32.mxu0 0.0
      %2666 = vmatmul.mubr.f32.gmra.mrb[0].mxu0 %v2584
      %v2667 = vpop.f32.mrb[0].mxu0
      %v2668 = vadd.f32 0.0, %v2667
      %v2669 = vpop.f32.mrb[0].mxu0
      %2670 = vdwg.mxu0
      %v2671 = vadd.f32 %v2552, %v2653
      %v2672 = vadd.f32 %v2557, %v2658
      %v2673 = vadd.f32 %v2562, %v2663
      %v2674 = vadd.f32 %v2567, %v2668
      %v2675 = vld [vmem:[%s21] sm:$0xff]
      %v2676 = vld [vmem:[%s21 + $0x8] sm:$0xff]
      %v2677 = vld [vmem:[%s21 + $0x10] sm:$0xff]
      %v2678 = vld [vmem:[%s21 + $0x18] sm:$0xff]
      %v2679 = vadd.f32 %v2671, %v2675
      %v2680 = vadd.f32 %v2672, %v2676
      %v2681 = vadd.f32 %v2673, %v2677
      %v2682 = vadd.f32 %v2674, %v2678
      %v2683 = vmax.f32 %v2679, 0.0
      %v2684 = vmax.f32 %v2680, 0.0
      %v2685 = vmax.f32 %v2681, 0.0
      %v2686 = vmax.f32 %v2682, 0.0
      %v2687 = vld [vmem:[%s22] sm:$0x7]
      %v2688 = vld [vmem:[%s23] sm:$0x7]
      %v2690 = vsel %vm1071, %v2687, 0
      %2692 = vmatprep.subr.mxu0 0.0
      %2693 = vmatpush1.msra.mxu0 %v2683
      %2694 = vmatprep.subr.mxu0 0.0
      %2695 = vmatpush1.msra.mxu0 %v2684
      %2696 = vmatprep.subr.mxu0 0.0
      %2697 = vmatpush1.msra.mxu0 %v2685
      %2698 = vmatprep.subr.mxu0 0.0
      %2699 = vmatpush1.msra.mxu0 %v2686
      %2700 = vmatprep.subr.mxu0 0.0
      %2701 = vmatpush1.msra.mxu0 0.0
      %2702 = vmatprep.subr.mxu0 0.0
      %2703 = vmatpush1.msra.mxu0 0.0
      %2704 = vmatprep.subr.mxu0 0.0
      %2705 = vmatpush1.msra.mxu0 0.0
      %2706 = vmatprep.subr.mxu0 0.0
      %2707 = vmatpush1.msra.mxu0 0.0
      %2708 = vmatprep.subr.mxu0 0.0
      %2709 = vmatpush1.msra.mxu0 0.0
      %2710 = vmatprep.subr.mxu0 0.0
      %2711 = vmatpush1.msra.mxu0 0.0
      %2712 = vmatprep.subr.mxu0 0.0
      %2713 = vmatpush1.msra.mxu0 0.0
      %2714 = vmatprep.subr.mxu0 0.0
      %2715 = vmatpush1.msra.mxu0 0.0
      %2716 = vmatprep.subr.mxu0 0.0
      %2717 = vmatpush1.msra.mxu0 0.0
      %2718 = vmatprep.subr.mxu0 0.0
      %2719 = vmatpush1.msra.mxu0 0.0
      %2720 = vmatprep.subr.mxu0 0.0
      %2721 = vmatpush1.msra.mxu0 0.0
      %2722 = vmatprep.subr.mxu0 0.0
      %2723 = vmatpush1.msra.mxu0 0.0
      %2724 = vmatprep.subr.mxu0 0.0
      %2725 = vmatpush1.msra.mxu0 0.0
      %2726 = vmatprep.subr.mxu0 0.0
      %2727 = vmatpush1.msra.mxu0 0.0
      %2728 = vmatprep.subr.mxu0 0.0
      %2729 = vmatpush1.msra.mxu0 0.0
      %2730 = vmatprep.subr.mxu0 0.0
      %2731 = vmatpush1.msra.mxu0 0.0
      %2732 = vmatprep.subr.mxu0 0.0
      %2733 = vmatpush1.msra.mxu0 0.0
      %2734 = vmatprep.subr.mxu0 0.0
      %2735 = vmatpush1.msra.mxu0 0.0
      %2736 = vmatprep.subr.mxu0 0.0
      %2737 = vmatpush1.msra.mxu0 0.0
      %2738 = vmatprep.subr.mxu0 0.0
      %2739 = vmatpush1.msra.mxu0 0.0
      %2740 = vmatprep.subr.mxu0 0.0
      %2741 = vmatpush1.msra.mxu0 0.0
      %2742 = vmatprep.subr.mxu0 0.0
      %2743 = vmatpush1.msra.mxu0 0.0
      %2744 = vmatprep.subr.mxu0 0.0
      %2745 = vmatpush1.msra.mxu0 0.0
      %2746 = vmatprep.subr.mxu0 0.0
      %2747 = vmatpush1.msra.mxu0 0.0
      %2748 = vmatprep.subr.mxu0 0.0
      %2749 = vmatpush1.msra.mxu0 0.0
      %2750 = vmatprep.subr.mxu0 0.0
      %2751 = vmatpush1.msra.mxu0 0.0
      %2752 = vmatprep.subr.mxu0 0.0
      %2753 = vmatpush1.msra.mxu0 0.0
      %2754 = vmatprep.subr.mxu0 0.0
      %2755 = vmatpush1.msra.mxu0 0.0
      %2756 = vmatprep.mubr.f32.mxu0 0.0
      %2757 = vmatmul.mubr.f32.gmra.mrb[0].mxu0 %v2690
      %v2758 = vpop.f32.mrb[0].mxu0
      %v2759 = vadd.f32 %v2688, %v2758
      %v2760 = vpop.f32.mrb[0].mxu0
      %2761 = vdwg.mxu0
      %vm2762 = vcmask 2048
      %v2763 = vsel %vm2762, %v2759, -inf
      %v2764 = vrot.slane %v2763, 4
      %v2765 = vmax.f32 %v2763, %v2764
      %v2766 = vrot.slane %v2765, 2
      %v2767 = vmax.f32 %v2765, %v2766
      %v2768 = vrot.slane %v2767, 1
      %v2769 = vmax.f32 %v2767, %v2768
      %v2770 = vsub.f32 %v2759, %v2769
      %v2771 = vmul.f32 %v2770, 1.442695
      %v2772 = vpow.pop %v2771
      %v2773 = vsel %vm2762, %v2772, 0.0
      %v2774 = vrot.slane %v2773, 4
      %v2775 = vadd.f32 %v2773, %v2774
      %v2776 = vrot.slane %v2775, 2
      %v2777 = vadd.f32 %v2775, %v2776
      %v2778 = vrot.slane %v2777, 1
      %v2779 = vadd.f32 %v2777, %v2778
      %v2780 = vrcp.pop %v2779
      %v2781 = vmul.f32 %v2772, %v2780
      %s2783 = vtos %v2781
      %v2784 = vstv %s2783
      %v2786 = vmul.f32 %v2784, %v775
      %v2787 = vmul.f32 %v2784, %v776
      %v2788 = vrot.slane %v2781, 1
      %s2789 = vtos %v2788
      %v2790 = vstv %s2789
      %v2792 = vmul.f32 %v2790, %v2351
      %v2793 = vmul.f32 %v2790, %v2353
      %v2794 = vadd.f32 %v2786, %v2792
      %v2795 = vadd.f32 %v2787, %v2793
      %v2796 = vrot.slane %v2781, 2
      %s2797 = vtos %v2796
      %v2798 = vstv %s2797
      %v2800 = vmul.f32 %v2798, %v1146
      %v2801 = vmul.f32 %v2798, %v1147
      %v2802 = vadd.f32 %v2794, %v2800
      %v2803 = vadd.f32 %v2795, %v2801
      %2804 = vst [vmem:[%s774] sm:$0xff] %v2802
      %2805 = vst [vmem:[%s774 + $0x8] sm:$0xff] %v2803
      %p2806 = scmp.lt.s32.totalorder %s35, 1
      %s2807 = scalar_select %p2806, %s35, 1
      %s2808 = smul.addr %s2807, 2
      %s2809 = smul.addr %s2808, 8
      %s2810 = scalar_lea.vmem %s24, %s2809
      // Predicated region
      $region117: #{clip_stage_adapter_forward.1} parent=115 // pred_check
        %p2811 = pneg %p572
      $region118: #{clip_stage_adapter_forward.1} parent=115 // pred_check_branch
        %2813 = sbr.rel (%p2811) target = $region120
      $region119: #{clip_stage_adapter_forward.1} parent=115 // pred_region
        _
      $region120: #{clip_stage_adapter_forward.1} parent=115 // pred_fallthru
        _
    $region116: #{clip_stage_adapter_forward.1} parent=5 // pred_fallthru
      _
    %p2814 = scmp.le.s32.totalorder 2, %s30
    // Predicated region
    $region121: #{clip_stage_adapter_forward.1} parent=5 // pred_check
      %p2815 = pneg %p2814
    $region122: #{clip_stage_adapter_forward.1} parent=5 // pred_check_branch
      %2817 = sbr.rel (%p2815) target = $region124
    $region123: #{clip_stage_adapter_forward.1} parent=5 // pred_region
      %s2818 = ssub.s32 %s30, 2
      // Predicated region
      $region125: #{clip_stage_adapter_forward.1} parent=123 // pred_check
        %p2819 = pneg %p578
      $region126: #{clip_stage_adapter_forward.1} parent=123 // pred_check_branch
        %2821 = sbr.rel (%p2819) target = $region128
      $region127: #{clip_stage_adapter_forward.1} parent=123 // pred_region
        %p2822 = scmp.lt.s32.totalorder %s36, 1
        %s2823 = scalar_select %p2822, %s36, 1
        %s2824 = smul.addr %s2823, 2
        %s2825 = smul.addr %s2824, 8
        %s2826 = scalar_lea.vmem %s24, %s2825
      $region128: #{clip_stage_adapter_forward.1} parent=123 // pred_fallthru
        _
    $region124: #{clip_stage_adapter_forward.1} parent=5 // pred_fallthru
      _
  $region6: #{clip_stage_adapter_forward.1} parent=0 // loop_footer
    %s34 = sadd.s32 1, %s30
  $region7: #{clip_stage_adapter_forward.1} parent=0 // loop_footer_branch
    %29 = sbr.rel target = $region3
  $region8: #{clip_stage_adapter_forward.1} parent=0 // loop_exit
    _

</llo_original>
